<compile_context>
chip_gen: v7x
topology: tpu7x:2x2x1
jax: 0.10.0
libtpu: 0.0.40
codegen_flags: <defaults>
</compile_context>

<pallas_src>
import math
import jax
import jax.numpy as jnp
from jax.experimental import pallas as pl
from jax.experimental.pallas import tpu as pltpu

# ------------------------- model configuration -------------------------------
IN_CHANS    = 4
IMG         = 16
PATCH       = 4
NUM_PATCHES = (IMG // PATCH) ** 2            # 16
PATCH_DIM   = IN_CHANS * PATCH * PATCH       # 64
EMBED_DIM   = 32
NUM_HEADS   = 2
HEAD_DIM    = EMBED_DIM // NUM_HEADS         # 16
DEPTH       = 2
MLP_HIDDEN  = 4 * EMBED_DIM                  # 128
NUM_CLASSES = 10
NUM_PERSIST = 4                              # num_persist_mem_tokens
SEQ         = 1 + NUM_PERSIST + NUM_PATCHES  # cls + persistent mem + patches = 21
MEM_HIDDEN  = 2 * EMBED_DIM                  # synthetic memory-module hidden dim
HEAD_PAD    = 128                            # lane-dense padded head output
LN_EPS      = 1e-5

# ------------------------- in-kernel math helpers ----------------------------
def _layernorm(x, g, b):
    mu = jnp.mean(x, axis=-1, keepdims=True)
    var = jnp.mean((x - mu) ** 2, axis=-1, keepdims=True)
    return (x - mu) * jax.lax.rsqrt(var + LN_EPS) * g + b


def _softmax(x):
    m = jnp.max(x, axis=-1, keepdims=True)
    e = jnp.exp(x - m)
    # EUP reciprocal instead of a VPU divide.
    return e * pl.reciprocal(jnp.sum(e, axis=-1, keepdims=True), approx=True)


def _gelu(x):
    # TODO(synk): tanh-approx GELU; PyTorch nn.GELU defaults to the exact erf form.
    return 0.5 * x * (1.0 + jnp.tanh(0.7978845608028654 * (x + 0.044715 * x * x * x)))


def _sigmoid(x):
    return pl.reciprocal(1.0 + jnp.exp(-x), approx=True)


# ------------------------------- fused kernel ---------------------------------
def fused_kernel(xp_ref, pw, pb, prefix, pos_patch,
                 l1g, l1b, wq, wk, wv, bq, bk, bv, wp, bp,
                 l2g, l2b, f1w, f1b, f2w, f2b,
                 mw1, mb1, mw2, mb2,
                 g1g, g1b, g2g, g2b, gw, gb, ng, nb, hw, hb,
                 o_ref):
    scale = 1.0 / math.sqrt(HEAD_DIM)

    # ----- patch_embed: Conv2d(stride=kernel) lowered to a GEMM -----
    patches = jnp.dot(xp_ref[0], pw[...],
                      preferred_element_type=jnp.float32) + pb[...]       # (N, D)

    # ----- memory path: mean over raw patch embeddings + memory MLP -----
    m = jnp.mean(patches, axis=0, keepdims=True)                          # (1, D)
    mh = _gelu(jnp.dot(m, mw1[...], preferred_element_type=jnp.float32) + mb1[...])
    memory_out = (jnp.dot(mh, mw2[...], preferred_element_type=jnp.float32)
                  + mb2[...])                                             # (1, D)

    # ----- token assembly: [cls(+pos), persistent mem (pos=0), patches(+pos)] -----
    seq = jnp.concatenate([prefix[...], patches + pos_patch[...]], axis=0)  # (S, D)

    # ----- transformer blocks (static unroll over DEPTH) -----
    for d in range(DEPTH):
        xn = _layernorm(seq, l1g[d], l1b[d])
        heads = []
        for h in range(NUM_HEADS):
            # Per-head q/k/v via pre-split weights: no lane-offset slicing.
            qh = jnp.dot(xn, wq[d, h], preferred_element_type=jnp.float32) + bq[d, h]
            kh = jnp.dot(xn, wk[d, h], preferred_element_type=jnp.float32) + bk[d, h]
            vh = jnp.dot(xn, wv[d, h], preferred_element_type=jnp.float32) + bv[d, h]
            logits = jax.lax.dot_general(
                qh, kh, (((1,), (1,)), ((), ())),
                preferred_element_type=jnp.float32) * scale               # (S, S)
            heads.append(jnp.dot(_softmax(logits), vh,
                                 preferred_element_type=jnp.float32))     # (S, Dh)
        attn = jnp.concatenate(heads, axis=-1)                            # (S, D)
        seq = seq + jnp.dot(attn, wp[d],
                            preferred_element_type=jnp.float32) + bp[d]   # residual 1

        xn2 = _layernorm(seq, l2g[d], l2b[d])
        hid = _gelu(jnp.dot(xn2, f1w[d],
                            preferred_element_type=jnp.float32) + f1b[d])
        seq = seq + jnp.dot(hid, f2w[d],
                            preferred_element_type=jnp.float32) + f2b[d]  # residual 2

    # ----- MAG gate + final norm + classification head -----
    x_out = seq[0:1, :]                                                   # cls token
    xn = _layernorm(x_out, g1g[...], g1b[...])                            # gate_norm1
    mn = _layernorm(memory_out, g2g[...], g2b[...])                       # gate_norm2
    gate = _sigmoid(jnp.dot(xn, gw[...],
                            preferred_element_type=jnp.float32) + gb[...])
    comb = gate * xn + (1.0 - gate) * mn
    out = _layernorm(comb, ng[...], nb[...])                              # base_model.norm
    o_ref[0] = (jnp.dot(out, hw[...], preferred_element_type=jnp.float32)
                + hb[...])                                                # (1, HEAD_PAD)


# ------------------------------- wrapper ---------------------------------------
def _fs(shape):
    """Grid-invariant full-array block spec (weights stay VMEM-resident)."""
    n = len(shape)
    return pl.BlockSpec(shape, lambda b, n=n: (0,) * n)


def _pack_args(p):
    """Pack params into kernel-friendly layouts (per-head split, depth-stacked)."""
    D = EMBED_DIM
    blocks = p['blocks']

    def stack(k):
        return jnp.stack([blk[k] for blk in blocks], axis=0)

    qkv_w = stack('qkv_w')                                      # (DEPTH, D, 3D)
    qkv_b = stack('qkv_b').reshape(DEPTH, 3 * D)                # (DEPTH, 3D)
    w_r = qkv_w.reshape(DEPTH, D, 3, NUM_HEADS, HEAD_DIM)
    b_r = qkv_b.reshape(DEPTH, 3, NUM_HEADS, HEAD_DIM)
    wq = jnp.transpose(w_r[:, :, 0], (0, 2, 1, 3))              # (DEPTH, H, D, Dh)
    wk = jnp.transpose(w_r[:, :, 1], (0, 2, 1, 3))
    wv = jnp.transpose(w_r[:, :, 2], (0, 2, 1, 3))
    bq = b_r[:, 0][:, :, None, :]                               # (DEPTH, H, 1, Dh)
    bk = b_r[:, 1][:, :, None, :]
    bv = b_r[:, 2][:, :, None, :]

    # Token prefix: cls token (with its pos embed folded in) + persistent memory
    # tokens (which get zero positional embedding in the reference).
    prefix = jnp.concatenate(
        [p['cls_token'][0] + p['pos_embed'][0, :1], p['persist_mem']], axis=0)  # (5, D)
    pos_patch = p['pos_embed'][0, 1:]                           # (N, D)

    # Lane-dense classifier head (pad 10 -> 128 output lanes).
    head_w = jnp.zeros((D, HEAD_PAD), jnp.float32).at[:, :NUM_CLASSES].set(p['head_w'])
    head_b = jnp.zeros((1, HEAD_PAD), jnp.float32).at[:, :NUM_CLASSES].set(p['head_b'])

    return [
        p['patch_w'], p['patch_b'], prefix, pos_patch,
        stack('ln1_g'), stack('ln1_b'), wq, wk, wv, bq, bk, bv,
        stack('proj_w'), stack('proj_b'),
        stack('ln2_g'), stack('ln2_b'),
        stack('fc1_w'), stack('fc1_b'), stack('fc2_w'), stack('fc2_b'),
        p['mem_w1'], p['mem_b1'], p['mem_w2'], p['mem_b2'],
        p['gn1_g'], p['gn1_b'], p['gn2_g'], p['gn2_b'],
        p['gate_w'], p['gate_b'], p['norm_g'], p['norm_b'],
        head_w, head_b,
    ]


def vit_mag_forward(x_nchw, params):
    B = x_nchw.shape[0]

    # NCHW -> per-patch matrix [B, N, C*P*P] (channel-major per patch, matching
    # the flattened Conv2d weight layout).  Pure layout glue; GEMM is in-kernel.
    xp = x_nchw.reshape(B, IN_CHANS, IMG // PATCH, PATCH, IMG // PATCH, PATCH)
    xp = xp.transpose(0, 2, 4, 1, 3, 5).reshape(B, NUM_PATCHES, PATCH_DIM)

    # TODO(synk): bicubic pos-embed interpolation omitted — num_patches equals the
    # stored pos_embed patch count at these shapes, so interpolate_pos_encoding is
    # an identity here.  pos_drop is identity in eval mode.
    args = _pack_args(params)

    out = pl.pallas_call(
        fused_kernel,
        out_shape=jax.ShapeDtypeStruct((B, 1, HEAD_PAD), jnp.float32),
        grid=(B,),
        in_specs=[pl.BlockSpec((1, NUM_PATCHES, PATCH_DIM), lambda b: (b, 0, 0))]
                 + [_fs(a.shape) for a in args],
        out_specs=pl.BlockSpec((1, 1, HEAD_PAD), lambda b: (b, 0, 0)),
        compiler_params=pltpu.CompilerParams(dimension_semantics=("parallel",)),
    )(xp, *args)

    return out[:, 0, :NUM_CLASSES]


# ------------------------------- parameters ------------------------------------
def init_params(key):
    keys = iter(jax.random.split(key, 64))

    def nrm(shape, scale=0.02):
        return jax.random.normal(next(keys), shape, jnp.float32) * scale

    p = {
        'patch_w':     nrm((PATCH_DIM, EMBED_DIM)),
        'patch_b':     jnp.zeros((1, EMBED_DIM), jnp.float32),
        'cls_token':   nrm((1, 1, EMBED_DIM)),
        'pos_embed':   nrm((1, 1 + NUM_PATCHES, EMBED_DIM)),
        'persist_mem': nrm((NUM_PERSIST, EMBED_DIM)),
    }
    blocks = []
    for _ in range(DEPTH):
        blocks.append({
            'ln1_g': jnp.ones((1, EMBED_DIM), jnp.float32),
            'ln1_b': jnp.zeros((1, EMBED_DIM), jnp.float32),
            'qkv_w': nrm((EMBED_DIM, 3 * EMBED_DIM)),
            'qkv_b': jnp.zeros((1, 3 * EMBED_DIM), jnp.float32),
            'proj_w': nrm((EMBED_DIM, EMBED_DIM)),
            'proj_b': jnp.zeros((1, EMBED_DIM), jnp.float32),
            'ln2_g': jnp.ones((1, EMBED_DIM), jnp.float32),
            'ln2_b': jnp.zeros((1, EMBED_DIM), jnp.float32),
            'fc1_w': nrm((EMBED_DIM, MLP_HIDDEN)),
            'fc1_b': jnp.zeros((1, MLP_HIDDEN), jnp.float32),
            'fc2_w': nrm((MLP_HIDDEN, EMBED_DIM)),
            'fc2_b': jnp.zeros((1, EMBED_DIM), jnp.float32),
        })
    p['blocks'] = blocks

    # Synthetic memory module: Linear -> GELU -> Linear on the mean patch token.
    p['mem_w1'] = nrm((EMBED_DIM, MEM_HIDDEN))
    p['mem_b1'] = jnp.zeros((1, MEM_HIDDEN), jnp.float32)
    p['mem_w2'] = nrm((MEM_HIDDEN, EMBED_DIM))
    p['mem_b2'] = jnp.zeros((1, EMBED_DIM), jnp.float32)

    # MAG gate + final norm + classification head.
    p['gn1_g'] = jnp.ones((1, EMBED_DIM), jnp.float32)
    p['gn1_b'] = jnp.zeros((1, EMBED_DIM), jnp.float32)
    p['gn2_g'] = jnp.ones((1, EMBED_DIM), jnp.float32)
    p['gn2_b'] = jnp.zeros((1, EMBED_DIM), jnp.float32)
    p['gate_w'] = nrm((EMBED_DIM, EMBED_DIM))
    p['gate_b'] = jnp.zeros((1, EMBED_DIM), jnp.float32)
    p['norm_g'] = jnp.ones((1, EMBED_DIM), jnp.float32)
    p['norm_b'] = jnp.zeros((1, EMBED_DIM), jnp.float32)
    p['head_w'] = nrm((EMBED_DIM, NUM_CLASSES))
    p['head_b'] = jnp.zeros((1, NUM_CLASSES), jnp.float32)
    return p


# --------------------------------- main -----------------------------------------
if __name__ == "__main__":
    key = jax.random.PRNGKey(0)
    k_x, k_p = jax.random.split(key)
    x = jax.random.normal(k_x, (2, IN_CHANS, IMG, IMG), jnp.float32)  # NCHW input
    params = init_params(k_p)

    fwd = jax.jit(vit_mag_forward)
    logits = fwd(x, params)
    jax.block_until_ready(logits)
    assert logits.shape == (2, NUM_CLASSES)
    assert bool(jnp.all(jnp.isfinite(logits)))
    print("KERNEL_OK")
</pallas_src>

<mosaic_0001>
module attributes {stable_mosaic.version = 11 : i64} {
  func.func @fused_kernel(%arg0: i32, %arg1: memref<1x16x64xf32, #tpu.memory_space<vmem>>, %arg2: memref<64x32xf32, #tpu.memory_space<vmem>>, %arg3: memref<1x32xf32, #tpu.memory_space<vmem>>, %arg4: memref<5x32xf32, #tpu.memory_space<vmem>>, %arg5: memref<16x32xf32, #tpu.memory_space<vmem>>, %arg6: memref<2x1x32xf32, #tpu.memory_space<vmem>>, %arg7: memref<2x1x32xf32, #tpu.memory_space<vmem>>, %arg8: memref<2x2x32x16xf32, #tpu.memory_space<vmem>>, %arg9: memref<2x2x32x16xf32, #tpu.memory_space<vmem>>, %arg10: memref<2x2x32x16xf32, #tpu.memory_space<vmem>>, %arg11: memref<2x2x1x16xf32, #tpu.memory_space<vmem>>, %arg12: memref<2x2x1x16xf32, #tpu.memory_space<vmem>>, %arg13: memref<2x2x1x16xf32, #tpu.memory_space<vmem>>, %arg14: memref<2x32x32xf32, #tpu.memory_space<vmem>>, %arg15: memref<2x1x32xf32, #tpu.memory_space<vmem>>, %arg16: memref<2x1x32xf32, #tpu.memory_space<vmem>>, %arg17: memref<2x1x32xf32, #tpu.memory_space<vmem>>, %arg18: memref<2x32x128xf32, #tpu.memory_space<vmem>>, %arg19: memref<2x1x128xf32, #tpu.memory_space<vmem>>, %arg20: memref<2x128x32xf32, #tpu.memory_space<vmem>>, %arg21: memref<2x1x32xf32, #tpu.memory_space<vmem>>, %arg22: memref<32x64xf32, #tpu.memory_space<vmem>>, %arg23: memref<1x64xf32, #tpu.memory_space<vmem>>, %arg24: memref<64x32xf32, #tpu.memory_space<vmem>>, %arg25: memref<1x32xf32, #tpu.memory_space<vmem>>, %arg26: memref<1x32xf32, #tpu.memory_space<vmem>>, %arg27: memref<1x32xf32, #tpu.memory_space<vmem>>, %arg28: memref<1x32xf32, #tpu.memory_space<vmem>>, %arg29: memref<1x32xf32, #tpu.memory_space<vmem>>, %arg30: memref<32x32xf32, #tpu.memory_space<vmem>>, %arg31: memref<1x32xf32, #tpu.memory_space<vmem>>, %arg32: memref<1x32xf32, #tpu.memory_space<vmem>>, %arg33: memref<1x32xf32, #tpu.memory_space<vmem>>, %arg34: memref<32x128xf32, #tpu.memory_space<vmem>>, %arg35: memref<1x128xf32, #tpu.memory_space<vmem>>, %arg36: memref<1x1x128xf32, #tpu.memory_space<vmem>>) attributes {dimension_semantics = [#tpu.dimension_semantics<parallel>], iteration_bounds = array<i64: 2>, scalar_prefetch = 0 : i64, scratch_operands = 0 : i64, tpu.core_type = #tpu.core_type<tc>, window_params = [{transform_indices = @transform_0, window_bounds = array<i64: 1, 16, 64>}, {pipeline_mode = #tpu.pipeline_mode<synchronous>, transform_indices = @transform_1, window_bounds = array<i64: 64, 32>}, {pipeline_mode = #tpu.pipeline_mode<synchronous>, transform_indices = @transform_2, window_bounds = array<i64: 1, 32>}, {pipeline_mode = #tpu.pipeline_mode<synchronous>, transform_indices = @transform_3, window_bounds = array<i64: 5, 32>}, {pipeline_mode = #tpu.pipeline_mode<synchronous>, transform_indices = @transform_4, window_bounds = array<i64: 16, 32>}, {pipeline_mode = #tpu.pipeline_mode<synchronous>, transform_indices = @transform_5, window_bounds = array<i64: 2, 1, 32>}, {pipeline_mode = #tpu.pipeline_mode<synchronous>, transform_indices = @transform_6, window_bounds = array<i64: 2, 1, 32>}, {pipeline_mode = #tpu.pipeline_mode<synchronous>, transform_indices = @transform_7, window_bounds = array<i64: 2, 2, 32, 16>}, {pipeline_mode = #tpu.pipeline_mode<synchronous>, transform_indices = @transform_8, window_bounds = array<i64: 2, 2, 32, 16>}, {pipeline_mode = #tpu.pipeline_mode<synchronous>, transform_indices = @transform_9, window_bounds = array<i64: 2, 2, 32, 16>}, {pipeline_mode = #tpu.pipeline_mode<synchronous>, transform_indices = @transform_10, window_bounds = array<i64: 2, 2, 1, 16>}, {pipeline_mode = #tpu.pipeline_mode<synchronous>, transform_indices = @transform_11, window_bounds = array<i64: 2, 2, 1, 16>}, {pipeline_mode = #tpu.pipeline_mode<synchronous>, transform_indices = @transform_12, window_bounds = array<i64: 2, 2, 1, 16>}, {pipeline_mode = #tpu.pipeline_mode<synchronous>, transform_indices = @transform_13, window_bounds = array<i64: 2, 32, 32>}, {pipeline_mode = #tpu.pipeline_mode<synchronous>, transform_indices = @transform_14, window_bounds = array<i64: 2, 1, 32>}, {pipeline_mode = #tpu.pipeline_mode<synchronous>, transform_indices = @transform_15, window_bounds = array<i64: 2, 1, 32>}, {pipeline_mode = #tpu.pipeline_mode<synchronous>, transform_indices = @transform_16, window_bounds = array<i64: 2, 1, 32>}, {pipeline_mode = #tpu.pipeline_mode<synchronous>, transform_indices = @transform_17, window_bounds = array<i64: 2, 32, 128>}, {pipeline_mode = #tpu.pipeline_mode<synchronous>, transform_indices = @transform_18, window_bounds = array<i64: 2, 1, 128>}, {pipeline_mode = #tpu.pipeline_mode<synchronous>, transform_indices = @transform_19, window_bounds = array<i64: 2, 128, 32>}, {pipeline_mode = #tpu.pipeline_mode<synchronous>, transform_indices = @transform_20, window_bounds = array<i64: 2, 1, 32>}, {pipeline_mode = #tpu.pipeline_mode<synchronous>, transform_indices = @transform_21, window_bounds = array<i64: 32, 64>}, {pipeline_mode = #tpu.pipeline_mode<synchronous>, transform_indices = @transform_22, window_bounds = array<i64: 1, 64>}, {pipeline_mode = #tpu.pipeline_mode<synchronous>, transform_indices = @transform_23, window_bounds = array<i64: 64, 32>}, {pipeline_mode = #tpu.pipeline_mode<synchronous>, transform_indices = @transform_24, window_bounds = array<i64: 1, 32>}, {pipeline_mode = #tpu.pipeline_mode<synchronous>, transform_indices = @transform_25, window_bounds = array<i64: 1, 32>}, {pipeline_mode = #tpu.pipeline_mode<synchronous>, transform_indices = @transform_26, window_bounds = array<i64: 1, 32>}, {pipeline_mode = #tpu.pipeline_mode<synchronous>, transform_indices = @transform_27, window_bounds = array<i64: 1, 32>}, {pipeline_mode = #tpu.pipeline_mode<synchronous>, transform_indices = @transform_28, window_bounds = array<i64: 1, 32>}, {pipeline_mode = #tpu.pipeline_mode<synchronous>, transform_indices = @transform_29, window_bounds = array<i64: 32, 32>}, {pipeline_mode = #tpu.pipeline_mode<synchronous>, transform_indices = @transform_30, window_bounds = array<i64: 1, 32>}, {pipeline_mode = #tpu.pipeline_mode<synchronous>, transform_indices = @transform_31, window_bounds = array<i64: 1, 32>}, {pipeline_mode = #tpu.pipeline_mode<synchronous>, transform_indices = @transform_32, window_bounds = array<i64: 1, 32>}, {pipeline_mode = #tpu.pipeline_mode<synchronous>, transform_indices = @transform_33, window_bounds = array<i64: 32, 128>}, {pipeline_mode = #tpu.pipeline_mode<synchronous>, transform_indices = @transform_34, window_bounds = array<i64: 1, 128>}, {transform_indices = @transform_35, window_bounds = array<i64: 1, 1, 128>}]} {
    %c0 = arith.constant 0 : index
    %c0_0 = arith.constant 0 : index
    %c0_1 = arith.constant 0 : index
    %0 = vector.load %arg1[%c0, %c0_0, %c0_1] : memref<1x16x64xf32, #tpu.memory_space<vmem>>, vector<1x16x64xf32>
    %1 = vector.shape_cast %0 : vector<1x16x64xf32> to vector<16x64xf32>
    %c0_2 = arith.constant 0 : index
    %c0_3 = arith.constant 0 : index
    %2 = vector.load %arg2[%c0_2, %c0_3] : memref<64x32xf32, #tpu.memory_space<vmem>>, vector<64x32xf32>
    %cst = arith.constant dense<0.000000e+00> : vector<16x32xf32>
    %3 = tpu.matmul %1, %2, %cst {dimension_numbers = #tpu.dot_dimension_numbers<[1], [0], [0], [1], [0, 0, 1, 1], [], []>} : vector<16x64xf32>, vector<64x32xf32>, vector<16x32xf32> -> vector<16x32xf32>
    %c0_4 = arith.constant 0 : index
    %c0_5 = arith.constant 0 : index
    %4 = vector.load %arg3[%c0_4, %c0_5] : memref<1x32xf32, #tpu.memory_space<vmem>>, vector<1x32xf32>
    %5 = vector.broadcast %4 : vector<1x32xf32> to vector<16x32xf32>
    %6 = arith.addf %3, %5 : vector<16x32xf32>
    %cst_6 = arith.constant dense<0.000000e+00> : vector<32xf32>
    %7 = vector.multi_reduction <add>, %6, %cst_6 [0] : vector<16x32xf32> to vector<32xf32>
    %8 = vector.shape_cast %7 : vector<32xf32> to vector<1x32xf32>
    %cst_7 = arith.constant 1.600000e+01 : f32
    %9 = vector.broadcast %cst_7 : f32 to vector<1x32xf32>
    %10 = arith.divf %8, %9 : vector<1x32xf32>
    %c0_8 = arith.constant 0 : index
    %c0_9 = arith.constant 0 : index
    %11 = vector.load %arg22[%c0_8, %c0_9] : memref<32x64xf32, #tpu.memory_space<vmem>>, vector<32x64xf32>
    %cst_10 = arith.constant dense<0.000000e+00> : vector<1x64xf32>
    %12 = tpu.matmul %10, %11, %cst_10 {dimension_numbers = #tpu.dot_dimension_numbers<[1], [0], [0], [1], [0, 0, 1, 1], [], []>} : vector<1x32xf32>, vector<32x64xf32>, vector<1x64xf32> -> vector<1x64xf32>
    %c0_11 = arith.constant 0 : index
    %c0_12 = arith.constant 0 : index
    %13 = vector.load %arg23[%c0_11, %c0_12] : memref<1x64xf32, #tpu.memory_space<vmem>>, vector<1x64xf32>
    %14 = arith.addf %12, %13 : vector<1x64xf32>
    %cst_13 = arith.constant 5.000000e-01 : f32
    %15 = vector.broadcast %cst_13 : f32 to vector<1x64xf32>
    %16 = arith.mulf %15, %14 : vector<1x64xf32>
    %cst_14 = arith.constant 4.471500e-02 : f32
    %17 = vector.broadcast %cst_14 : f32 to vector<1x64xf32>
    %18 = arith.mulf %17, %14 : vector<1x64xf32>
    %19 = arith.mulf %18, %14 : vector<1x64xf32>
    %20 = arith.mulf %19, %14 : vector<1x64xf32>
    %21 = arith.addf %14, %20 : vector<1x64xf32>
    %cst_15 = arith.constant 0.797884583 : f32
    %22 = vector.broadcast %cst_15 : f32 to vector<1x64xf32>
    %23 = arith.mulf %22, %21 : vector<1x64xf32>
    %24 = math.tanh %23 : vector<1x64xf32>
    %cst_16 = arith.constant 1.000000e+00 : f32
    %25 = vector.broadcast %cst_16 : f32 to vector<1x64xf32>
    %26 = arith.addf %25, %24 : vector<1x64xf32>
    %27 = arith.mulf %16, %26 : vector<1x64xf32>
    %c0_17 = arith.constant 0 : index
    %c0_18 = arith.constant 0 : index
    %28 = vector.load %arg24[%c0_17, %c0_18] : memref<64x32xf32, #tpu.memory_space<vmem>>, vector<64x32xf32>
    %cst_19 = arith.constant dense<0.000000e+00> : vector<1x32xf32>
    %29 = tpu.matmul %27, %28, %cst_19 {dimension_numbers = #tpu.dot_dimension_numbers<[1], [0], [0], [1], [0, 0, 1, 1], [], []>} : vector<1x64xf32>, vector<64x32xf32>, vector<1x32xf32> -> vector<1x32xf32>
    %c0_20 = arith.constant 0 : index
    %c0_21 = arith.constant 0 : index
    %30 = vector.load %arg25[%c0_20, %c0_21] : memref<1x32xf32, #tpu.memory_space<vmem>>, vector<1x32xf32>
    %31 = arith.addf %29, %30 : vector<1x32xf32>
    %c0_22 = arith.constant 0 : index
    %c0_23 = arith.constant 0 : index
    %32 = vector.load %arg4[%c0_22, %c0_23] : memref<5x32xf32, #tpu.memory_space<vmem>>, vector<5x32xf32>
    %c0_24 = arith.constant 0 : index
    %c0_25 = arith.constant 0 : index
    %33 = vector.load %arg5[%c0_24, %c0_25] : memref<16x32xf32, #tpu.memory_space<vmem>>, vector<16x32xf32>
    %34 = arith.addf %6, %33 : vector<16x32xf32>
    %35 = tpu.concatenate %32, %34 in 0 : vector<5x32xf32>, vector<16x32xf32> -> vector<21x32xf32>
    %c0_26 = arith.constant 0 : index
    %c0_27 = arith.constant 0 : index
    %c0_28 = arith.constant 0 : index
    %36 = vector.load %arg6[%c0_26, %c0_27, %c0_28] : memref<2x1x32xf32, #tpu.memory_space<vmem>>, vector<1x1x32xf32>
    %37 = vector.shape_cast %36 : vector<1x1x32xf32> to vector<1x32xf32>
    %c0_29 = arith.constant 0 : index
    %c0_30 = arith.constant 0 : index
    %c0_31 = arith.constant 0 : index
    %38 = vector.load %arg7[%c0_29, %c0_30, %c0_31] : memref<2x1x32xf32, #tpu.memory_space<vmem>>, vector<1x1x32xf32>
    %39 = vector.shape_cast %38 : vector<1x1x32xf32> to vector<1x32xf32>
    %cst_32 = arith.constant dense<0.000000e+00> : vector<21xf32>
    %40 = vector.multi_reduction <add>, %35, %cst_32 [1] : vector<21x32xf32> to vector<21xf32>
    %41 = vector.shape_cast %40 : vector<21xf32> to vector<21x1xf32>
    %cst_33 = arith.constant 3.200000e+01 : f32
    %42 = vector.broadcast %cst_33 : f32 to vector<21x1xf32>
    %43 = arith.divf %41, %42 : vector<21x1xf32>
    %44 = vector.broadcast %43 : vector<21x1xf32> to vector<21x32xf32>
    %45 = arith.subf %35, %44 : vector<21x32xf32>
    %46 = arith.mulf %45, %45 : vector<21x32xf32>
    %cst_34 = arith.constant dense<0.000000e+00> : vector<21xf32>
    %47 = vector.multi_reduction <add>, %46, %cst_34 [1] : vector<21x32xf32> to vector<21xf32>
    %48 = vector.shape_cast %47 : vector<21xf32> to vector<21x1xf32>
    %cst_35 = arith.constant 3.200000e+01 : f32
    %49 = vector.broadcast %cst_35 : f32 to vector<21x1xf32>
    %50 = arith.divf %48, %49 : vector<21x1xf32>
    %51 = vector.broadcast %43 : vector<21x1xf32> to vector<21x32xf32>
    %52 = arith.subf %35, %51 : vector<21x32xf32>
    %cst_36 = arith.constant 9.99999974E-6 : f32
    %53 = vector.broadcast %cst_36 : f32 to vector<21x1xf32>
    %54 = arith.addf %50, %53 : vector<21x1xf32>
    %55 = math.rsqrt %54 : vector<21x1xf32>
    %56 = vector.broadcast %55 : vector<21x1xf32> to vector<21x32xf32>
    %57 = arith.mulf %52, %56 : vector<21x32xf32>
    %58 = vector.broadcast %37 : vector<1x32xf32> to vector<21x32xf32>
    %59 = arith.mulf %57, %58 : vector<21x32xf32>
    %60 = vector.broadcast %39 : vector<1x32xf32> to vector<21x32xf32>
    %61 = arith.addf %59, %60 : vector<21x32xf32>
    %c0_37 = arith.constant 0 : index
    %c0_38 = arith.constant 0 : index
    %c0_39 = arith.constant 0 : index
    %c0_40 = arith.constant 0 : index
    %62 = vector.load %arg8[%c0_37, %c0_38, %c0_39, %c0_40] : memref<2x2x32x16xf32, #tpu.memory_space<vmem>>, vector<1x1x32x16xf32>
    %63 = vector.shape_cast %62 : vector<1x1x32x16xf32> to vector<32x16xf32>
    %cst_41 = arith.constant dense<0.000000e+00> : vector<21x16xf32>
    %64 = tpu.matmul %61, %63, %cst_41 {dimension_numbers = #tpu.dot_dimension_numbers<[1], [0], [0], [1], [0, 0, 1, 1], [], []>} : vector<21x32xf32>, vector<32x16xf32>, vector<21x16xf32> -> vector<21x16xf32>
    %c0_42 = arith.constant 0 : index
    %c0_43 = arith.constant 0 : index
    %c0_44 = arith.constant 0 : index
    %c0_45 = arith.constant 0 : index
    %65 = vector.load %arg11[%c0_42, %c0_43, %c0_44, %c0_45] : memref<2x2x1x16xf32, #tpu.memory_space<vmem>>, vector<1x1x1x16xf32>
    %66 = vector.shape_cast %65 : vector<1x1x1x16xf32> to vector<1x16xf32>
    %67 = vector.broadcast %66 : vector<1x16xf32> to vector<21x16xf32>
    %68 = arith.addf %64, %67 : vector<21x16xf32>
    %c0_46 = arith.constant 0 : index
    %c0_47 = arith.constant 0 : index
    %c0_48 = arith.constant 0 : index
    %c0_49 = arith.constant 0 : index
    %69 = vector.load %arg9[%c0_46, %c0_47, %c0_48, %c0_49] : memref<2x2x32x16xf32, #tpu.memory_space<vmem>>, vector<1x1x32x16xf32>
    %70 = vector.shape_cast %69 : vector<1x1x32x16xf32> to vector<32x16xf32>
    %cst_50 = arith.constant dense<0.000000e+00> : vector<21x16xf32>
    %71 = tpu.matmul %61, %70, %cst_50 {dimension_numbers = #tpu.dot_dimension_numbers<[1], [0], [0], [1], [0, 0, 1, 1], [], []>} : vector<21x32xf32>, vector<32x16xf32>, vector<21x16xf32> -> vector<21x16xf32>
    %c0_51 = arith.constant 0 : index
    %c0_52 = arith.constant 0 : index
    %c0_53 = arith.constant 0 : index
    %c0_54 = arith.constant 0 : index
    %72 = vector.load %arg12[%c0_51, %c0_52, %c0_53, %c0_54] : memref<2x2x1x16xf32, #tpu.memory_space<vmem>>, vector<1x1x1x16xf32>
    %73 = vector.shape_cast %72 : vector<1x1x1x16xf32> to vector<1x16xf32>
    %74 = vector.broadcast %73 : vector<1x16xf32> to vector<21x16xf32>
    %75 = arith.addf %71, %74 : vector<21x16xf32>
    %c0_55 = arith.constant 0 : index
    %c0_56 = arith.constant 0 : index
    %c0_57 = arith.constant 0 : index
    %c0_58 = arith.constant 0 : index
    %76 = vector.load %arg10[%c0_55, %c0_56, %c0_57, %c0_58] : memref<2x2x32x16xf32, #tpu.memory_space<vmem>>, vector<1x1x32x16xf32>
    %77 = vector.shape_cast %76 : vector<1x1x32x16xf32> to vector<32x16xf32>
    %cst_59 = arith.constant dense<0.000000e+00> : vector<21x16xf32>
    %78 = tpu.matmul %61, %77, %cst_59 {dimension_numbers = #tpu.dot_dimension_numbers<[1], [0], [0], [1], [0, 0, 1, 1], [], []>} : vector<21x32xf32>, vector<32x16xf32>, vector<21x16xf32> -> vector<21x16xf32>
    %c0_60 = arith.constant 0 : index
    %c0_61 = arith.constant 0 : index
    %c0_62 = arith.constant 0 : index
    %c0_63 = arith.constant 0 : index
    %79 = vector.load %arg13[%c0_60, %c0_61, %c0_62, %c0_63] : memref<2x2x1x16xf32, #tpu.memory_space<vmem>>, vector<1x1x1x16xf32>
    %80 = vector.shape_cast %79 : vector<1x1x1x16xf32> to vector<1x16xf32>
    %81 = vector.broadcast %80 : vector<1x16xf32> to vector<21x16xf32>
    %82 = arith.addf %78, %81 : vector<21x16xf32>
    %cst_64 = arith.constant dense<0.000000e+00> : vector<21x21xf32>
    %83 = tpu.matmul %68, %75, %cst_64 {dimension_numbers = #tpu.dot_dimension_numbers<[1], [1], [0], [0], [0, 0, 1, 0], [], []>} : vector<21x16xf32>, vector<21x16xf32>, vector<21x21xf32> -> vector<21x21xf32>
    %cst_65 = arith.constant 2.500000e-01 : f32
    %84 = vector.broadcast %cst_65 : f32 to vector<21x21xf32>
    %85 = arith.mulf %83, %84 : vector<21x21xf32>
    %cst_66 = arith.constant dense<0xFF800000> : vector<21xf32>
    %86 = vector.multi_reduction <maximumf>, %85, %cst_66 [1] : vector<21x21xf32> to vector<21xf32>
    %87 = vector.shape_cast %86 : vector<21xf32> to vector<21x1xf32>
    %88 = vector.broadcast %87 : vector<21x1xf32> to vector<21x21xf32>
    %89 = arith.subf %85, %88 : vector<21x21xf32>
    %90 = math.exp %89 : vector<21x21xf32>
    %cst_67 = arith.constant dense<0.000000e+00> : vector<21xf32>
    %91 = vector.multi_reduction <add>, %90, %cst_67 [1] : vector<21x21xf32> to vector<21xf32>
    %92 = vector.shape_cast %91 : vector<21xf32> to vector<21x1xf32>
    %93 = tpu.reciprocal %92 {approx = true} : vector<21x1xf32> -> vector<21x1xf32>
    %94 = vector.broadcast %93 : vector<21x1xf32> to vector<21x21xf32>
    %95 = arith.mulf %90, %94 : vector<21x21xf32>
    %cst_68 = arith.constant dense<0.000000e+00> : vector<21x16xf32>
    %96 = tpu.matmul %95, %82, %cst_68 {dimension_numbers = #tpu.dot_dimension_numbers<[1], [0], [0], [1], [0, 0, 1, 1], [], []>} : vector<21x21xf32>, vector<21x16xf32>, vector<21x16xf32> -> vector<21x16xf32>
    %c0_69 = arith.constant 0 : index
    %c1 = arith.constant 1 : index
    %c0_70 = arith.constant 0 : index
    %c0_71 = arith.constant 0 : index
    %97 = vector.load %arg8[%c0_69, %c1, %c0_70, %c0_71] : memref<2x2x32x16xf32, #tpu.memory_space<vmem>>, vector<1x1x32x16xf32>
    %98 = vector.shape_cast %97 : vector<1x1x32x16xf32> to vector<32x16xf32>
    %cst_72 = arith.constant dense<0.000000e+00> : vector<21x16xf32>
    %99 = tpu.matmul %61, %98, %cst_72 {dimension_numbers = #tpu.dot_dimension_numbers<[1], [0], [0], [1], [0, 0, 1, 1], [], []>} : vector<21x32xf32>, vector<32x16xf32>, vector<21x16xf32> -> vector<21x16xf32>
    %c0_73 = arith.constant 0 : index
    %c1_74 = arith.constant 1 : index
    %c0_75 = arith.constant 0 : index
    %c0_76 = arith.constant 0 : index
    %100 = vector.load %arg11[%c0_73, %c1_74, %c0_75, %c0_76] : memref<2x2x1x16xf32, #tpu.memory_space<vmem>>, vector<1x1x1x16xf32>
    %101 = vector.shape_cast %100 : vector<1x1x1x16xf32> to vector<1x16xf32>
    %102 = vector.broadcast %101 : vector<1x16xf32> to vector<21x16xf32>
    %103 = arith.addf %99, %102 : vector<21x16xf32>
    %c0_77 = arith.constant 0 : index
    %c1_78 = arith.constant 1 : index
    %c0_79 = arith.constant 0 : index
    %c0_80 = arith.constant 0 : index
    %104 = vector.load %arg9[%c0_77, %c1_78, %c0_79, %c0_80] : memref<2x2x32x16xf32, #tpu.memory_space<vmem>>, vector<1x1x32x16xf32>
    %105 = vector.shape_cast %104 : vector<1x1x32x16xf32> to vector<32x16xf32>
    %cst_81 = arith.constant dense<0.000000e+00> : vector<21x16xf32>
    %106 = tpu.matmul %61, %105, %cst_81 {dimension_numbers = #tpu.dot_dimension_numbers<[1], [0], [0], [1], [0, 0, 1, 1], [], []>} : vector<21x32xf32>, vector<32x16xf32>, vector<21x16xf32> -> vector<21x16xf32>
    %c0_82 = arith.constant 0 : index
    %c1_83 = arith.constant 1 : index
    %c0_84 = arith.constant 0 : index
    %c0_85 = arith.constant 0 : index
    %107 = vector.load %arg12[%c0_82, %c1_83, %c0_84, %c0_85] : memref<2x2x1x16xf32, #tpu.memory_space<vmem>>, vector<1x1x1x16xf32>
    %108 = vector.shape_cast %107 : vector<1x1x1x16xf32> to vector<1x16xf32>
    %109 = vector.broadcast %108 : vector<1x16xf32> to vector<21x16xf32>
    %110 = arith.addf %106, %109 : vector<21x16xf32>
    %c0_86 = arith.constant 0 : index
    %c1_87 = arith.constant 1 : index
    %c0_88 = arith.constant 0 : index
    %c0_89 = arith.constant 0 : index
    %111 = vector.load %arg10[%c0_86, %c1_87, %c0_88, %c0_89] : memref<2x2x32x16xf32, #tpu.memory_space<vmem>>, vector<1x1x32x16xf32>
    %112 = vector.shape_cast %111 : vector<1x1x32x16xf32> to vector<32x16xf32>
    %cst_90 = arith.constant dense<0.000000e+00> : vector<21x16xf32>
    %113 = tpu.matmul %61, %112, %cst_90 {dimension_numbers = #tpu.dot_dimension_numbers<[1], [0], [0], [1], [0, 0, 1, 1], [], []>} : vector<21x32xf32>, vector<32x16xf32>, vector<21x16xf32> -> vector<21x16xf32>
    %c0_91 = arith.constant 0 : index
    %c1_92 = arith.constant 1 : index
    %c0_93 = arith.constant 0 : index
    %c0_94 = arith.constant 0 : index
    %114 = vector.load %arg13[%c0_91, %c1_92, %c0_93, %c0_94] : memref<2x2x1x16xf32, #tpu.memory_space<vmem>>, vector<1x1x1x16xf32>
    %115 = vector.shape_cast %114 : vector<1x1x1x16xf32> to vector<1x16xf32>
    %116 = vector.broadcast %115 : vector<1x16xf32> to vector<21x16xf32>
    %117 = arith.addf %113, %116 : vector<21x16xf32>
    %cst_95 = arith.constant dense<0.000000e+00> : vector<21x21xf32>
    %118 = tpu.matmul %103, %110, %cst_95 {dimension_numbers = #tpu.dot_dimension_numbers<[1], [1], [0], [0], [0, 0, 1, 0], [], []>} : vector<21x16xf32>, vector<21x16xf32>, vector<21x21xf32> -> vector<21x21xf32>
    %cst_96 = arith.constant 2.500000e-01 : f32
    %119 = vector.broadcast %cst_96 : f32 to vector<21x21xf32>
    %120 = arith.mulf %118, %119 : vector<21x21xf32>
    %cst_97 = arith.constant dense<0xFF800000> : vector<21xf32>
    %121 = vector.multi_reduction <maximumf>, %120, %cst_97 [1] : vector<21x21xf32> to vector<21xf32>
    %122 = vector.shape_cast %121 : vector<21xf32> to vector<21x1xf32>
    %123 = vector.broadcast %122 : vector<21x1xf32> to vector<21x21xf32>
    %124 = arith.subf %120, %123 : vector<21x21xf32>
    %125 = math.exp %124 : vector<21x21xf32>
    %cst_98 = arith.constant dense<0.000000e+00> : vector<21xf32>
    %126 = vector.multi_reduction <add>, %125, %cst_98 [1] : vector<21x21xf32> to vector<21xf32>
    %127 = vector.shape_cast %126 : vector<21xf32> to vector<21x1xf32>
    %128 = tpu.reciprocal %127 {approx = true} : vector<21x1xf32> -> vector<21x1xf32>
    %129 = vector.broadcast %128 : vector<21x1xf32> to vector<21x21xf32>
    %130 = arith.mulf %125, %129 : vector<21x21xf32>
    %cst_99 = arith.constant dense<0.000000e+00> : vector<21x16xf32>
    %131 = tpu.matmul %130, %117, %cst_99 {dimension_numbers = #tpu.dot_dimension_numbers<[1], [0], [0], [1], [0, 0, 1, 1], [], []>} : vector<21x21xf32>, vector<21x16xf32>, vector<21x16xf32> -> vector<21x16xf32>
    %132 = tpu.concatenate %96, %131 in 1 : vector<21x16xf32>, vector<21x16xf32> -> vector<21x32xf32>
    %c0_100 = arith.constant 0 : index
    %c0_101 = arith.constant 0 : index
    %c0_102 = arith.constant 0 : index
    %133 = vector.load %arg14[%c0_100, %c0_101, %c0_102] : memref<2x32x32xf32, #tpu.memory_space<vmem>>, vector<1x32x32xf32>
    %134 = vector.shape_cast %133 : vector<1x32x32xf32> to vector<32x32xf32>
    %cst_103 = arith.constant dense<0.000000e+00> : vector<21x32xf32>
    %135 = tpu.matmul %132, %134, %cst_103 {dimension_numbers = #tpu.dot_dimension_numbers<[1], [0], [0], [1], [0, 0, 1, 1], [], []>} : vector<21x32xf32>, vector<32x32xf32>, vector<21x32xf32> -> vector<21x32xf32>
    %136 = arith.addf %35, %135 : vector<21x32xf32>
    %c0_104 = arith.constant 0 : index
    %c0_105 = arith.constant 0 : index
    %c0_106 = arith.constant 0 : index
    %137 = vector.load %arg15[%c0_104, %c0_105, %c0_106] : memref<2x1x32xf32, #tpu.memory_space<vmem>>, vector<1x1x32xf32>
    %138 = vector.shape_cast %137 : vector<1x1x32xf32> to vector<1x32xf32>
    %139 = vector.broadcast %138 : vector<1x32xf32> to vector<21x32xf32>
    %140 = arith.addf %136, %139 : vector<21x32xf32>
    %c0_107 = arith.constant 0 : index
    %c0_108 = arith.constant 0 : index
    %c0_109 = arith.constant 0 : index
    %141 = vector.load %arg16[%c0_107, %c0_108, %c0_109] : memref<2x1x32xf32, #tpu.memory_space<vmem>>, vector<1x1x32xf32>
    %142 = vector.shape_cast %141 : vector<1x1x32xf32> to vector<1x32xf32>
    %c0_110 = arith.constant 0 : index
    %c0_111 = arith.constant 0 : index
    %c0_112 = arith.constant 0 : index
    %143 = vector.load %arg17[%c0_110, %c0_111, %c0_112] : memref<2x1x32xf32, #tpu.memory_space<vmem>>, vector<1x1x32xf32>
    %144 = vector.shape_cast %143 : vector<1x1x32xf32> to vector<1x32xf32>
    %cst_113 = arith.constant dense<0.000000e+00> : vector<21xf32>
    %145 = vector.multi_reduction <add>, %140, %cst_113 [1] : vector<21x32xf32> to vector<21xf32>
    %146 = vector.shape_cast %145 : vector<21xf32> to vector<21x1xf32>
    %cst_114 = arith.constant 3.200000e+01 : f32
    %147 = vector.broadcast %cst_114 : f32 to vector<21x1xf32>
    %148 = arith.divf %146, %147 : vector<21x1xf32>
    %149 = vector.broadcast %148 : vector<21x1xf32> to vector<21x32xf32>
    %150 = arith.subf %140, %149 : vector<21x32xf32>
    %151 = arith.mulf %150, %150 : vector<21x32xf32>
    %cst_115 = arith.constant dense<0.000000e+00> : vector<21xf32>
    %152 = vector.multi_reduction <add>, %151, %cst_115 [1] : vector<21x32xf32> to vector<21xf32>
    %153 = vector.shape_cast %152 : vector<21xf32> to vector<21x1xf32>
    %cst_116 = arith.constant 3.200000e+01 : f32
    %154 = vector.broadcast %cst_116 : f32 to vector<21x1xf32>
    %155 = arith.divf %153, %154 : vector<21x1xf32>
    %156 = vector.broadcast %148 : vector<21x1xf32> to vector<21x32xf32>
    %157 = arith.subf %140, %156 : vector<21x32xf32>
    %cst_117 = arith.constant 9.99999974E-6 : f32
    %158 = vector.broadcast %cst_117 : f32 to vector<21x1xf32>
    %159 = arith.addf %155, %158 : vector<21x1xf32>
    %160 = math.rsqrt %159 : vector<21x1xf32>
    %161 = vector.broadcast %160 : vector<21x1xf32> to vector<21x32xf32>
    %162 = arith.mulf %157, %161 : vector<21x32xf32>
    %163 = vector.broadcast %142 : vector<1x32xf32> to vector<21x32xf32>
    %164 = arith.mulf %162, %163 : vector<21x32xf32>
    %165 = vector.broadcast %144 : vector<1x32xf32> to vector<21x32xf32>
    %166 = arith.addf %164, %165 : vector<21x32xf32>
    %c0_118 = arith.constant 0 : index
    %c0_119 = arith.constant 0 : index
    %c0_120 = arith.constant 0 : index
    %167 = vector.load %arg18[%c0_118, %c0_119, %c0_120] : memref<2x32x128xf32, #tpu.memory_space<vmem>>, vector<1x32x128xf32>
    %168 = vector.shape_cast %167 : vector<1x32x128xf32> to vector<32x128xf32>
    %cst_121 = arith.constant dense<0.000000e+00> : vector<21x128xf32>
    %169 = tpu.matmul %166, %168, %cst_121 {dimension_numbers = #tpu.dot_dimension_numbers<[1], [0], [0], [1], [0, 0, 1, 1], [], []>} : vector<21x32xf32>, vector<32x128xf32>, vector<21x128xf32> -> vector<21x128xf32>
    %c0_122 = arith.constant 0 : index
    %c0_123 = arith.constant 0 : index
    %c0_124 = arith.constant 0 : index
    %170 = vector.load %arg19[%c0_122, %c0_123, %c0_124] : memref<2x1x128xf32, #tpu.memory_space<vmem>>, vector<1x1x128xf32>
    %171 = vector.shape_cast %170 : vector<1x1x128xf32> to vector<1x128xf32>
    %172 = vector.broadcast %171 : vector<1x128xf32> to vector<21x128xf32>
    %173 = arith.addf %169, %172 : vector<21x128xf32>
    %cst_125 = arith.constant 5.000000e-01 : f32
    %174 = vector.broadcast %cst_125 : f32 to vector<21x128xf32>
    %175 = arith.mulf %174, %173 : vector<21x128xf32>
    %cst_126 = arith.constant 4.471500e-02 : f32
    %176 = vector.broadcast %cst_126 : f32 to vector<21x128xf32>
    %177 = arith.mulf %176, %173 : vector<21x128xf32>
    %178 = arith.mulf %177, %173 : vector<21x128xf32>
    %179 = arith.mulf %178, %173 : vector<21x128xf32>
    %180 = arith.addf %173, %179 : vector<21x128xf32>
    %cst_127 = arith.constant 0.797884583 : f32
    %181 = vector.broadcast %cst_127 : f32 to vector<21x128xf32>
    %182 = arith.mulf %181, %180 : vector<21x128xf32>
    %183 = math.tanh %182 : vector<21x128xf32>
    %cst_128 = arith.constant 1.000000e+00 : f32
    %184 = vector.broadcast %cst_128 : f32 to vector<21x128xf32>
    %185 = arith.addf %184, %183 : vector<21x128xf32>
    %186 = arith.mulf %175, %185 : vector<21x128xf32>
    %c0_129 = arith.constant 0 : index
    %c0_130 = arith.constant 0 : index
    %c0_131 = arith.constant 0 : index
    %187 = vector.load %arg20[%c0_129, %c0_130, %c0_131] : memref<2x128x32xf32, #tpu.memory_space<vmem>>, vector<1x128x32xf32>
    %188 = vector.shape_cast %187 : vector<1x128x32xf32> to vector<128x32xf32>
    %cst_132 = arith.constant dense<0.000000e+00> : vector<21x32xf32>
    %189 = tpu.matmul %186, %188, %cst_132 {dimension_numbers = #tpu.dot_dimension_numbers<[1], [0], [0], [1], [0, 0, 1, 1], [], []>} : vector<21x128xf32>, vector<128x32xf32>, vector<21x32xf32> -> vector<21x32xf32>
    %190 = arith.addf %140, %189 : vector<21x32xf32>
    %c0_133 = arith.constant 0 : index
    %c0_134 = arith.constant 0 : index
    %c0_135 = arith.constant 0 : index
    %191 = vector.load %arg21[%c0_133, %c0_134, %c0_135] : memref<2x1x32xf32, #tpu.memory_space<vmem>>, vector<1x1x32xf32>
    %192 = vector.shape_cast %191 : vector<1x1x32xf32> to vector<1x32xf32>
    %193 = vector.broadcast %192 : vector<1x32xf32> to vector<21x32xf32>
    %194 = arith.addf %190, %193 : vector<21x32xf32>
    %c1_136 = arith.constant 1 : index
    %c0_137 = arith.constant 0 : index
    %c0_138 = arith.constant 0 : index
    %195 = vector.load %arg6[%c1_136, %c0_137, %c0_138] : memref<2x1x32xf32, #tpu.memory_space<vmem>>, vector<1x1x32xf32>
    %196 = vector.shape_cast %195 : vector<1x1x32xf32> to vector<1x32xf32>
    %c1_139 = arith.constant 1 : index
    %c0_140 = arith.constant 0 : index
    %c0_141 = arith.constant 0 : index
    %197 = vector.load %arg7[%c1_139, %c0_140, %c0_141] : memref<2x1x32xf32, #tpu.memory_space<vmem>>, vector<1x1x32xf32>
    %198 = vector.shape_cast %197 : vector<1x1x32xf32> to vector<1x32xf32>
    %cst_142 = arith.constant dense<0.000000e+00> : vector<21xf32>
    %199 = vector.multi_reduction <add>, %194, %cst_142 [1] : vector<21x32xf32> to vector<21xf32>
    %200 = vector.shape_cast %199 : vector<21xf32> to vector<21x1xf32>
    %cst_143 = arith.constant 3.200000e+01 : f32
    %201 = vector.broadcast %cst_143 : f32 to vector<21x1xf32>
    %202 = arith.divf %200, %201 : vector<21x1xf32>
    %203 = vector.broadcast %202 : vector<21x1xf32> to vector<21x32xf32>
    %204 = arith.subf %194, %203 : vector<21x32xf32>
    %205 = arith.mulf %204, %204 : vector<21x32xf32>
    %cst_144 = arith.constant dense<0.000000e+00> : vector<21xf32>
    %206 = vector.multi_reduction <add>, %205, %cst_144 [1] : vector<21x32xf32> to vector<21xf32>
    %207 = vector.shape_cast %206 : vector<21xf32> to vector<21x1xf32>
    %cst_145 = arith.constant 3.200000e+01 : f32
    %208 = vector.broadcast %cst_145 : f32 to vector<21x1xf32>
    %209 = arith.divf %207, %208 : vector<21x1xf32>
    %210 = vector.broadcast %202 : vector<21x1xf32> to vector<21x32xf32>
    %211 = arith.subf %194, %210 : vector<21x32xf32>
    %cst_146 = arith.constant 9.99999974E-6 : f32
    %212 = vector.broadcast %cst_146 : f32 to vector<21x1xf32>
    %213 = arith.addf %209, %212 : vector<21x1xf32>
    %214 = math.rsqrt %213 : vector<21x1xf32>
    %215 = vector.broadcast %214 : vector<21x1xf32> to vector<21x32xf32>
    %216 = arith.mulf %211, %215 : vector<21x32xf32>
    %217 = vector.broadcast %196 : vector<1x32xf32> to vector<21x32xf32>
    %218 = arith.mulf %216, %217 : vector<21x32xf32>
    %219 = vector.broadcast %198 : vector<1x32xf32> to vector<21x32xf32>
    %220 = arith.addf %218, %219 : vector<21x32xf32>
    %c1_147 = arith.constant 1 : index
    %c0_148 = arith.constant 0 : index
    %c0_149 = arith.constant 0 : index
    %c0_150 = arith.constant 0 : index
    %221 = vector.load %arg8[%c1_147, %c0_148, %c0_149, %c0_150] : memref<2x2x32x16xf32, #tpu.memory_space<vmem>>, vector<1x1x32x16xf32>
    %222 = vector.shape_cast %221 : vector<1x1x32x16xf32> to vector<32x16xf32>
    %cst_151 = arith.constant dense<0.000000e+00> : vector<21x16xf32>
    %223 = tpu.matmul %220, %222, %cst_151 {dimension_numbers = #tpu.dot_dimension_numbers<[1], [0], [0], [1], [0, 0, 1, 1], [], []>} : vector<21x32xf32>, vector<32x16xf32>, vector<21x16xf32> -> vector<21x16xf32>
    %c1_152 = arith.constant 1 : index
    %c0_153 = arith.constant 0 : index
    %c0_154 = arith.constant 0 : index
    %c0_155 = arith.constant 0 : index
    %224 = vector.load %arg11[%c1_152, %c0_153, %c0_154, %c0_155] : memref<2x2x1x16xf32, #tpu.memory_space<vmem>>, vector<1x1x1x16xf32>
    %225 = vector.shape_cast %224 : vector<1x1x1x16xf32> to vector<1x16xf32>
    %226 = vector.broadcast %225 : vector<1x16xf32> to vector<21x16xf32>
    %227 = arith.addf %223, %226 : vector<21x16xf32>
    %c1_156 = arith.constant 1 : index
    %c0_157 = arith.constant 0 : index
    %c0_158 = arith.constant 0 : index
    %c0_159 = arith.constant 0 : index
    %228 = vector.load %arg9[%c1_156, %c0_157, %c0_158, %c0_159] : memref<2x2x32x16xf32, #tpu.memory_space<vmem>>, vector<1x1x32x16xf32>
    %229 = vector.shape_cast %228 : vector<1x1x32x16xf32> to vector<32x16xf32>
    %cst_160 = arith.constant dense<0.000000e+00> : vector<21x16xf32>
    %230 = tpu.matmul %220, %229, %cst_160 {dimension_numbers = #tpu.dot_dimension_numbers<[1], [0], [0], [1], [0, 0, 1, 1], [], []>} : vector<21x32xf32>, vector<32x16xf32>, vector<21x16xf32> -> vector<21x16xf32>
    %c1_161 = arith.constant 1 : index
    %c0_162 = arith.constant 0 : index
    %c0_163 = arith.constant 0 : index
    %c0_164 = arith.constant 0 : index
    %231 = vector.load %arg12[%c1_161, %c0_162, %c0_163, %c0_164] : memref<2x2x1x16xf32, #tpu.memory_space<vmem>>, vector<1x1x1x16xf32>
    %232 = vector.shape_cast %231 : vector<1x1x1x16xf32> to vector<1x16xf32>
    %233 = vector.broadcast %232 : vector<1x16xf32> to vector<21x16xf32>
    %234 = arith.addf %230, %233 : vector<21x16xf32>
    %c1_165 = arith.constant 1 : index
    %c0_166 = arith.constant 0 : index
    %c0_167 = arith.constant 0 : index
    %c0_168 = arith.constant 0 : index
    %235 = vector.load %arg10[%c1_165, %c0_166, %c0_167, %c0_168] : memref<2x2x32x16xf32, #tpu.memory_space<vmem>>, vector<1x1x32x16xf32>
    %236 = vector.shape_cast %235 : vector<1x1x32x16xf32> to vector<32x16xf32>
    %cst_169 = arith.constant dense<0.000000e+00> : vector<21x16xf32>
    %237 = tpu.matmul %220, %236, %cst_169 {dimension_numbers = #tpu.dot_dimension_numbers<[1], [0], [0], [1], [0, 0, 1, 1], [], []>} : vector<21x32xf32>, vector<32x16xf32>, vector<21x16xf32> -> vector<21x16xf32>
    %c1_170 = arith.constant 1 : index
    %c0_171 = arith.constant 0 : index
    %c0_172 = arith.constant 0 : index
    %c0_173 = arith.constant 0 : index
    %238 = vector.load %arg13[%c1_170, %c0_171, %c0_172, %c0_173] : memref<2x2x1x16xf32, #tpu.memory_space<vmem>>, vector<1x1x1x16xf32>
    %239 = vector.shape_cast %238 : vector<1x1x1x16xf32> to vector<1x16xf32>
    %240 = vector.broadcast %239 : vector<1x16xf32> to vector<21x16xf32>
    %241 = arith.addf %237, %240 : vector<21x16xf32>
    %cst_174 = arith.constant dense<0.000000e+00> : vector<21x21xf32>
    %242 = tpu.matmul %227, %234, %cst_174 {dimension_numbers = #tpu.dot_dimension_numbers<[1], [1], [0], [0], [0, 0, 1, 0], [], []>} : vector<21x16xf32>, vector<21x16xf32>, vector<21x21xf32> -> vector<21x21xf32>
    %cst_175 = arith.constant 2.500000e-01 : f32
    %243 = vector.broadcast %cst_175 : f32 to vector<21x21xf32>
    %244 = arith.mulf %242, %243 : vector<21x21xf32>
    %cst_176 = arith.constant dense<0xFF800000> : vector<21xf32>
    %245 = vector.multi_reduction <maximumf>, %244, %cst_176 [1] : vector<21x21xf32> to vector<21xf32>
    %246 = vector.shape_cast %245 : vector<21xf32> to vector<21x1xf32>
    %247 = vector.broadcast %246 : vector<21x1xf32> to vector<21x21xf32>
    %248 = arith.subf %244, %247 : vector<21x21xf32>
    %249 = math.exp %248 : vector<21x21xf32>
    %cst_177 = arith.constant dense<0.000000e+00> : vector<21xf32>
    %250 = vector.multi_reduction <add>, %249, %cst_177 [1] : vector<21x21xf32> to vector<21xf32>
    %251 = vector.shape_cast %250 : vector<21xf32> to vector<21x1xf32>
    %252 = tpu.reciprocal %251 {approx = true} : vector<21x1xf32> -> vector<21x1xf32>
    %253 = vector.broadcast %252 : vector<21x1xf32> to vector<21x21xf32>
    %254 = arith.mulf %249, %253 : vector<21x21xf32>
    %cst_178 = arith.constant dense<0.000000e+00> : vector<21x16xf32>
    %255 = tpu.matmul %254, %241, %cst_178 {dimension_numbers = #tpu.dot_dimension_numbers<[1], [0], [0], [1], [0, 0, 1, 1], [], []>} : vector<21x21xf32>, vector<21x16xf32>, vector<21x16xf32> -> vector<21x16xf32>
    %c1_179 = arith.constant 1 : index
    %c1_180 = arith.constant 1 : index
    %c0_181 = arith.constant 0 : index
    %c0_182 = arith.constant 0 : index
    %256 = vector.load %arg8[%c1_179, %c1_180, %c0_181, %c0_182] : memref<2x2x32x16xf32, #tpu.memory_space<vmem>>, vector<1x1x32x16xf32>
    %257 = vector.shape_cast %256 : vector<1x1x32x16xf32> to vector<32x16xf32>
    %cst_183 = arith.constant dense<0.000000e+00> : vector<21x16xf32>
    %258 = tpu.matmul %220, %257, %cst_183 {dimension_numbers = #tpu.dot_dimension_numbers<[1], [0], [0], [1], [0, 0, 1, 1], [], []>} : vector<21x32xf32>, vector<32x16xf32>, vector<21x16xf32> -> vector<21x16xf32>
    %c1_184 = arith.constant 1 : index
    %c1_185 = arith.constant 1 : index
    %c0_186 = arith.constant 0 : index
    %c0_187 = arith.constant 0 : index
    %259 = vector.load %arg11[%c1_184, %c1_185, %c0_186, %c0_187] : memref<2x2x1x16xf32, #tpu.memory_space<vmem>>, vector<1x1x1x16xf32>
    %260 = vector.shape_cast %259 : vector<1x1x1x16xf32> to vector<1x16xf32>
    %261 = vector.broadcast %260 : vector<1x16xf32> to vector<21x16xf32>
    %262 = arith.addf %258, %261 : vector<21x16xf32>
    %c1_188 = arith.constant 1 : index
    %c1_189 = arith.constant 1 : index
    %c0_190 = arith.constant 0 : index
    %c0_191 = arith.constant 0 : index
    %263 = vector.load %arg9[%c1_188, %c1_189, %c0_190, %c0_191] : memref<2x2x32x16xf32, #tpu.memory_space<vmem>>, vector<1x1x32x16xf32>
    %264 = vector.shape_cast %263 : vector<1x1x32x16xf32> to vector<32x16xf32>
    %cst_192 = arith.constant dense<0.000000e+00> : vector<21x16xf32>
    %265 = tpu.matmul %220, %264, %cst_192 {dimension_numbers = #tpu.dot_dimension_numbers<[1], [0], [0], [1], [0, 0, 1, 1], [], []>} : vector<21x32xf32>, vector<32x16xf32>, vector<21x16xf32> -> vector<21x16xf32>
    %c1_193 = arith.constant 1 : index
    %c1_194 = arith.constant 1 : index
    %c0_195 = arith.constant 0 : index
    %c0_196 = arith.constant 0 : index
    %266 = vector.load %arg12[%c1_193, %c1_194, %c0_195, %c0_196] : memref<2x2x1x16xf32, #tpu.memory_space<vmem>>, vector<1x1x1x16xf32>
    %267 = vector.shape_cast %266 : vector<1x1x1x16xf32> to vector<1x16xf32>
    %268 = vector.broadcast %267 : vector<1x16xf32> to vector<21x16xf32>
    %269 = arith.addf %265, %268 : vector<21x16xf32>
    %c1_197 = arith.constant 1 : index
    %c1_198 = arith.constant 1 : index
    %c0_199 = arith.constant 0 : index
    %c0_200 = arith.constant 0 : index
    %270 = vector.load %arg10[%c1_197, %c1_198, %c0_199, %c0_200] : memref<2x2x32x16xf32, #tpu.memory_space<vmem>>, vector<1x1x32x16xf32>
    %271 = vector.shape_cast %270 : vector<1x1x32x16xf32> to vector<32x16xf32>
    %cst_201 = arith.constant dense<0.000000e+00> : vector<21x16xf32>
    %272 = tpu.matmul %220, %271, %cst_201 {dimension_numbers = #tpu.dot_dimension_numbers<[1], [0], [0], [1], [0, 0, 1, 1], [], []>} : vector<21x32xf32>, vector<32x16xf32>, vector<21x16xf32> -> vector<21x16xf32>
    %c1_202 = arith.constant 1 : index
    %c1_203 = arith.constant 1 : index
    %c0_204 = arith.constant 0 : index
    %c0_205 = arith.constant 0 : index
    %273 = vector.load %arg13[%c1_202, %c1_203, %c0_204, %c0_205] : memref<2x2x1x16xf32, #tpu.memory_space<vmem>>, vector<1x1x1x16xf32>
    %274 = vector.shape_cast %273 : vector<1x1x1x16xf32> to vector<1x16xf32>
    %275 = vector.broadcast %274 : vector<1x16xf32> to vector<21x16xf32>
    %276 = arith.addf %272, %275 : vector<21x16xf32>
    %cst_206 = arith.constant dense<0.000000e+00> : vector<21x21xf32>
    %277 = tpu.matmul %262, %269, %cst_206 {dimension_numbers = #tpu.dot_dimension_numbers<[1], [1], [0], [0], [0, 0, 1, 0], [], []>} : vector<21x16xf32>, vector<21x16xf32>, vector<21x21xf32> -> vector<21x21xf32>
    %cst_207 = arith.constant 2.500000e-01 : f32
    %278 = vector.broadcast %cst_207 : f32 to vector<21x21xf32>
    %279 = arith.mulf %277, %278 : vector<21x21xf32>
    %cst_208 = arith.constant dense<0xFF800000> : vector<21xf32>
    %280 = vector.multi_reduction <maximumf>, %279, %cst_208 [1] : vector<21x21xf32> to vector<21xf32>
    %281 = vector.shape_cast %280 : vector<21xf32> to vector<21x1xf32>
    %282 = vector.broadcast %281 : vector<21x1xf32> to vector<21x21xf32>
    %283 = arith.subf %279, %282 : vector<21x21xf32>
    %284 = math.exp %283 : vector<21x21xf32>
    %cst_209 = arith.constant dense<0.000000e+00> : vector<21xf32>
    %285 = vector.multi_reduction <add>, %284, %cst_209 [1] : vector<21x21xf32> to vector<21xf32>
    %286 = vector.shape_cast %285 : vector<21xf32> to vector<21x1xf32>
    %287 = tpu.reciprocal %286 {approx = true} : vector<21x1xf32> -> vector<21x1xf32>
    %288 = vector.broadcast %287 : vector<21x1xf32> to vector<21x21xf32>
    %289 = arith.mulf %284, %288 : vector<21x21xf32>
    %cst_210 = arith.constant dense<0.000000e+00> : vector<21x16xf32>
    %290 = tpu.matmul %289, %276, %cst_210 {dimension_numbers = #tpu.dot_dimension_numbers<[1], [0], [0], [1], [0, 0, 1, 1], [], []>} : vector<21x21xf32>, vector<21x16xf32>, vector<21x16xf32> -> vector<21x16xf32>
    %291 = tpu.concatenate %255, %290 in 1 : vector<21x16xf32>, vector<21x16xf32> -> vector<21x32xf32>
    %c1_211 = arith.constant 1 : index
    %c0_212 = arith.constant 0 : index
    %c0_213 = arith.constant 0 : index
    %292 = vector.load %arg14[%c1_211, %c0_212, %c0_213] : memref<2x32x32xf32, #tpu.memory_space<vmem>>, vector<1x32x32xf32>
    %293 = vector.shape_cast %292 : vector<1x32x32xf32> to vector<32x32xf32>
    %cst_214 = arith.constant dense<0.000000e+00> : vector<21x32xf32>
    %294 = tpu.matmul %291, %293, %cst_214 {dimension_numbers = #tpu.dot_dimension_numbers<[1], [0], [0], [1], [0, 0, 1, 1], [], []>} : vector<21x32xf32>, vector<32x32xf32>, vector<21x32xf32> -> vector<21x32xf32>
    %295 = arith.addf %194, %294 : vector<21x32xf32>
    %c1_215 = arith.constant 1 : index
    %c0_216 = arith.constant 0 : index
    %c0_217 = arith.constant 0 : index
    %296 = vector.load %arg15[%c1_215, %c0_216, %c0_217] : memref<2x1x32xf32, #tpu.memory_space<vmem>>, vector<1x1x32xf32>
    %297 = vector.shape_cast %296 : vector<1x1x32xf32> to vector<1x32xf32>
    %298 = vector.broadcast %297 : vector<1x32xf32> to vector<21x32xf32>
    %299 = arith.addf %295, %298 : vector<21x32xf32>
    %c1_218 = arith.constant 1 : index
    %c0_219 = arith.constant 0 : index
    %c0_220 = arith.constant 0 : index
    %300 = vector.load %arg16[%c1_218, %c0_219, %c0_220] : memref<2x1x32xf32, #tpu.memory_space<vmem>>, vector<1x1x32xf32>
    %301 = vector.shape_cast %300 : vector<1x1x32xf32> to vector<1x32xf32>
    %c1_221 = arith.constant 1 : index
    %c0_222 = arith.constant 0 : index
    %c0_223 = arith.constant 0 : index
    %302 = vector.load %arg17[%c1_221, %c0_222, %c0_223] : memref<2x1x32xf32, #tpu.memory_space<vmem>>, vector<1x1x32xf32>
    %303 = vector.shape_cast %302 : vector<1x1x32xf32> to vector<1x32xf32>
    %cst_224 = arith.constant dense<0.000000e+00> : vector<21xf32>
    %304 = vector.multi_reduction <add>, %299, %cst_224 [1] : vector<21x32xf32> to vector<21xf32>
    %305 = vector.shape_cast %304 : vector<21xf32> to vector<21x1xf32>
    %cst_225 = arith.constant 3.200000e+01 : f32
    %306 = vector.broadcast %cst_225 : f32 to vector<21x1xf32>
    %307 = arith.divf %305, %306 : vector<21x1xf32>
    %308 = vector.broadcast %307 : vector<21x1xf32> to vector<21x32xf32>
    %309 = arith.subf %299, %308 : vector<21x32xf32>
    %310 = arith.mulf %309, %309 : vector<21x32xf32>
    %cst_226 = arith.constant dense<0.000000e+00> : vector<21xf32>
    %311 = vector.multi_reduction <add>, %310, %cst_226 [1] : vector<21x32xf32> to vector<21xf32>
    %312 = vector.shape_cast %311 : vector<21xf32> to vector<21x1xf32>
    %cst_227 = arith.constant 3.200000e+01 : f32
    %313 = vector.broadcast %cst_227 : f32 to vector<21x1xf32>
    %314 = arith.divf %312, %313 : vector<21x1xf32>
    %315 = vector.broadcast %307 : vector<21x1xf32> to vector<21x32xf32>
    %316 = arith.subf %299, %315 : vector<21x32xf32>
    %cst_228 = arith.constant 9.99999974E-6 : f32
    %317 = vector.broadcast %cst_228 : f32 to vector<21x1xf32>
    %318 = arith.addf %314, %317 : vector<21x1xf32>
    %319 = math.rsqrt %318 : vector<21x1xf32>
    %320 = vector.broadcast %319 : vector<21x1xf32> to vector<21x32xf32>
    %321 = arith.mulf %316, %320 : vector<21x32xf32>
    %322 = vector.broadcast %301 : vector<1x32xf32> to vector<21x32xf32>
    %323 = arith.mulf %321, %322 : vector<21x32xf32>
    %324 = vector.broadcast %303 : vector<1x32xf32> to vector<21x32xf32>
    %325 = arith.addf %323, %324 : vector<21x32xf32>
    %c1_229 = arith.constant 1 : index
    %c0_230 = arith.constant 0 : index
    %c0_231 = arith.constant 0 : index
    %326 = vector.load %arg18[%c1_229, %c0_230, %c0_231] : memref<2x32x128xf32, #tpu.memory_space<vmem>>, vector<1x32x128xf32>
    %327 = vector.shape_cast %326 : vector<1x32x128xf32> to vector<32x128xf32>
    %cst_232 = arith.constant dense<0.000000e+00> : vector<21x128xf32>
    %328 = tpu.matmul %325, %327, %cst_232 {dimension_numbers = #tpu.dot_dimension_numbers<[1], [0], [0], [1], [0, 0, 1, 1], [], []>} : vector<21x32xf32>, vector<32x128xf32>, vector<21x128xf32> -> vector<21x128xf32>
    %c1_233 = arith.constant 1 : index
    %c0_234 = arith.constant 0 : index
    %c0_235 = arith.constant 0 : index
    %329 = vector.load %arg19[%c1_233, %c0_234, %c0_235] : memref<2x1x128xf32, #tpu.memory_space<vmem>>, vector<1x1x128xf32>
    %330 = vector.shape_cast %329 : vector<1x1x128xf32> to vector<1x128xf32>
    %331 = vector.broadcast %330 : vector<1x128xf32> to vector<21x128xf32>
    %332 = arith.addf %328, %331 : vector<21x128xf32>
    %cst_236 = arith.constant 5.000000e-01 : f32
    %333 = vector.broadcast %cst_236 : f32 to vector<21x128xf32>
    %334 = arith.mulf %333, %332 : vector<21x128xf32>
    %cst_237 = arith.constant 4.471500e-02 : f32
    %335 = vector.broadcast %cst_237 : f32 to vector<21x128xf32>
    %336 = arith.mulf %335, %332 : vector<21x128xf32>
    %337 = arith.mulf %336, %332 : vector<21x128xf32>
    %338 = arith.mulf %337, %332 : vector<21x128xf32>
    %339 = arith.addf %332, %338 : vector<21x128xf32>
    %cst_238 = arith.constant 0.797884583 : f32
    %340 = vector.broadcast %cst_238 : f32 to vector<21x128xf32>
    %341 = arith.mulf %340, %339 : vector<21x128xf32>
    %342 = math.tanh %341 : vector<21x128xf32>
    %cst_239 = arith.constant 1.000000e+00 : f32
    %343 = vector.broadcast %cst_239 : f32 to vector<21x128xf32>
    %344 = arith.addf %343, %342 : vector<21x128xf32>
    %345 = arith.mulf %334, %344 : vector<21x128xf32>
    %c1_240 = arith.constant 1 : index
    %c0_241 = arith.constant 0 : index
    %c0_242 = arith.constant 0 : index
    %346 = vector.load %arg20[%c1_240, %c0_241, %c0_242] : memref<2x128x32xf32, #tpu.memory_space<vmem>>, vector<1x128x32xf32>
    %347 = vector.shape_cast %346 : vector<1x128x32xf32> to vector<128x32xf32>
    %cst_243 = arith.constant dense<0.000000e+00> : vector<21x32xf32>
    %348 = tpu.matmul %345, %347, %cst_243 {dimension_numbers = #tpu.dot_dimension_numbers<[1], [0], [0], [1], [0, 0, 1, 1], [], []>} : vector<21x128xf32>, vector<128x32xf32>, vector<21x32xf32> -> vector<21x32xf32>
    %349 = arith.addf %299, %348 : vector<21x32xf32>
    %c1_244 = arith.constant 1 : index
    %c0_245 = arith.constant 0 : index
    %c0_246 = arith.constant 0 : index
    %350 = vector.load %arg21[%c1_244, %c0_245, %c0_246] : memref<2x1x32xf32, #tpu.memory_space<vmem>>, vector<1x1x32xf32>
    %351 = vector.shape_cast %350 : vector<1x1x32xf32> to vector<1x32xf32>
    %352 = vector.broadcast %351 : vector<1x32xf32> to vector<21x32xf32>
    %353 = arith.addf %349, %352 : vector<21x32xf32>
    %354 = vector.extract_strided_slice %353 {offsets = [0, 0], sizes = [1, 32], strides = [1, 1]} : vector<21x32xf32> to vector<1x32xf32>
    %c0_247 = arith.constant 0 : index
    %c0_248 = arith.constant 0 : index
    %355 = vector.load %arg26[%c0_247, %c0_248] : memref<1x32xf32, #tpu.memory_space<vmem>>, vector<1x32xf32>
    %c0_249 = arith.constant 0 : index
    %c0_250 = arith.constant 0 : index
    %356 = vector.load %arg27[%c0_249, %c0_250] : memref<1x32xf32, #tpu.memory_space<vmem>>, vector<1x32xf32>
    %cst_251 = arith.constant dense<0.000000e+00> : vector<1xf32>
    %357 = vector.multi_reduction <add>, %354, %cst_251 [1] : vector<1x32xf32> to vector<1xf32>
    %358 = vector.shape_cast %357 : vector<1xf32> to vector<1x1xf32>
    %cst_252 = arith.constant 3.200000e+01 : f32
    %359 = vector.broadcast %cst_252 : f32 to vector<1x1xf32>
    %360 = arith.divf %358, %359 : vector<1x1xf32>
    %361 = vector.broadcast %360 : vector<1x1xf32> to vector<1x32xf32>
    %362 = arith.subf %354, %361 : vector<1x32xf32>
    %363 = arith.mulf %362, %362 : vector<1x32xf32>
    %cst_253 = arith.constant dense<0.000000e+00> : vector<1xf32>
    %364 = vector.multi_reduction <add>, %363, %cst_253 [1] : vector<1x32xf32> to vector<1xf32>
    %365 = vector.shape_cast %364 : vector<1xf32> to vector<1x1xf32>
    %cst_254 = arith.constant 3.200000e+01 : f32
    %366 = vector.broadcast %cst_254 : f32 to vector<1x1xf32>
    %367 = arith.divf %365, %366 : vector<1x1xf32>
    %368 = vector.broadcast %360 : vector<1x1xf32> to vector<1x32xf32>
    %369 = arith.subf %354, %368 : vector<1x32xf32>
    %cst_255 = arith.constant 9.99999974E-6 : f32
    %370 = vector.broadcast %cst_255 : f32 to vector<1x1xf32>
    %371 = arith.addf %367, %370 : vector<1x1xf32>
    %372 = math.rsqrt %371 : vector<1x1xf32>
    %373 = vector.broadcast %372 : vector<1x1xf32> to vector<1x32xf32>
    %374 = arith.mulf %369, %373 : vector<1x32xf32>
    %375 = arith.mulf %374, %355 : vector<1x32xf32>
    %376 = arith.addf %375, %356 : vector<1x32xf32>
    %c0_256 = arith.constant 0 : index
    %c0_257 = arith.constant 0 : index
    %377 = vector.load %arg28[%c0_256, %c0_257] : memref<1x32xf32, #tpu.memory_space<vmem>>, vector<1x32xf32>
    %c0_258 = arith.constant 0 : index
    %c0_259 = arith.constant 0 : index
    %378 = vector.load %arg29[%c0_258, %c0_259] : memref<1x32xf32, #tpu.memory_space<vmem>>, vector<1x32xf32>
    %cst_260 = arith.constant dense<0.000000e+00> : vector<1xf32>
    %379 = vector.multi_reduction <add>, %31, %cst_260 [1] : vector<1x32xf32> to vector<1xf32>
    %380 = vector.shape_cast %379 : vector<1xf32> to vector<1x1xf32>
    %cst_261 = arith.constant 3.200000e+01 : f32
    %381 = vector.broadcast %cst_261 : f32 to vector<1x1xf32>
    %382 = arith.divf %380, %381 : vector<1x1xf32>
    %383 = vector.broadcast %382 : vector<1x1xf32> to vector<1x32xf32>
    %384 = arith.subf %31, %383 : vector<1x32xf32>
    %385 = arith.mulf %384, %384 : vector<1x32xf32>
    %cst_262 = arith.constant dense<0.000000e+00> : vector<1xf32>
    %386 = vector.multi_reduction <add>, %385, %cst_262 [1] : vector<1x32xf32> to vector<1xf32>
    %387 = vector.shape_cast %386 : vector<1xf32> to vector<1x1xf32>
    %cst_263 = arith.constant 3.200000e+01 : f32
    %388 = vector.broadcast %cst_263 : f32 to vector<1x1xf32>
    %389 = arith.divf %387, %388 : vector<1x1xf32>
    %390 = vector.broadcast %382 : vector<1x1xf32> to vector<1x32xf32>
    %391 = arith.subf %31, %390 : vector<1x32xf32>
    %cst_264 = arith.constant 9.99999974E-6 : f32
    %392 = vector.broadcast %cst_264 : f32 to vector<1x1xf32>
    %393 = arith.addf %389, %392 : vector<1x1xf32>
    %394 = math.rsqrt %393 : vector<1x1xf32>
    %395 = vector.broadcast %394 : vector<1x1xf32> to vector<1x32xf32>
    %396 = arith.mulf %391, %395 : vector<1x32xf32>
    %397 = arith.mulf %396, %377 : vector<1x32xf32>
    %398 = arith.addf %397, %378 : vector<1x32xf32>
    %c0_265 = arith.constant 0 : index
    %c0_266 = arith.constant 0 : index
    %399 = vector.load %arg30[%c0_265, %c0_266] : memref<32x32xf32, #tpu.memory_space<vmem>>, vector<32x32xf32>
    %cst_267 = arith.constant dense<0.000000e+00> : vector<1x32xf32>
    %400 = tpu.matmul %376, %399, %cst_267 {dimension_numbers = #tpu.dot_dimension_numbers<[1], [0], [0], [1], [0, 0, 1, 1], [], []>} : vector<1x32xf32>, vector<32x32xf32>, vector<1x32xf32> -> vector<1x32xf32>
    %c0_268 = arith.constant 0 : index
    %c0_269 = arith.constant 0 : index
    %401 = vector.load %arg31[%c0_268, %c0_269] : memref<1x32xf32, #tpu.memory_space<vmem>>, vector<1x32xf32>
    %402 = arith.addf %400, %401 : vector<1x32xf32>
    %cst_270 = arith.constant 0.000000e+00 : f32
    %403 = vector.broadcast %cst_270 : f32 to vector<1x32xf32>
    %404 = arith.subf %403, %402 : vector<1x32xf32>
    %405 = math.exp %404 : vector<1x32xf32>
    %cst_271 = arith.constant 1.000000e+00 : f32
    %406 = vector.broadcast %cst_271 : f32 to vector<1x32xf32>
    %407 = arith.addf %406, %405 : vector<1x32xf32>
    %408 = tpu.reciprocal %407 {approx = true} : vector<1x32xf32> -> vector<1x32xf32>
    %409 = arith.mulf %408, %376 : vector<1x32xf32>
    %cst_272 = arith.constant 1.000000e+00 : f32
    %410 = vector.broadcast %cst_272 : f32 to vector<1x32xf32>
    %411 = arith.subf %410, %408 : vector<1x32xf32>
    %412 = arith.mulf %411, %398 : vector<1x32xf32>
    %413 = arith.addf %409, %412 : vector<1x32xf32>
    %c0_273 = arith.constant 0 : index
    %c0_274 = arith.constant 0 : index
    %414 = vector.load %arg32[%c0_273, %c0_274] : memref<1x32xf32, #tpu.memory_space<vmem>>, vector<1x32xf32>
    %c0_275 = arith.constant 0 : index
    %c0_276 = arith.constant 0 : index
    %415 = vector.load %arg33[%c0_275, %c0_276] : memref<1x32xf32, #tpu.memory_space<vmem>>, vector<1x32xf32>
    %cst_277 = arith.constant dense<0.000000e+00> : vector<1xf32>
    %416 = vector.multi_reduction <add>, %413, %cst_277 [1] : vector<1x32xf32> to vector<1xf32>
    %417 = vector.shape_cast %416 : vector<1xf32> to vector<1x1xf32>
    %cst_278 = arith.constant 3.200000e+01 : f32
    %418 = vector.broadcast %cst_278 : f32 to vector<1x1xf32>
    %419 = arith.divf %417, %418 : vector<1x1xf32>
    %420 = vector.broadcast %419 : vector<1x1xf32> to vector<1x32xf32>
    %421 = arith.subf %413, %420 : vector<1x32xf32>
    %422 = arith.mulf %421, %421 : vector<1x32xf32>
    %cst_279 = arith.constant dense<0.000000e+00> : vector<1xf32>
    %423 = vector.multi_reduction <add>, %422, %cst_279 [1] : vector<1x32xf32> to vector<1xf32>
    %424 = vector.shape_cast %423 : vector<1xf32> to vector<1x1xf32>
    %cst_280 = arith.constant 3.200000e+01 : f32
    %425 = vector.broadcast %cst_280 : f32 to vector<1x1xf32>
    %426 = arith.divf %424, %425 : vector<1x1xf32>
    %427 = vector.broadcast %419 : vector<1x1xf32> to vector<1x32xf32>
    %428 = arith.subf %413, %427 : vector<1x32xf32>
    %cst_281 = arith.constant 9.99999974E-6 : f32
    %429 = vector.broadcast %cst_281 : f32 to vector<1x1xf32>
    %430 = arith.addf %426, %429 : vector<1x1xf32>
    %431 = math.rsqrt %430 : vector<1x1xf32>
    %432 = vector.broadcast %431 : vector<1x1xf32> to vector<1x32xf32>
    %433 = arith.mulf %428, %432 : vector<1x32xf32>
    %434 = arith.mulf %433, %414 : vector<1x32xf32>
    %435 = arith.addf %434, %415 : vector<1x32xf32>
    %c0_282 = arith.constant 0 : index
    %c0_283 = arith.constant 0 : index
    %436 = vector.load %arg34[%c0_282, %c0_283] : memref<32x128xf32, #tpu.memory_space<vmem>>, vector<32x128xf32>
    %cst_284 = arith.constant dense<0.000000e+00> : vector<1x128xf32>
    %437 = tpu.matmul %435, %436, %cst_284 {dimension_numbers = #tpu.dot_dimension_numbers<[1], [0], [0], [1], [0, 0, 1, 1], [], []>} : vector<1x32xf32>, vector<32x128xf32>, vector<1x128xf32> -> vector<1x128xf32>
    %c0_285 = arith.constant 0 : index
    %c0_286 = arith.constant 0 : index
    %438 = vector.load %arg35[%c0_285, %c0_286] : memref<1x128xf32, #tpu.memory_space<vmem>>, vector<1x128xf32>
    %439 = arith.addf %437, %438 : vector<1x128xf32>
    %c0_287 = arith.constant 0 : index
    %c0_288 = arith.constant 0 : index
    %c0_289 = arith.constant 0 : index
    %440 = vector.load %arg36[%c0_287, %c0_288, %c0_289] : memref<1x1x128xf32, #tpu.memory_space<vmem>>, vector<1x1x128xf32>
    %441 = vector.shape_cast %440 : vector<1x1x128xf32> to vector<1x128xf32>
    %442 = vector.shape_cast %439 : vector<1x128xf32> to vector<1x1x128xf32>
    tpu.vector_store %arg36[%c0_287, %c0_288, %c0_289], %442 {strides = array<i32>} : memref<1x1x128xf32, #tpu.memory_space<vmem>>, vector<1x1x128xf32>,
    return
  }
  func.func @transform_0(%arg0: i32) -> (i32, i32, i32) {
    %c0_i32 = arith.constant 0 : i32
    %c0_i32_0 = arith.constant 0 : i32
    %c0_i32_1 = arith.constant 0 : i32
    return %arg0, %c0_i32, %c0_i32_0 : i32, i32, i32
  }
  func.func @transform_1(%arg0: i32) -> (i32, i32) {
    %c0_i32 = arith.constant 0 : i32
    %c0_i32_0 = arith.constant 0 : i32
    %c0_i32_1 = arith.constant 0 : i32
    return %c0_i32, %c0_i32_0 : i32, i32
  }
  func.func @transform_2(%arg0: i32) -> (i32, i32) {
    %c0_i32 = arith.constant 0 : i32
    %c0_i32_0 = arith.constant 0 : i32
    %c0_i32_1 = arith.constant 0 : i32
    return %c0_i32, %c0_i32_0 : i32, i32
  }
  func.func @transform_3(%arg0: i32) -> (i32, i32) {
    %c0_i32 = arith.constant 0 : i32
    %c0_i32_0 = arith.constant 0 : i32
    %c0_i32_1 = arith.constant 0 : i32
    return %c0_i32, %c0_i32_0 : i32, i32
  }
  func.func @transform_4(%arg0: i32) -> (i32, i32) {
    %c0_i32 = arith.constant 0 : i32
    %c0_i32_0 = arith.constant 0 : i32
    %c0_i32_1 = arith.constant 0 : i32
    return %c0_i32, %c0_i32_0 : i32, i32
  }
  func.func @transform_5(%arg0: i32) -> (i32, i32, i32) {
    %c0_i32 = arith.constant 0 : i32
    %c0_i32_0 = arith.constant 0 : i32
    %c0_i32_1 = arith.constant 0 : i32
    %c0_i32_2 = arith.constant 0 : i32
    return %c0_i32, %c0_i32_0, %c0_i32_1 : i32, i32, i32
  }
  func.func @transform_6(%arg0: i32) -> (i32, i32, i32) {
    %c0_i32 = arith.constant 0 : i32
    %c0_i32_0 = arith.constant 0 : i32
    %c0_i32_1 = arith.constant 0 : i32
    %c0_i32_2 = arith.constant 0 : i32
    return %c0_i32, %c0_i32_0, %c0_i32_1 : i32, i32, i32
  }
  func.func @transform_7(%arg0: i32) -> (i32, i32, i32, i32) {
    %c0_i32 = arith.constant 0 : i32
    %c0_i32_0 = arith.constant 0 : i32
    %c0_i32_1 = arith.constant 0 : i32
    %c0_i32_2 = arith.constant 0 : i32
    %c0_i32_3 = arith.constant 0 : i32
    return %c0_i32, %c0_i32_0, %c0_i32_1, %c0_i32_2 : i32, i32, i32, i32
  }
  func.func @transform_8(%arg0: i32) -> (i32, i32, i32, i32) {
    %c0_i32 = arith.constant 0 : i32
    %c0_i32_0 = arith.constant 0 : i32
    %c0_i32_1 = arith.constant 0 : i32
    %c0_i32_2 = arith.constant 0 : i32
    %c0_i32_3 = arith.constant 0 : i32
    return %c0_i32, %c0_i32_0, %c0_i32_1, %c0_i32_2 : i32, i32, i32, i32
  }
  func.func @transform_9(%arg0: i32) -> (i32, i32, i32, i32) {
    %c0_i32 = arith.constant 0 : i32
    %c0_i32_0 = arith.constant 0 : i32
    %c0_i32_1 = arith.constant 0 : i32
    %c0_i32_2 = arith.constant 0 : i32
    %c0_i32_3 = arith.constant 0 : i32
    return %c0_i32, %c0_i32_0, %c0_i32_1, %c0_i32_2 : i32, i32, i32, i32
  }
  func.func @transform_10(%arg0: i32) -> (i32, i32, i32, i32) {
    %c0_i32 = arith.constant 0 : i32
    %c0_i32_0 = arith.constant 0 : i32
    %c0_i32_1 = arith.constant 0 : i32
    %c0_i32_2 = arith.constant 0 : i32
    %c0_i32_3 = arith.constant 0 : i32
    return %c0_i32, %c0_i32_0, %c0_i32_1, %c0_i32_2 : i32, i32, i32, i32
  }
  func.func @transform_11(%arg0: i32) -> (i32, i32, i32, i32) {
    %c0_i32 = arith.constant 0 : i32
    %c0_i32_0 = arith.constant 0 : i32
    %c0_i32_1 = arith.constant 0 : i32
    %c0_i32_2 = arith.constant 0 : i32
    %c0_i32_3 = arith.constant 0 : i32
    return %c0_i32, %c0_i32_0, %c0_i32_1, %c0_i32_2 : i32, i32, i32, i32
  }
  func.func @transform_12(%arg0: i32) -> (i32, i32, i32, i32) {
    %c0_i32 = arith.constant 0 : i32
    %c0_i32_0 = arith.constant 0 : i32
    %c0_i32_1 = arith.constant 0 : i32
    %c0_i32_2 = arith.constant 0 : i32
    %c0_i32_3 = arith.constant 0 : i32
    return %c0_i32, %c0_i32_0, %c0_i32_1, %c0_i32_2 : i32, i32, i32, i32
  }
  func.func @transform_13(%arg0: i32) -> (i32, i32, i32) {
    %c0_i32 = arith.constant 0 : i32
    %c0_i32_0 = arith.constant 0 : i32
    %c0_i32_1 = arith.constant 0 : i32
    %c0_i32_2 = arith.constant 0 : i32
    return %c0_i32, %c0_i32_0, %c0_i32_1 : i32, i32, i32
  }
  func.func @transform_14(%arg0: i32) -> (i32, i32, i32) {
    %c0_i32 = arith.constant 0 : i32
    %c0_i32_0 = arith.constant 0 : i32
    %c0_i32_1 = arith.constant 0 : i32
    %c0_i32_2 = arith.constant 0 : i32
    return %c0_i32, %c0_i32_0, %c0_i32_1 : i32, i32, i32
  }
  func.func @transform_15(%arg0: i32) -> (i32, i32, i32) {
    %c0_i32 = arith.constant 0 : i32
    %c0_i32_0 = arith.constant 0 : i32
    %c0_i32_1 = arith.constant 0 : i32
    %c0_i32_2 = arith.constant 0 : i32
    return %c0_i32, %c0_i32_0, %c0_i32_1 : i32, i32, i32
  }
  func.func @transform_16(%arg0: i32) -> (i32, i32, i32) {
    %c0_i32 = arith.constant 0 : i32
    %c0_i32_0 = arith.constant 0 : i32
    %c0_i32_1 = arith.constant 0 : i32
    %c0_i32_2 = arith.constant 0 : i32
    return %c0_i32, %c0_i32_0, %c0_i32_1 : i32, i32, i32
  }
  func.func @transform_17(%arg0: i32) -> (i32, i32, i32) {
    %c0_i32 = arith.constant 0 : i32
    %c0_i32_0 = arith.constant 0 : i32
    %c0_i32_1 = arith.constant 0 : i32
    %c0_i32_2 = arith.constant 0 : i32
    return %c0_i32, %c0_i32_0, %c0_i32_1 : i32, i32, i32
  }
  func.func @transform_18(%arg0: i32) -> (i32, i32, i32) {
    %c0_i32 = arith.constant 0 : i32
    %c0_i32_0 = arith.constant 0 : i32
    %c0_i32_1 = arith.constant 0 : i32
    %c0_i32_2 = arith.constant 0 : i32
    return %c0_i32, %c0_i32_0, %c0_i32_1 : i32, i32, i32
  }
  func.func @transform_19(%arg0: i32) -> (i32, i32, i32) {
    %c0_i32 = arith.constant 0 : i32
    %c0_i32_0 = arith.constant 0 : i32
    %c0_i32_1 = arith.constant 0 : i32
    %c0_i32_2 = arith.constant 0 : i32
    return %c0_i32, %c0_i32_0, %c0_i32_1 : i32, i32, i32
  }
  func.func @transform_20(%arg0: i32) -> (i32, i32, i32) {
    %c0_i32 = arith.constant 0 : i32
    %c0_i32_0 = arith.constant 0 : i32
    %c0_i32_1 = arith.constant 0 : i32
    %c0_i32_2 = arith.constant 0 : i32
    return %c0_i32, %c0_i32_0, %c0_i32_1 : i32, i32, i32
  }
  func.func @transform_21(%arg0: i32) -> (i32, i32) {
    %c0_i32 = arith.constant 0 : i32
    %c0_i32_0 = arith.constant 0 : i32
    %c0_i32_1 = arith.constant 0 : i32
    return %c0_i32, %c0_i32_0 : i32, i32
  }
  func.func @transform_22(%arg0: i32) -> (i32, i32) {
    %c0_i32 = arith.constant 0 : i32
    %c0_i32_0 = arith.constant 0 : i32
    %c0_i32_1 = arith.constant 0 : i32
    return %c0_i32, %c0_i32_0 : i32, i32
  }
  func.func @transform_23(%arg0: i32) -> (i32, i32) {
    %c0_i32 = arith.constant 0 : i32
    %c0_i32_0 = arith.constant 0 : i32
    %c0_i32_1 = arith.constant 0 : i32
    return %c0_i32, %c0_i32_0 : i32, i32
  }
  func.func @transform_24(%arg0: i32) -> (i32, i32) {
    %c0_i32 = arith.constant 0 : i32
    %c0_i32_0 = arith.constant 0 : i32
    %c0_i32_1 = arith.constant 0 : i32
    return %c0_i32, %c0_i32_0 : i32, i32
  }
  func.func @transform_25(%arg0: i32) -> (i32, i32) {
    %c0_i32 = arith.constant 0 : i32
    %c0_i32_0 = arith.constant 0 : i32
    %c0_i32_1 = arith.constant 0 : i32
    return %c0_i32, %c0_i32_0 : i32, i32
  }
  func.func @transform_26(%arg0: i32) -> (i32, i32) {
    %c0_i32 = arith.constant 0 : i32
    %c0_i32_0 = arith.constant 0 : i32
    %c0_i32_1 = arith.constant 0 : i32
    return %c0_i32, %c0_i32_0 : i32, i32
  }
  func.func @transform_27(%arg0: i32) -> (i32, i32) {
    %c0_i32 = arith.constant 0 : i32
    %c0_i32_0 = arith.constant 0 : i32
    %c0_i32_1 = arith.constant 0 : i32
    return %c0_i32, %c0_i32_0 : i32, i32
  }
  func.func @transform_28(%arg0: i32) -> (i32, i32) {
    %c0_i32 = arith.constant 0 : i32
    %c0_i32_0 = arith.constant 0 : i32
    %c0_i32_1 = arith.constant 0 : i32
    return %c0_i32, %c0_i32_0 : i32, i32
  }
  func.func @transform_29(%arg0: i32) -> (i32, i32) {
    %c0_i32 = arith.constant 0 : i32
    %c0_i32_0 = arith.constant 0 : i32
    %c0_i32_1 = arith.constant 0 : i32
    return %c0_i32, %c0_i32_0 : i32, i32
  }
  func.func @transform_30(%arg0: i32) -> (i32, i32) {
    %c0_i32 = arith.constant 0 : i32
    %c0_i32_0 = arith.constant 0 : i32
    %c0_i32_1 = arith.constant 0 : i32
    return %c0_i32, %c0_i32_0 : i32, i32
  }
  func.func @transform_31(%arg0: i32) -> (i32, i32) {
    %c0_i32 = arith.constant 0 : i32
    %c0_i32_0 = arith.constant 0 : i32
    %c0_i32_1 = arith.constant 0 : i32
    return %c0_i32, %c0_i32_0 : i32, i32
  }
  func.func @transform_32(%arg0: i32) -> (i32, i32) {
    %c0_i32 = arith.constant 0 : i32
    %c0_i32_0 = arith.constant 0 : i32
    %c0_i32_1 = arith.constant 0 : i32
    return %c0_i32, %c0_i32_0 : i32, i32
  }
  func.func @transform_33(%arg0: i32) -> (i32, i32) {
    %c0_i32 = arith.constant 0 : i32
    %c0_i32_0 = arith.constant 0 : i32
    %c0_i32_1 = arith.constant 0 : i32
    return %c0_i32, %c0_i32_0 : i32, i32
  }
  func.func @transform_34(%arg0: i32) -> (i32, i32) {
    %c0_i32 = arith.constant 0 : i32
    %c0_i32_0 = arith.constant 0 : i32
    %c0_i32_1 = arith.constant 0 : i32
    return %c0_i32, %c0_i32_0 : i32, i32
  }
  func.func @transform_35(%arg0: i32) -> (i32, i32, i32) {
    %c0_i32 = arith.constant 0 : i32
    %c0_i32_0 = arith.constant 0 : i32
    %c0_i32_1 = arith.constant 0 : i32
    return %arg0, %c0_i32, %c0_i32_0 : i32, i32, i32
  }
}

</mosaic_0001>

<llo_original>
// kernel: vit_mag_forward.1
$region0: #{vit_mag_forward.1}
  #allocation0 [shape = 'u32[]', space=smem, size = 0x4, offset = 0x4, fixed_abs, tag = 'smem constant byte address 0x4 - core index']
  #allocation1 [shape = 'u32[144,128]{1,0:T(1,128)}', space=vmem, size = 0x12000, scoped, tag = 'internal scratch']
  %s0 = inlined_call_operand.smem [shape: u32[36], index: -1, kind: input, shape index: {}]
  %s1 = sld [smem:[%s0]]
  %s2 = scalar_lea.smem %s0, 1
  %s3 = sld [smem:[%s2]]
  %s4 = scalar_lea.smem %s0, 2
  %s5 = sld [smem:[%s4]]
  %s6 = scalar_lea.smem %s0, 3
  %s7 = sld [smem:[%s6]]
  %s8 = scalar_lea.smem %s0, 4
  %s9 = sld [smem:[%s8]]
  %s10 = scalar_lea.smem %s0, 5
  %s11 = sld [smem:[%s10]]
  %s12 = scalar_lea.smem %s0, 6
  %s13 = sld [smem:[%s12]]
  %s14 = scalar_lea.smem %s0, 7
  %s15 = sld [smem:[%s14]]
  %s16 = scalar_lea.smem %s0, 8
  %s17 = sld [smem:[%s16]]
  %s18 = scalar_lea.smem %s0, 9
  %s19 = sld [smem:[%s18]]
  %s20 = scalar_lea.smem %s0, 10
  %s21 = sld [smem:[%s20]]
  %s22 = scalar_lea.smem %s0, 11
  %s23 = sld [smem:[%s22]]
  %s24 = scalar_lea.smem %s0, 12
  %s25 = sld [smem:[%s24]]
  %s26 = scalar_lea.smem %s0, 13
  %s27 = sld [smem:[%s26]]
  %s28 = scalar_lea.smem %s0, 14
  %s29 = sld [smem:[%s28]]
  %s30 = scalar_lea.smem %s0, 15
  %s31 = sld [smem:[%s30]]
  %s32 = scalar_lea.smem %s0, 16
  %s33 = sld [smem:[%s32]]
  %s34 = scalar_lea.smem %s0, 17
  %s35 = sld [smem:[%s34]]
  %s36 = scalar_lea.smem %s0, 18
  %s37 = sld [smem:[%s36]]
  %s38 = scalar_lea.smem %s0, 19
  %s39 = sld [smem:[%s38]]
  %s40 = scalar_lea.smem %s0, 20
  %s41 = sld [smem:[%s40]]
  %s42 = scalar_lea.smem %s0, 21
  %s43 = sld [smem:[%s42]]
  %s44 = scalar_lea.smem %s0, 22
  %s45 = sld [smem:[%s44]]
  %s46 = scalar_lea.smem %s0, 23
  %s47 = sld [smem:[%s46]]
  %s48 = scalar_lea.smem %s0, 24
  %s49 = sld [smem:[%s48]]
  %s50 = scalar_lea.smem %s0, 25
  %s51 = sld [smem:[%s50]]
  %s52 = scalar_lea.smem %s0, 26
  %s53 = sld [smem:[%s52]]
  %s54 = scalar_lea.smem %s0, 27
  %s55 = sld [smem:[%s54]]
  %s56 = scalar_lea.smem %s0, 28
  %s57 = sld [smem:[%s56]]
  %s58 = scalar_lea.smem %s0, 29
  %s59 = sld [smem:[%s58]]
  %s60 = scalar_lea.smem %s0, 30
  %s61 = sld [smem:[%s60]]
  %s62 = scalar_lea.smem %s0, 31
  %s63 = sld [smem:[%s62]]
  %s64 = scalar_lea.smem %s0, 32
  %s65 = sld [smem:[%s64]]
  %s66 = scalar_lea.smem %s0, 33
  %s67 = sld [smem:[%s66]]
  %s68 = scalar_lea.smem %s0, 34
  %s69 = sld [smem:[%s68]]
  %s70 = scalar_lea.smem %s0, 35
  %s71 = sld [smem:[%s70]]
  %s72 = sld [smem:[#allocation0]]
  $region173: #{vit_mag_forward.1} parent=0
    _
  %s74 = ssub.s32 1, %s72
  %s75 = scalar_select 0, %s74, %s72
  $region1: #{vit_mag_forward.1} parent=0
    #allocation2 [shape = 'u8[1024]{0}', space=vmem, size = 0x400, scoped, tag = 'output window, operand 0']
    #allocation3 [shape = 's32[2]{0}', space=sflag, size = 0x8, scoped, tag = 'scoped memory for vit_mag_forward.1']
    %76 = vsyncpa [#allocation3], 0
    %s77 = scalar_lea.sflag [#allocation3], 1
    %78 = vsyncpa %s77, 0
    loop: start=0, step=1, limit=4
    $region2: #{vit_mag_forward.1} parent=1 // loop_pre_header
      _
    $region3: #{vit_mag_forward.1} parent=1 // loop_header
      %s80 = sphi 0, %s84
      %p81 = scmp.ge.s32.totalorder %s80, 4
      %s90 = sphi 0, %s92
      %s93 = sphi 0, %s90
      %s94 = sphi 0, %s93
      %s110 = sphi 0, %s94
      %s114 = sphi 0, %s114
      %s116 = sphi 0, %s114
      %s117 = sphi 0, %s116
      %s131 = sphi 0, %s117
      %s135 = sphi 0, %s135
      %s137 = sphi 0, %s135
      %s138 = sphi 0, %s137
      %s152 = sphi 0, %s138
      %s156 = sphi 0, %s156
      %s158 = sphi 0, %s156
      %s159 = sphi 0, %s158
      %s173 = sphi 0, %s159
      %s177 = sphi 0, %s177
      %s179 = sphi 0, %s177
      %s180 = sphi 0, %s179
      %s194 = sphi 0, %s180
      %s198 = sphi 0, %s198
      %s200 = sphi 0, %s198
      %s201 = sphi 0, %s200
      %s215 = sphi 0, %s201
      %s219 = sphi 0, %s219
      %s221 = sphi 0, %s219
      %s222 = sphi 0, %s221
      %s236 = sphi 0, %s222
      %s240 = sphi 0, %s240
      %s242 = sphi 0, %s240
      %s243 = sphi 0, %s242
      %s257 = sphi 0, %s243
      %s261 = sphi 0, %s261
      %s263 = sphi 0, %s261
      %s264 = sphi 0, %s263
      %s278 = sphi 0, %s264
      %s282 = sphi 0, %s282
      %s284 = sphi 0, %s282
      %s285 = sphi 0, %s284
      %s299 = sphi 0, %s285
      %s303 = sphi 0, %s303
      %s305 = sphi 0, %s303
      %s306 = sphi 0, %s305
      %s320 = sphi 0, %s306
      %s324 = sphi 0, %s324
      %s326 = sphi 0, %s324
      %s327 = sphi 0, %s326
      %s341 = sphi 0, %s327
      %s345 = sphi 0, %s345
      %s347 = sphi 0, %s345
      %s348 = sphi 0, %s347
      %s362 = sphi 0, %s348
      %s366 = sphi 0, %s366
      %s368 = sphi 0, %s366
      %s369 = sphi 0, %s368
      %s383 = sphi 0, %s369
      %s387 = sphi 0, %s387
      %s389 = sphi 0, %s387
      %s390 = sphi 0, %s389
      %s404 = sphi 0, %s390
      %s408 = sphi 0, %s408
      %s410 = sphi 0, %s408
      %s411 = sphi 0, %s410
      %s425 = sphi 0, %s411
      %s429 = sphi 0, %s429
      %s431 = sphi 0, %s429
      %s432 = sphi 0, %s431
      %s446 = sphi 0, %s432
      %s450 = sphi 0, %s450
      %s452 = sphi 0, %s450
      %s453 = sphi 0, %s452
      %s467 = sphi 0, %s453
      %s471 = sphi 0, %s471
      %s473 = sphi 0, %s471
      %s474 = sphi 0, %s473
      %s488 = sphi 0, %s474
      %s492 = sphi 0, %s492
      %s494 = sphi 0, %s492
      %s495 = sphi 0, %s494
      %s509 = sphi 0, %s495
      %s513 = sphi 0, %s513
      %s515 = sphi 0, %s513
      %s516 = sphi 0, %s515
      %s530 = sphi 0, %s516
      %s534 = sphi 0, %s534
      %s536 = sphi 0, %s534
      %s537 = sphi 0, %s536
      %s551 = sphi 0, %s537
      %s555 = sphi 0, %s555
      %s557 = sphi 0, %s555
      %s558 = sphi 0, %s557
      %s572 = sphi 0, %s558
      %s576 = sphi 0, %s576
      %s578 = sphi 0, %s576
      %s579 = sphi 0, %s578
      %s593 = sphi 0, %s579
      %s597 = sphi 0, %s597
      %s599 = sphi 0, %s597
      %s600 = sphi 0, %s599
      %s614 = sphi 0, %s600
      %s618 = sphi 0, %s618
      %s620 = sphi 0, %s618
      %s621 = sphi 0, %s620
      %s635 = sphi 0, %s621
      %s639 = sphi 0, %s639
      %s641 = sphi 0, %s639
      %s642 = sphi 0, %s641
      %s656 = sphi 0, %s642
      %s660 = sphi 0, %s660
      %s662 = sphi 0, %s660
      %s663 = sphi 0, %s662
      %s677 = sphi 0, %s663
      %s681 = sphi 0, %s681
      %s683 = sphi 0, %s681
      %s684 = sphi 0, %s683
      %s698 = sphi 0, %s684
      %s702 = sphi 0, %s702
      %s704 = sphi 0, %s702
      %s705 = sphi 0, %s704
      %s719 = sphi 0, %s705
      %s723 = sphi 0, %s723
      %s725 = sphi 0, %s723
      %s726 = sphi 0, %s725
      %s740 = sphi 0, %s726
      %s744 = sphi 0, %s744
      %s746 = sphi 0, %s744
      %s747 = sphi 0, %s746
      %s761 = sphi 0, %s747
      %s765 = sphi 0, %s765
      %s767 = sphi 0, %s765
      %s768 = sphi 0, %s767
      %s782 = sphi 0, %s768
      %s786 = sphi 0, %s786
      %s788 = sphi 0, %s786
      %s789 = sphi 0, %s788
      %s803 = sphi 0, %s789
      %s807 = sphi 0, %s807
      %s809 = sphi 0, %s807
      %s810 = sphi 0, %s809
      %s824 = sphi 0, %s810
      %s830 = sphi 0, %s832
      %s833 = sphi 0, %s830
      %s834 = sphi 0, %s833
      %s850 = sphi 0, %s834
    $region4: #{vit_mag_forward.1} parent=1 // loop_header_branch
      %83 = sbr.rel (%p81) target = $region8
    $region5: #{vit_mag_forward.1} parent=1 // loop_body
      %s85 = ssub.s32 %s80, 1
      %s86 = ssub.s32 %s80, 2
      %s87 = sadd.s32 %s80, 1
      %s88 = ssub.s32 %s80, %s87
      %p89 = scmp.eq.s32.totalorder %s88, 0
      %s91 = sadd.s32 %s90, 1
      %s92 = scalar_select %p89, %s90, %s91
      %p95 = pneg %p89
      %p96 = scmp.eq.s32.totalorder %s80, 1
      %p97 = por %p95, %p96
      %p98 = scmp.ne.s32.totalorder %s90, %s93
      %p99 = scmp.eq.s32.totalorder %s80, 0
      %p100 = por %p98, %p99
      %p101 = scmp.ne.s32.totalorder %s90, %s93
      %p102 = scmp.eq.s32.totalorder %s85, 1
      %p103 = por %p101, %p102
      %p104 = scmp.ne.s32.totalorder %s93, %s94
      %p105 = scmp.eq.s32.totalorder %s85, 0
      %p106 = por %p104, %p105
      %p107 = scmp.ne.s32.totalorder %s93, %s94
      %p108 = scmp.eq.s32.totalorder %s86, 1
      %p109 = por %p107, %p108
      %p111 = scmp.ne.s32.totalorder %s94, %s110
      %p112 = scmp.eq.s32.totalorder %s86, 0
      %p113 = por %p111, %p112
      %s115 = sadd.s32 %s114, 1
      %p118 = scmp.eq.s32.totalorder %s80, 1
      %p119 = scmp.ne.s32.totalorder %s114, %s116
      %p120 = scmp.eq.s32.totalorder %s80, 0
      %p121 = por %p119, %p120
      %p122 = scmp.ne.s32.totalorder %s114, %s116
      %p123 = scmp.eq.s32.totalorder %s85, 1
      %p124 = por %p122, %p123
      %p125 = scmp.ne.s32.totalorder %s116, %s117
      %p126 = scmp.eq.s32.totalorder %s85, 0
      %p127 = por %p125, %p126
      %p128 = scmp.ne.s32.totalorder %s116, %s117
      %p129 = scmp.eq.s32.totalorder %s86, 1
      %p130 = por %p128, %p129
      %p132 = scmp.ne.s32.totalorder %s117, %s131
      %p133 = scmp.eq.s32.totalorder %s86, 0
      %p134 = por %p132, %p133
      %s136 = sadd.s32 %s135, 1
      %p139 = scmp.eq.s32.totalorder %s80, 1
      %p140 = scmp.ne.s32.totalorder %s135, %s137
      %p141 = scmp.eq.s32.totalorder %s80, 0
      %p142 = por %p140, %p141
      %p143 = scmp.ne.s32.totalorder %s135, %s137
      %p144 = scmp.eq.s32.totalorder %s85, 1
      %p145 = por %p143, %p144
      %p146 = scmp.ne.s32.totalorder %s137, %s138
      %p147 = scmp.eq.s32.totalorder %s85, 0
      %p148 = por %p146, %p147
      %p149 = scmp.ne.s32.totalorder %s137, %s138
      %p150 = scmp.eq.s32.totalorder %s86, 1
      %p151 = por %p149, %p150
      %p153 = scmp.ne.s32.totalorder %s138, %s152
      %p154 = scmp.eq.s32.totalorder %s86, 0
      %p155 = por %p153, %p154
      %s157 = sadd.s32 %s156, 1
      %p160 = scmp.eq.s32.totalorder %s80, 1
      %p161 = scmp.ne.s32.totalorder %s156, %s158
      %p162 = scmp.eq.s32.totalorder %s80, 0
      %p163 = por %p161, %p162
      %p164 = scmp.ne.s32.totalorder %s156, %s158
      %p165 = scmp.eq.s32.totalorder %s85, 1
      %p166 = por %p164, %p165
      %p167 = scmp.ne.s32.totalorder %s158, %s159
      %p168 = scmp.eq.s32.totalorder %s85, 0
      %p169 = por %p167, %p168
      %p170 = scmp.ne.s32.totalorder %s158, %s159
      %p171 = scmp.eq.s32.totalorder %s86, 1
      %p172 = por %p170, %p171
      %p174 = scmp.ne.s32.totalorder %s159, %s173
      %p175 = scmp.eq.s32.totalorder %s86, 0
      %p176 = por %p174, %p175
      %s178 = sadd.s32 %s177, 1
      %p181 = scmp.eq.s32.totalorder %s80, 1
      %p182 = scmp.ne.s32.totalorder %s177, %s179
      %p183 = scmp.eq.s32.totalorder %s80, 0
      %p184 = por %p182, %p183
      %p185 = scmp.ne.s32.totalorder %s177, %s179
      %p186 = scmp.eq.s32.totalorder %s85, 1
      %p187 = por %p185, %p186
      %p188 = scmp.ne.s32.totalorder %s179, %s180
      %p189 = scmp.eq.s32.totalorder %s85, 0
      %p190 = por %p188, %p189
      %p191 = scmp.ne.s32.totalorder %s179, %s180
      %p192 = scmp.eq.s32.totalorder %s86, 1
      %p193 = por %p191, %p192
      %p195 = scmp.ne.s32.totalorder %s180, %s194
      %p196 = scmp.eq.s32.totalorder %s86, 0
      %p197 = por %p195, %p196
      %s199 = sadd.s32 %s198, 1
      %p202 = scmp.eq.s32.totalorder %s80, 1
      %p203 = scmp.ne.s32.totalorder %s198, %s200
      %p204 = scmp.eq.s32.totalorder %s80, 0
      %p205 = por %p203, %p204
      %p206 = scmp.ne.s32.totalorder %s198, %s200
      %p207 = scmp.eq.s32.totalorder %s85, 1
      %p208 = por %p206, %p207
      %p209 = scmp.ne.s32.totalorder %s200, %s201
      %p210 = scmp.eq.s32.totalorder %s85, 0
      %p211 = por %p209, %p210
      %p212 = scmp.ne.s32.totalorder %s200, %s201
      %p213 = scmp.eq.s32.totalorder %s86, 1
      %p214 = por %p212, %p213
      %p216 = scmp.ne.s32.totalorder %s201, %s215
      %p217 = scmp.eq.s32.totalorder %s86, 0
      %p218 = por %p216, %p217
      %s220 = sadd.s32 %s219, 1
      %p223 = scmp.eq.s32.totalorder %s80, 1
      %p224 = scmp.ne.s32.totalorder %s219, %s221
      %p225 = scmp.eq.s32.totalorder %s80, 0
      %p226 = por %p224, %p225
      %p227 = scmp.ne.s32.totalorder %s219, %s221
      %p228 = scmp.eq.s32.totalorder %s85, 1
      %p229 = por %p227, %p228
      %p230 = scmp.ne.s32.totalorder %s221, %s222
      %p231 = scmp.eq.s32.totalorder %s85, 0
      %p232 = por %p230, %p231
      %p233 = scmp.ne.s32.totalorder %s221, %s222
      %p234 = scmp.eq.s32.totalorder %s86, 1
      %p235 = por %p233, %p234
      %p237 = scmp.ne.s32.totalorder %s222, %s236
      %p238 = scmp.eq.s32.totalorder %s86, 0
      %p239 = por %p237, %p238
      %s241 = sadd.s32 %s240, 1
      %p244 = scmp.eq.s32.totalorder %s80, 1
      %p245 = scmp.ne.s32.totalorder %s240, %s242
      %p246 = scmp.eq.s32.totalorder %s80, 0
      %p247 = por %p245, %p246
      %p248 = scmp.ne.s32.totalorder %s240, %s242
      %p249 = scmp.eq.s32.totalorder %s85, 1
      %p250 = por %p248, %p249
      %p251 = scmp.ne.s32.totalorder %s242, %s243
      %p252 = scmp.eq.s32.totalorder %s85, 0
      %p253 = por %p251, %p252
      %p254 = scmp.ne.s32.totalorder %s242, %s243
      %p255 = scmp.eq.s32.totalorder %s86, 1
      %p256 = por %p254, %p255
      %p258 = scmp.ne.s32.totalorder %s243, %s257
      %p259 = scmp.eq.s32.totalorder %s86, 0
      %p260 = por %p258, %p259
      %s262 = sadd.s32 %s261, 1
      %p265 = scmp.eq.s32.totalorder %s80, 1
      %p266 = scmp.ne.s32.totalorder %s261, %s263
      %p267 = scmp.eq.s32.totalorder %s80, 0
      %p268 = por %p266, %p267
      %p269 = scmp.ne.s32.totalorder %s261, %s263
      %p270 = scmp.eq.s32.totalorder %s85, 1
      %p271 = por %p269, %p270
      %p272 = scmp.ne.s32.totalorder %s263, %s264
      %p273 = scmp.eq.s32.totalorder %s85, 0
      %p274 = por %p272, %p273
      %p275 = scmp.ne.s32.totalorder %s263, %s264
      %p276 = scmp.eq.s32.totalorder %s86, 1
      %p277 = por %p275, %p276
      %p279 = scmp.ne.s32.totalorder %s264, %s278
      %p280 = scmp.eq.s32.totalorder %s86, 0
      %p281 = por %p279, %p280
      %s283 = sadd.s32 %s282, 1
      %p286 = scmp.eq.s32.totalorder %s80, 1
      %p287 = scmp.ne.s32.totalorder %s282, %s284
      %p288 = scmp.eq.s32.totalorder %s80, 0
      %p289 = por %p287, %p288
      %p290 = scmp.ne.s32.totalorder %s282, %s284
      %p291 = scmp.eq.s32.totalorder %s85, 1
      %p292 = por %p290, %p291
      %p293 = scmp.ne.s32.totalorder %s284, %s285
      %p294 = scmp.eq.s32.totalorder %s85, 0
      %p295 = por %p293, %p294
      %p296 = scmp.ne.s32.totalorder %s284, %s285
      %p297 = scmp.eq.s32.totalorder %s86, 1
      %p298 = por %p296, %p297
      %p300 = scmp.ne.s32.totalorder %s285, %s299
      %p301 = scmp.eq.s32.totalorder %s86, 0
      %p302 = por %p300, %p301
      %s304 = sadd.s32 %s303, 1
      %p307 = scmp.eq.s32.totalorder %s80, 1
      %p308 = scmp.ne.s32.totalorder %s303, %s305
      %p309 = scmp.eq.s32.totalorder %s80, 0
      %p310 = por %p308, %p309
      %p311 = scmp.ne.s32.totalorder %s303, %s305
      %p312 = scmp.eq.s32.totalorder %s85, 1
      %p313 = por %p311, %p312
      %p314 = scmp.ne.s32.totalorder %s305, %s306
      %p315 = scmp.eq.s32.totalorder %s85, 0
      %p316 = por %p314, %p315
      %p317 = scmp.ne.s32.totalorder %s305, %s306
      %p318 = scmp.eq.s32.totalorder %s86, 1
      %p319 = por %p317, %p318
      %p321 = scmp.ne.s32.totalorder %s306, %s320
      %p322 = scmp.eq.s32.totalorder %s86, 0
      %p323 = por %p321, %p322
      %s325 = sadd.s32 %s324, 1
      %p328 = scmp.eq.s32.totalorder %s80, 1
      %p329 = scmp.ne.s32.totalorder %s324, %s326
      %p330 = scmp.eq.s32.totalorder %s80, 0
      %p331 = por %p329, %p330
      %p332 = scmp.ne.s32.totalorder %s324, %s326
      %p333 = scmp.eq.s32.totalorder %s85, 1
      %p334 = por %p332, %p333
      %p335 = scmp.ne.s32.totalorder %s326, %s327
      %p336 = scmp.eq.s32.totalorder %s85, 0
      %p337 = por %p335, %p336
      %p338 = scmp.ne.s32.totalorder %s326, %s327
      %p339 = scmp.eq.s32.totalorder %s86, 1
      %p340 = por %p338, %p339
      %p342 = scmp.ne.s32.totalorder %s327, %s341
      %p343 = scmp.eq.s32.totalorder %s86, 0
      %p344 = por %p342, %p343
      %s346 = sadd.s32 %s345, 1
      %p349 = scmp.eq.s32.totalorder %s80, 1
      %p350 = scmp.ne.s32.totalorder %s345, %s347
      %p351 = scmp.eq.s32.totalorder %s80, 0
      %p352 = por %p350, %p351
      %p353 = scmp.ne.s32.totalorder %s345, %s347
      %p354 = scmp.eq.s32.totalorder %s85, 1
      %p355 = por %p353, %p354
      %p356 = scmp.ne.s32.totalorder %s347, %s348
      %p357 = scmp.eq.s32.totalorder %s85, 0
      %p358 = por %p356, %p357
      %p359 = scmp.ne.s32.totalorder %s347, %s348
      %p360 = scmp.eq.s32.totalorder %s86, 1
      %p361 = por %p359, %p360
      %p363 = scmp.ne.s32.totalorder %s348, %s362
      %p364 = scmp.eq.s32.totalorder %s86, 0
      %p365 = por %p363, %p364
      %s367 = sadd.s32 %s366, 1
      %p370 = scmp.eq.s32.totalorder %s80, 1
      %p371 = scmp.ne.s32.totalorder %s366, %s368
      %p372 = scmp.eq.s32.totalorder %s80, 0
      %p373 = por %p371, %p372
      %p374 = scmp.ne.s32.totalorder %s366, %s368
      %p375 = scmp.eq.s32.totalorder %s85, 1
      %p376 = por %p374, %p375
      %p377 = scmp.ne.s32.totalorder %s368, %s369
      %p378 = scmp.eq.s32.totalorder %s85, 0
      %p379 = por %p377, %p378
      %p380 = scmp.ne.s32.totalorder %s368, %s369
      %p381 = scmp.eq.s32.totalorder %s86, 1
      %p382 = por %p380, %p381
      %p384 = scmp.ne.s32.totalorder %s369, %s383
      %p385 = scmp.eq.s32.totalorder %s86, 0
      %p386 = por %p384, %p385
      %s388 = sadd.s32 %s387, 1
      %p391 = scmp.eq.s32.totalorder %s80, 1
      %p392 = scmp.ne.s32.totalorder %s387, %s389
      %p393 = scmp.eq.s32.totalorder %s80, 0
      %p394 = por %p392, %p393
      %p395 = scmp.ne.s32.totalorder %s387, %s389
      %p396 = scmp.eq.s32.totalorder %s85, 1
      %p397 = por %p395, %p396
      %p398 = scmp.ne.s32.totalorder %s389, %s390
      %p399 = scmp.eq.s32.totalorder %s85, 0
      %p400 = por %p398, %p399
      %p401 = scmp.ne.s32.totalorder %s389, %s390
      %p402 = scmp.eq.s32.totalorder %s86, 1
      %p403 = por %p401, %p402
      %p405 = scmp.ne.s32.totalorder %s390, %s404
      %p406 = scmp.eq.s32.totalorder %s86, 0
      %p407 = por %p405, %p406
      %s409 = sadd.s32 %s408, 1
      %p412 = scmp.eq.s32.totalorder %s80, 1
      %p413 = scmp.ne.s32.totalorder %s408, %s410
      %p414 = scmp.eq.s32.totalorder %s80, 0
      %p415 = por %p413, %p414
      %p416 = scmp.ne.s32.totalorder %s408, %s410
      %p417 = scmp.eq.s32.totalorder %s85, 1
      %p418 = por %p416, %p417
      %p419 = scmp.ne.s32.totalorder %s410, %s411
      %p420 = scmp.eq.s32.totalorder %s85, 0
      %p421 = por %p419, %p420
      %p422 = scmp.ne.s32.totalorder %s410, %s411
      %p423 = scmp.eq.s32.totalorder %s86, 1
      %p424 = por %p422, %p423
      %p426 = scmp.ne.s32.totalorder %s411, %s425
      %p427 = scmp.eq.s32.totalorder %s86, 0
      %p428 = por %p426, %p427
      %s430 = sadd.s32 %s429, 1
      %p433 = scmp.eq.s32.totalorder %s80, 1
      %p434 = scmp.ne.s32.totalorder %s429, %s431
      %p435 = scmp.eq.s32.totalorder %s80, 0
      %p436 = por %p434, %p435
      %p437 = scmp.ne.s32.totalorder %s429, %s431
      %p438 = scmp.eq.s32.totalorder %s85, 1
      %p439 = por %p437, %p438
      %p440 = scmp.ne.s32.totalorder %s431, %s432
      %p441 = scmp.eq.s32.totalorder %s85, 0
      %p442 = por %p440, %p441
      %p443 = scmp.ne.s32.totalorder %s431, %s432
      %p444 = scmp.eq.s32.totalorder %s86, 1
      %p445 = por %p443, %p444
      %p447 = scmp.ne.s32.totalorder %s432, %s446
      %p448 = scmp.eq.s32.totalorder %s86, 0
      %p449 = por %p447, %p448
      %s451 = sadd.s32 %s450, 1
      %p454 = scmp.eq.s32.totalorder %s80, 1
      %p455 = scmp.ne.s32.totalorder %s450, %s452
      %p456 = scmp.eq.s32.totalorder %s80, 0
      %p457 = por %p455, %p456
      %p458 = scmp.ne.s32.totalorder %s450, %s452
      %p459 = scmp.eq.s32.totalorder %s85, 1
      %p460 = por %p458, %p459
      %p461 = scmp.ne.s32.totalorder %s452, %s453
      %p462 = scmp.eq.s32.totalorder %s85, 0
      %p463 = por %p461, %p462
      %p464 = scmp.ne.s32.totalorder %s452, %s453
      %p465 = scmp.eq.s32.totalorder %s86, 1
      %p466 = por %p464, %p465
      %p468 = scmp.ne.s32.totalorder %s453, %s467
      %p469 = scmp.eq.s32.totalorder %s86, 0
      %p470 = por %p468, %p469
      %s472 = sadd.s32 %s471, 1
      %p475 = scmp.eq.s32.totalorder %s80, 1
      %p476 = scmp.ne.s32.totalorder %s471, %s473
      %p477 = scmp.eq.s32.totalorder %s80, 0
      %p478 = por %p476, %p477
      %p479 = scmp.ne.s32.totalorder %s471, %s473
      %p480 = scmp.eq.s32.totalorder %s85, 1
      %p481 = por %p479, %p480
      %p482 = scmp.ne.s32.totalorder %s473, %s474
      %p483 = scmp.eq.s32.totalorder %s85, 0
      %p484 = por %p482, %p483
      %p485 = scmp.ne.s32.totalorder %s473, %s474
      %p486 = scmp.eq.s32.totalorder %s86, 1
      %p487 = por %p485, %p486
      %p489 = scmp.ne.s32.totalorder %s474, %s488
      %p490 = scmp.eq.s32.totalorder %s86, 0
      %p491 = por %p489, %p490
      %s493 = sadd.s32 %s492, 1
      %p496 = scmp.eq.s32.totalorder %s80, 1
      %p497 = scmp.ne.s32.totalorder %s492, %s494
      %p498 = scmp.eq.s32.totalorder %s80, 0
      %p499 = por %p497, %p498
      %p500 = scmp.ne.s32.totalorder %s492, %s494
      %p501 = scmp.eq.s32.totalorder %s85, 1
      %p502 = por %p500, %p501
      %p503 = scmp.ne.s32.totalorder %s494, %s495
      %p504 = scmp.eq.s32.totalorder %s85, 0
      %p505 = por %p503, %p504
      %p506 = scmp.ne.s32.totalorder %s494, %s495
      %p507 = scmp.eq.s32.totalorder %s86, 1
      %p508 = por %p506, %p507
      %p510 = scmp.ne.s32.totalorder %s495, %s509
      %p511 = scmp.eq.s32.totalorder %s86, 0
      %p512 = por %p510, %p511
      %s514 = sadd.s32 %s513, 1
      %p517 = scmp.eq.s32.totalorder %s80, 1
      %p518 = scmp.ne.s32.totalorder %s513, %s515
      %p519 = scmp.eq.s32.totalorder %s80, 0
      %p520 = por %p518, %p519
      %p521 = scmp.ne.s32.totalorder %s513, %s515
      %p522 = scmp.eq.s32.totalorder %s85, 1
      %p523 = por %p521, %p522
      %p524 = scmp.ne.s32.totalorder %s515, %s516
      %p525 = scmp.eq.s32.totalorder %s85, 0
      %p526 = por %p524, %p525
      %p527 = scmp.ne.s32.totalorder %s515, %s516
      %p528 = scmp.eq.s32.totalorder %s86, 1
      %p529 = por %p527, %p528
      %p531 = scmp.ne.s32.totalorder %s516, %s530
      %p532 = scmp.eq.s32.totalorder %s86, 0
      %p533 = por %p531, %p532
      %s535 = sadd.s32 %s534, 1
      %p538 = scmp.eq.s32.totalorder %s80, 1
      %p539 = scmp.ne.s32.totalorder %s534, %s536
      %p540 = scmp.eq.s32.totalorder %s80, 0
      %p541 = por %p539, %p540
      %p542 = scmp.ne.s32.totalorder %s534, %s536
      %p543 = scmp.eq.s32.totalorder %s85, 1
      %p544 = por %p542, %p543
      %p545 = scmp.ne.s32.totalorder %s536, %s537
      %p546 = scmp.eq.s32.totalorder %s85, 0
      %p547 = por %p545, %p546
      %p548 = scmp.ne.s32.totalorder %s536, %s537
      %p549 = scmp.eq.s32.totalorder %s86, 1
      %p550 = por %p548, %p549
      %p552 = scmp.ne.s32.totalorder %s537, %s551
      %p553 = scmp.eq.s32.totalorder %s86, 0
      %p554 = por %p552, %p553
      %s556 = sadd.s32 %s555, 1
      %p559 = scmp.eq.s32.totalorder %s80, 1
      %p560 = scmp.ne.s32.totalorder %s555, %s557
      %p561 = scmp.eq.s32.totalorder %s80, 0
      %p562 = por %p560, %p561
      %p563 = scmp.ne.s32.totalorder %s555, %s557
      %p564 = scmp.eq.s32.totalorder %s85, 1
      %p565 = por %p563, %p564
      %p566 = scmp.ne.s32.totalorder %s557, %s558
      %p567 = scmp.eq.s32.totalorder %s85, 0
      %p568 = por %p566, %p567
      %p569 = scmp.ne.s32.totalorder %s557, %s558
      %p570 = scmp.eq.s32.totalorder %s86, 1
      %p571 = por %p569, %p570
      %p573 = scmp.ne.s32.totalorder %s558, %s572
      %p574 = scmp.eq.s32.totalorder %s86, 0
      %p575 = por %p573, %p574
      %s577 = sadd.s32 %s576, 1
      %p580 = scmp.eq.s32.totalorder %s80, 1
      %p581 = scmp.ne.s32.totalorder %s576, %s578
      %p582 = scmp.eq.s32.totalorder %s80, 0
      %p583 = por %p581, %p582
      %p584 = scmp.ne.s32.totalorder %s576, %s578
      %p585 = scmp.eq.s32.totalorder %s85, 1
      %p586 = por %p584, %p585
      %p587 = scmp.ne.s32.totalorder %s578, %s579
      %p588 = scmp.eq.s32.totalorder %s85, 0
      %p589 = por %p587, %p588
      %p590 = scmp.ne.s32.totalorder %s578, %s579
      %p591 = scmp.eq.s32.totalorder %s86, 1
      %p592 = por %p590, %p591
      %p594 = scmp.ne.s32.totalorder %s579, %s593
      %p595 = scmp.eq.s32.totalorder %s86, 0
      %p596 = por %p594, %p595
      %s598 = sadd.s32 %s597, 1
      %p601 = scmp.eq.s32.totalorder %s80, 1
      %p602 = scmp.ne.s32.totalorder %s597, %s599
      %p603 = scmp.eq.s32.totalorder %s80, 0
      %p604 = por %p602, %p603
      %p605 = scmp.ne.s32.totalorder %s597, %s599
      %p606 = scmp.eq.s32.totalorder %s85, 1
      %p607 = por %p605, %p606
      %p608 = scmp.ne.s32.totalorder %s599, %s600
      %p609 = scmp.eq.s32.totalorder %s85, 0
      %p610 = por %p608, %p609
      %p611 = scmp.ne.s32.totalorder %s599, %s600
      %p612 = scmp.eq.s32.totalorder %s86, 1
      %p613 = por %p611, %p612
      %p615 = scmp.ne.s32.totalorder %s600, %s614
      %p616 = scmp.eq.s32.totalorder %s86, 0
      %p617 = por %p615, %p616
      %s619 = sadd.s32 %s618, 1
      %p622 = scmp.eq.s32.totalorder %s80, 1
      %p623 = scmp.ne.s32.totalorder %s618, %s620
      %p624 = scmp.eq.s32.totalorder %s80, 0
      %p625 = por %p623, %p624
      %p626 = scmp.ne.s32.totalorder %s618, %s620
      %p627 = scmp.eq.s32.totalorder %s85, 1
      %p628 = por %p626, %p627
      %p629 = scmp.ne.s32.totalorder %s620, %s621
      %p630 = scmp.eq.s32.totalorder %s85, 0
      %p631 = por %p629, %p630
      %p632 = scmp.ne.s32.totalorder %s620, %s621
      %p633 = scmp.eq.s32.totalorder %s86, 1
      %p634 = por %p632, %p633
      %p636 = scmp.ne.s32.totalorder %s621, %s635
      %p637 = scmp.eq.s32.totalorder %s86, 0
      %p638 = por %p636, %p637
      %s640 = sadd.s32 %s639, 1
      %p643 = scmp.eq.s32.totalorder %s80, 1
      %p644 = scmp.ne.s32.totalorder %s639, %s641
      %p645 = scmp.eq.s32.totalorder %s80, 0
      %p646 = por %p644, %p645
      %p647 = scmp.ne.s32.totalorder %s639, %s641
      %p648 = scmp.eq.s32.totalorder %s85, 1
      %p649 = por %p647, %p648
      %p650 = scmp.ne.s32.totalorder %s641, %s642
      %p651 = scmp.eq.s32.totalorder %s85, 0
      %p652 = por %p650, %p651
      %p653 = scmp.ne.s32.totalorder %s641, %s642
      %p654 = scmp.eq.s32.totalorder %s86, 1
      %p655 = por %p653, %p654
      %p657 = scmp.ne.s32.totalorder %s642, %s656
      %p658 = scmp.eq.s32.totalorder %s86, 0
      %p659 = por %p657, %p658
      %s661 = sadd.s32 %s660, 1
      %p664 = scmp.eq.s32.totalorder %s80, 1
      %p665 = scmp.ne.s32.totalorder %s660, %s662
      %p666 = scmp.eq.s32.totalorder %s80, 0
      %p667 = por %p665, %p666
      %p668 = scmp.ne.s32.totalorder %s660, %s662
      %p669 = scmp.eq.s32.totalorder %s85, 1
      %p670 = por %p668, %p669
      %p671 = scmp.ne.s32.totalorder %s662, %s663
      %p672 = scmp.eq.s32.totalorder %s85, 0
      %p673 = por %p671, %p672
      %p674 = scmp.ne.s32.totalorder %s662, %s663
      %p675 = scmp.eq.s32.totalorder %s86, 1
      %p676 = por %p674, %p675
      %p678 = scmp.ne.s32.totalorder %s663, %s677
      %p679 = scmp.eq.s32.totalorder %s86, 0
      %p680 = por %p678, %p679
      %s682 = sadd.s32 %s681, 1
      %p685 = scmp.eq.s32.totalorder %s80, 1
      %p686 = scmp.ne.s32.totalorder %s681, %s683
      %p687 = scmp.eq.s32.totalorder %s80, 0
      %p688 = por %p686, %p687
      %p689 = scmp.ne.s32.totalorder %s681, %s683
      %p690 = scmp.eq.s32.totalorder %s85, 1
      %p691 = por %p689, %p690
      %p692 = scmp.ne.s32.totalorder %s683, %s684
      %p693 = scmp.eq.s32.totalorder %s85, 0
      %p694 = por %p692, %p693
      %p695 = scmp.ne.s32.totalorder %s683, %s684
      %p696 = scmp.eq.s32.totalorder %s86, 1
      %p697 = por %p695, %p696
      %p699 = scmp.ne.s32.totalorder %s684, %s698
      %p700 = scmp.eq.s32.totalorder %s86, 0
      %p701 = por %p699, %p700
      %s703 = sadd.s32 %s702, 1
      %p706 = scmp.eq.s32.totalorder %s80, 1
      %p707 = scmp.ne.s32.totalorder %s702, %s704
      %p708 = scmp.eq.s32.totalorder %s80, 0
      %p709 = por %p707, %p708
      %p710 = scmp.ne.s32.totalorder %s702, %s704
      %p711 = scmp.eq.s32.totalorder %s85, 1
      %p712 = por %p710, %p711
      %p713 = scmp.ne.s32.totalorder %s704, %s705
      %p714 = scmp.eq.s32.totalorder %s85, 0
      %p715 = por %p713, %p714
      %p716 = scmp.ne.s32.totalorder %s704, %s705
      %p717 = scmp.eq.s32.totalorder %s86, 1
      %p718 = por %p716, %p717
      %p720 = scmp.ne.s32.totalorder %s705, %s719
      %p721 = scmp.eq.s32.totalorder %s86, 0
      %p722 = por %p720, %p721
      %s724 = sadd.s32 %s723, 1
      %p727 = scmp.eq.s32.totalorder %s80, 1
      %p728 = scmp.ne.s32.totalorder %s723, %s725
      %p729 = scmp.eq.s32.totalorder %s80, 0
      %p730 = por %p728, %p729
      %p731 = scmp.ne.s32.totalorder %s723, %s725
      %p732 = scmp.eq.s32.totalorder %s85, 1
      %p733 = por %p731, %p732
      %p734 = scmp.ne.s32.totalorder %s725, %s726
      %p735 = scmp.eq.s32.totalorder %s85, 0
      %p736 = por %p734, %p735
      %p737 = scmp.ne.s32.totalorder %s725, %s726
      %p738 = scmp.eq.s32.totalorder %s86, 1
      %p739 = por %p737, %p738
      %p741 = scmp.ne.s32.totalorder %s726, %s740
      %p742 = scmp.eq.s32.totalorder %s86, 0
      %p743 = por %p741, %p742
      %s745 = sadd.s32 %s744, 1
      %p748 = scmp.eq.s32.totalorder %s80, 1
      %p749 = scmp.ne.s32.totalorder %s744, %s746
      %p750 = scmp.eq.s32.totalorder %s80, 0
      %p751 = por %p749, %p750
      %p752 = scmp.ne.s32.totalorder %s744, %s746
      %p753 = scmp.eq.s32.totalorder %s85, 1
      %p754 = por %p752, %p753
      %p755 = scmp.ne.s32.totalorder %s746, %s747
      %p756 = scmp.eq.s32.totalorder %s85, 0
      %p757 = por %p755, %p756
      %p758 = scmp.ne.s32.totalorder %s746, %s747
      %p759 = scmp.eq.s32.totalorder %s86, 1
      %p760 = por %p758, %p759
      %p762 = scmp.ne.s32.totalorder %s747, %s761
      %p763 = scmp.eq.s32.totalorder %s86, 0
      %p764 = por %p762, %p763
      %s766 = sadd.s32 %s765, 1
      %p769 = scmp.eq.s32.totalorder %s80, 1
      %p770 = scmp.ne.s32.totalorder %s765, %s767
      %p771 = scmp.eq.s32.totalorder %s80, 0
      %p772 = por %p770, %p771
      %p773 = scmp.ne.s32.totalorder %s765, %s767
      %p774 = scmp.eq.s32.totalorder %s85, 1
      %p775 = por %p773, %p774
      %p776 = scmp.ne.s32.totalorder %s767, %s768
      %p777 = scmp.eq.s32.totalorder %s85, 0
      %p778 = por %p776, %p777
      %p779 = scmp.ne.s32.totalorder %s767, %s768
      %p780 = scmp.eq.s32.totalorder %s86, 1
      %p781 = por %p779, %p780
      %p783 = scmp.ne.s32.totalorder %s768, %s782
      %p784 = scmp.eq.s32.totalorder %s86, 0
      %p785 = por %p783, %p784
      %s787 = sadd.s32 %s786, 1
      %p790 = scmp.eq.s32.totalorder %s80, 1
      %p791 = scmp.ne.s32.totalorder %s786, %s788
      %p792 = scmp.eq.s32.totalorder %s80, 0
      %p793 = por %p791, %p792
      %p794 = scmp.ne.s32.totalorder %s786, %s788
      %p795 = scmp.eq.s32.totalorder %s85, 1
      %p796 = por %p794, %p795
      %p797 = scmp.ne.s32.totalorder %s788, %s789
      %p798 = scmp.eq.s32.totalorder %s85, 0
      %p799 = por %p797, %p798
      %p800 = scmp.ne.s32.totalorder %s788, %s789
      %p801 = scmp.eq.s32.totalorder %s86, 1
      %p802 = por %p800, %p801
      %p804 = scmp.ne.s32.totalorder %s789, %s803
      %p805 = scmp.eq.s32.totalorder %s86, 0
      %p806 = por %p804, %p805
      %s808 = sadd.s32 %s807, 1
      %p811 = scmp.eq.s32.totalorder %s80, 1
      %p812 = scmp.ne.s32.totalorder %s807, %s809
      %p813 = scmp.eq.s32.totalorder %s80, 0
      %p814 = por %p812, %p813
      %p815 = scmp.ne.s32.totalorder %s807, %s809
      %p816 = scmp.eq.s32.totalorder %s85, 1
      %p817 = por %p815, %p816
      %p818 = scmp.ne.s32.totalorder %s809, %s810
      %p819 = scmp.eq.s32.totalorder %s85, 0
      %p820 = por %p818, %p819
      %p821 = scmp.ne.s32.totalorder %s809, %s810
      %p822 = scmp.eq.s32.totalorder %s86, 1
      %p823 = por %p821, %p822
      %p825 = scmp.ne.s32.totalorder %s810, %s824
      %p826 = scmp.eq.s32.totalorder %s86, 0
      %p827 = por %p825, %p826
      %s828 = ssub.s32 %s80, %s87
      %p829 = scmp.eq.s32.totalorder %s828, 0
      %s831 = sadd.s32 %s830, 1
      %s832 = scalar_select %p829, %s830, %s831
      %p835 = pneg %p829
      %p836 = scmp.eq.s32.totalorder %s80, 1
      %p837 = por %p835, %p836
      %p838 = scmp.ne.s32.totalorder %s830, %s833
      %p839 = scmp.eq.s32.totalorder %s80, 0
      %p840 = por %p838, %p839
      %p841 = scmp.ne.s32.totalorder %s830, %s833
      %p842 = scmp.eq.s32.totalorder %s85, 1
      %p843 = por %p841, %p842
      %p844 = scmp.ne.s32.totalorder %s833, %s834
      %p845 = scmp.eq.s32.totalorder %s85, 0
      %p846 = por %p844, %p845
      %p847 = scmp.ne.s32.totalorder %s833, %s834
      %p848 = scmp.eq.s32.totalorder %s86, 1
      %p849 = por %p847, %p848
      %p851 = scmp.ne.s32.totalorder %s834, %s850
      %p852 = scmp.eq.s32.totalorder %s86, 0
      %p853 = por %p851, %p852
      %p854 = scmp.le.s32.totalorder 1, %s80
      %p855 = scmp.lt.s32.totalorder %s80, 3
      %p856 = pnand %p854, %p855
      %p857 = pneg %p856
      // Predicated region
      $region9: #{vit_mag_forward.1} parent=5 // pred_check
        _
      $region10: #{vit_mag_forward.1} parent=5 // pred_check_branch
        %859 = sbr.rel (%p856) target = $region12
      $region11: #{vit_mag_forward.1} parent=5 // pred_region
        %s860 = ssub.s32 %s80, 1
        // Predicated region
        $region13: #{vit_mag_forward.1} parent=11 // pred_check
          %p861 = pneg %p127
        $region14: #{vit_mag_forward.1} parent=11 // pred_check_branch
          %863 = sbr.rel (%p861) target = $region16
        $region15: #{vit_mag_forward.1} parent=11 // pred_region
          _
        $region16: #{vit_mag_forward.1} parent=11 // pred_fallthru
          _
        // Predicated region
        $region17: #{vit_mag_forward.1} parent=11 // pred_check
          %p864 = pneg %p148
        $region18: #{vit_mag_forward.1} parent=11 // pred_check_branch
          %866 = sbr.rel (%p864) target = $region20
        $region19: #{vit_mag_forward.1} parent=11 // pred_region
          _
        $region20: #{vit_mag_forward.1} parent=11 // pred_fallthru
          _
        // Predicated region
        $region21: #{vit_mag_forward.1} parent=11 // pred_check
          %p867 = pneg %p169
        $region22: #{vit_mag_forward.1} parent=11 // pred_check_branch
          %869 = sbr.rel (%p867) target = $region24
        $region23: #{vit_mag_forward.1} parent=11 // pred_region
          _
        $region24: #{vit_mag_forward.1} parent=11 // pred_fallthru
          _
        // Predicated region
        $region25: #{vit_mag_forward.1} parent=11 // pred_check
          %p870 = pneg %p190
        $region26: #{vit_mag_forward.1} parent=11 // pred_check_branch
          %872 = sbr.rel (%p870) target = $region28
        $region27: #{vit_mag_forward.1} parent=11 // pred_region
          _
        $region28: #{vit_mag_forward.1} parent=11 // pred_fallthru
          _
        // Predicated region
        $region29: #{vit_mag_forward.1} parent=11 // pred_check
          %p873 = pneg %p211
        $region30: #{vit_mag_forward.1} parent=11 // pred_check_branch
          %875 = sbr.rel (%p873) target = $region32
        $region31: #{vit_mag_forward.1} parent=11 // pred_region
          _
        $region32: #{vit_mag_forward.1} parent=11 // pred_fallthru
          _
        // Predicated region
        $region33: #{vit_mag_forward.1} parent=11 // pred_check
          %p876 = pneg %p232
        $region34: #{vit_mag_forward.1} parent=11 // pred_check_branch
          %878 = sbr.rel (%p876) target = $region36
        $region35: #{vit_mag_forward.1} parent=11 // pred_region
          _
        $region36: #{vit_mag_forward.1} parent=11 // pred_fallthru
          _
        // Predicated region
        $region37: #{vit_mag_forward.1} parent=11 // pred_check
          %p879 = pneg %p253
        $region38: #{vit_mag_forward.1} parent=11 // pred_check_branch
          %881 = sbr.rel (%p879) target = $region40
        $region39: #{vit_mag_forward.1} parent=11 // pred_region
          _
        $region40: #{vit_mag_forward.1} parent=11 // pred_fallthru
          _
        // Predicated region
        $region41: #{vit_mag_forward.1} parent=11 // pred_check
          %p882 = pneg %p274
        $region42: #{vit_mag_forward.1} parent=11 // pred_check_branch
          %884 = sbr.rel (%p882) target = $region44
        $region43: #{vit_mag_forward.1} parent=11 // pred_region
          _
        $region44: #{vit_mag_forward.1} parent=11 // pred_fallthru
          _
        // Predicated region
        $region45: #{vit_mag_forward.1} parent=11 // pred_check
          %p885 = pneg %p295
        $region46: #{vit_mag_forward.1} parent=11 // pred_check_branch
          %887 = sbr.rel (%p885) target = $region48
        $region47: #{vit_mag_forward.1} parent=11 // pred_region
          _
        $region48: #{vit_mag_forward.1} parent=11 // pred_fallthru
          _
        // Predicated region
        $region49: #{vit_mag_forward.1} parent=11 // pred_check
          %p888 = pneg %p316
        $region50: #{vit_mag_forward.1} parent=11 // pred_check_branch
          %890 = sbr.rel (%p888) target = $region52
        $region51: #{vit_mag_forward.1} parent=11 // pred_region
          _
        $region52: #{vit_mag_forward.1} parent=11 // pred_fallthru
          _
        // Predicated region
        $region53: #{vit_mag_forward.1} parent=11 // pred_check
          %p891 = pneg %p337
        $region54: #{vit_mag_forward.1} parent=11 // pred_check_branch
          %893 = sbr.rel (%p891) target = $region56
        $region55: #{vit_mag_forward.1} parent=11 // pred_region
          _
        $region56: #{vit_mag_forward.1} parent=11 // pred_fallthru
          _
        // Predicated region
        $region57: #{vit_mag_forward.1} parent=11 // pred_check
          %p894 = pneg %p358
        $region58: #{vit_mag_forward.1} parent=11 // pred_check_branch
          %896 = sbr.rel (%p894) target = $region60
        $region59: #{vit_mag_forward.1} parent=11 // pred_region
          _
        $region60: #{vit_mag_forward.1} parent=11 // pred_fallthru
          _
        // Predicated region
        $region61: #{vit_mag_forward.1} parent=11 // pred_check
          %p897 = pneg %p379
        $region62: #{vit_mag_forward.1} parent=11 // pred_check_branch
          %899 = sbr.rel (%p897) target = $region64
        $region63: #{vit_mag_forward.1} parent=11 // pred_region
          _
        $region64: #{vit_mag_forward.1} parent=11 // pred_fallthru
          _
        // Predicated region
        $region65: #{vit_mag_forward.1} parent=11 // pred_check
          %p900 = pneg %p400
        $region66: #{vit_mag_forward.1} parent=11 // pred_check_branch
          %902 = sbr.rel (%p900) target = $region68
        $region67: #{vit_mag_forward.1} parent=11 // pred_region
          _
        $region68: #{vit_mag_forward.1} parent=11 // pred_fallthru
          _
        // Predicated region
        $region69: #{vit_mag_forward.1} parent=11 // pred_check
          %p903 = pneg %p421
        $region70: #{vit_mag_forward.1} parent=11 // pred_check_branch
          %905 = sbr.rel (%p903) target = $region72
        $region71: #{vit_mag_forward.1} parent=11 // pred_region
          _
        $region72: #{vit_mag_forward.1} parent=11 // pred_fallthru
          _
        // Predicated region
        $region73: #{vit_mag_forward.1} parent=11 // pred_check
          %p906 = pneg %p442
        $region74: #{vit_mag_forward.1} parent=11 // pred_check_branch
          %908 = sbr.rel (%p906) target = $region76
        $region75: #{vit_mag_forward.1} parent=11 // pred_region
          _
        $region76: #{vit_mag_forward.1} parent=11 // pred_fallthru
          _
        // Predicated region
        $region77: #{vit_mag_forward.1} parent=11 // pred_check
          %p909 = pneg %p463
        $region78: #{vit_mag_forward.1} parent=11 // pred_check_branch
          %911 = sbr.rel (%p909) target = $region80
        $region79: #{vit_mag_forward.1} parent=11 // pred_region
          _
        $region80: #{vit_mag_forward.1} parent=11 // pred_fallthru
          _
        // Predicated region
        $region81: #{vit_mag_forward.1} parent=11 // pred_check
          %p912 = pneg %p484
        $region82: #{vit_mag_forward.1} parent=11 // pred_check_branch
          %914 = sbr.rel (%p912) target = $region84
        $region83: #{vit_mag_forward.1} parent=11 // pred_region
          _
        $region84: #{vit_mag_forward.1} parent=11 // pred_fallthru
          _
        // Predicated region
        $region85: #{vit_mag_forward.1} parent=11 // pred_check
          %p915 = pneg %p505
        $region86: #{vit_mag_forward.1} parent=11 // pred_check_branch
          %917 = sbr.rel (%p915) target = $region88
        $region87: #{vit_mag_forward.1} parent=11 // pred_region
          _
        $region88: #{vit_mag_forward.1} parent=11 // pred_fallthru
          _
        // Predicated region
        $region89: #{vit_mag_forward.1} parent=11 // pred_check
          %p918 = pneg %p526
        $region90: #{vit_mag_forward.1} parent=11 // pred_check_branch
          %920 = sbr.rel (%p918) target = $region92
        $region91: #{vit_mag_forward.1} parent=11 // pred_region
          _
        $region92: #{vit_mag_forward.1} parent=11 // pred_fallthru
          _
        // Predicated region
        $region93: #{vit_mag_forward.1} parent=11 // pred_check
          %p921 = pneg %p547
        $region94: #{vit_mag_forward.1} parent=11 // pred_check_branch
          %923 = sbr.rel (%p921) target = $region96
        $region95: #{vit_mag_forward.1} parent=11 // pred_region
          _
        $region96: #{vit_mag_forward.1} parent=11 // pred_fallthru
          _
        // Predicated region
        $region97: #{vit_mag_forward.1} parent=11 // pred_check
          %p924 = pneg %p568
        $region98: #{vit_mag_forward.1} parent=11 // pred_check_branch
          %926 = sbr.rel (%p924) target = $region100
        $region99: #{vit_mag_forward.1} parent=11 // pred_region
          _
        $region100: #{vit_mag_forward.1} parent=11 // pred_fallthru
          _
        // Predicated region
        $region101: #{vit_mag_forward.1} parent=11 // pred_check
          %p927 = pneg %p589
        $region102: #{vit_mag_forward.1} parent=11 // pred_check_branch
          %929 = sbr.rel (%p927) target = $region104
        $region103: #{vit_mag_forward.1} parent=11 // pred_region
          _
        $region104: #{vit_mag_forward.1} parent=11 // pred_fallthru
          _
        // Predicated region
        $region105: #{vit_mag_forward.1} parent=11 // pred_check
          %p930 = pneg %p610
        $region106: #{vit_mag_forward.1} parent=11 // pred_check_branch
          %932 = sbr.rel (%p930) target = $region108
        $region107: #{vit_mag_forward.1} parent=11 // pred_region
          _
        $region108: #{vit_mag_forward.1} parent=11 // pred_fallthru
          _
        // Predicated region
        $region109: #{vit_mag_forward.1} parent=11 // pred_check
          %p933 = pneg %p631
        $region110: #{vit_mag_forward.1} parent=11 // pred_check_branch
          %935 = sbr.rel (%p933) target = $region112
        $region111: #{vit_mag_forward.1} parent=11 // pred_region
          _
        $region112: #{vit_mag_forward.1} parent=11 // pred_fallthru
          _
        // Predicated region
        $region113: #{vit_mag_forward.1} parent=11 // pred_check
          %p936 = pneg %p652
        $region114: #{vit_mag_forward.1} parent=11 // pred_check_branch
          %938 = sbr.rel (%p936) target = $region116
        $region115: #{vit_mag_forward.1} parent=11 // pred_region
          _
        $region116: #{vit_mag_forward.1} parent=11 // pred_fallthru
          _
        // Predicated region
        $region117: #{vit_mag_forward.1} parent=11 // pred_check
          %p939 = pneg %p673
        $region118: #{vit_mag_forward.1} parent=11 // pred_check_branch
          %941 = sbr.rel (%p939) target = $region120
        $region119: #{vit_mag_forward.1} parent=11 // pred_region
          _
        $region120: #{vit_mag_forward.1} parent=11 // pred_fallthru
          _
        // Predicated region
        $region121: #{vit_mag_forward.1} parent=11 // pred_check
          %p942 = pneg %p694
        $region122: #{vit_mag_forward.1} parent=11 // pred_check_branch
          %944 = sbr.rel (%p942) target = $region124
        $region123: #{vit_mag_forward.1} parent=11 // pred_region
          _
        $region124: #{vit_mag_forward.1} parent=11 // pred_fallthru
          _
        // Predicated region
        $region125: #{vit_mag_forward.1} parent=11 // pred_check
          %p945 = pneg %p715
        $region126: #{vit_mag_forward.1} parent=11 // pred_check_branch
          %947 = sbr.rel (%p945) target = $region128
        $region127: #{vit_mag_forward.1} parent=11 // pred_region
          _
        $region128: #{vit_mag_forward.1} parent=11 // pred_fallthru
          _
        // Predicated region
        $region129: #{vit_mag_forward.1} parent=11 // pred_check
          %p948 = pneg %p736
        $region130: #{vit_mag_forward.1} parent=11 // pred_check_branch
          %950 = sbr.rel (%p948) target = $region132
        $region131: #{vit_mag_forward.1} parent=11 // pred_region
          _
        $region132: #{vit_mag_forward.1} parent=11 // pred_fallthru
          _
        // Predicated region
        $region133: #{vit_mag_forward.1} parent=11 // pred_check
          %p951 = pneg %p757
        $region134: #{vit_mag_forward.1} parent=11 // pred_check_branch
          %953 = sbr.rel (%p951) target = $region136
        $region135: #{vit_mag_forward.1} parent=11 // pred_region
          _
        $region136: #{vit_mag_forward.1} parent=11 // pred_fallthru
          _
        // Predicated region
        $region137: #{vit_mag_forward.1} parent=11 // pred_check
          %p954 = pneg %p778
        $region138: #{vit_mag_forward.1} parent=11 // pred_check_branch
          %956 = sbr.rel (%p954) target = $region140
        $region139: #{vit_mag_forward.1} parent=11 // pred_region
          _
        $region140: #{vit_mag_forward.1} parent=11 // pred_fallthru
          _
        // Predicated region
        $region141: #{vit_mag_forward.1} parent=11 // pred_check
          %p957 = pneg %p799
        $region142: #{vit_mag_forward.1} parent=11 // pred_check_branch
          %959 = sbr.rel (%p957) target = $region144
        $region143: #{vit_mag_forward.1} parent=11 // pred_region
          _
        $region144: #{vit_mag_forward.1} parent=11 // pred_fallthru
          _
        // Predicated region
        $region145: #{vit_mag_forward.1} parent=11 // pred_check
          %p960 = pneg %p820
        $region146: #{vit_mag_forward.1} parent=11 // pred_check_branch
          %962 = sbr.rel (%p960) target = $region148
        $region147: #{vit_mag_forward.1} parent=11 // pred_region
          _
        $region148: #{vit_mag_forward.1} parent=11 // pred_fallthru
          _
      $region12: #{vit_mag_forward.1} parent=5 // pred_fallthru
        _
      %p963 = scmp.lt.s32.totalorder %s80, 2
      // Predicated region
      $region149: #{vit_mag_forward.1} parent=5 // pred_check
        %p964 = pneg %p963
      $region150: #{vit_mag_forward.1} parent=5 // pred_check_branch
        %966 = sbr.rel (%p964) target = $region152
      $region151: #{vit_mag_forward.1} parent=5 // pred_region
        // Predicated region
        $region153: #{vit_mag_forward.1} parent=151 // pred_check
          %p967 = pneg %p100
        $region154: #{vit_mag_forward.1} parent=151 // pred_check_branch
          %969 = sbr.rel (%p967) target = $region156
        $region155: #{vit_mag_forward.1} parent=151 // pred_region
          %p970 = scmp.lt.s32.totalorder %s80, 1
          %s971 = scalar_select %p970, %s80, 1
          %s972 = smul.addr %s971, 2
          %s973 = smul.addr %s972, 8
          %s974 = scalar_lea.vmem %s1, %s973
        $region156: #{vit_mag_forward.1} parent=151 // pred_fallthru
          _
      $region152: #{vit_mag_forward.1} parent=5 // pred_fallthru
        _
      %p975 = scmp.le.s32.totalorder 1, %s80
      %p976 = scmp.lt.s32.totalorder %s80, 3
      %p977 = pnand %p975, %p976
      %p978 = pneg %p977
      // Predicated region
      $region157: #{vit_mag_forward.1} parent=5 // pred_check
        _
      $region158: #{vit_mag_forward.1} parent=5 // pred_check_branch
        %980 = sbr.rel (%p977) target = $region160
      $region159: #{vit_mag_forward.1} parent=5 // pred_region
        %s981 = ssub.s32 %s80, 1
        %p982 = scmp.lt.s32.totalorder %s85, 1
        %s983 = scalar_select %p982, %s85, 1
        %s984 = smul.addr %s983, 2
        %s985 = smul.addr %s984, 8
        %s986 = scalar_lea.vmem %s1, %s985
        %p987 = pneg %p106
        %p988 = pneg %p103
        %p989 = pneg %p127
        %p990 = pneg %p124
        %p991 = pneg %p148
        %p992 = pneg %p145
        %p993 = pneg %p169
        %p994 = pneg %p166
        %p995 = pneg %p190
        %p996 = pneg %p187
        %p997 = pneg %p211
        %p998 = pneg %p208
        %p999 = pneg %p232
        %p1000 = pneg %p229
        %p1001 = pneg %p253
        %p1002 = pneg %p250
        %p1003 = pneg %p274
        %p1004 = pneg %p271
        %p1005 = pneg %p295
        %p1006 = pneg %p292
        %p1007 = pneg %p316
        %p1008 = pneg %p313
        %p1009 = pneg %p337
        %p1010 = pneg %p334
        %p1011 = pneg %p358
        %p1012 = pneg %p355
        %p1013 = pneg %p379
        %p1014 = pneg %p376
        %p1015 = pneg %p400
        %p1016 = pneg %p397
        %p1017 = pneg %p421
        %p1018 = pneg %p418
        %p1019 = pneg %p442
        %p1020 = pneg %p439
        %p1021 = pneg %p463
        %p1022 = pneg %p460
        %p1023 = pneg %p484
        %p1024 = pneg %p481
        %p1025 = pneg %p505
        %p1026 = pneg %p502
        %p1027 = pneg %p526
        %p1028 = pneg %p523
        %p1029 = pneg %p547
        %p1030 = pneg %p544
        %p1031 = pneg %p568
        %p1032 = pneg %p565
        %p1033 = pneg %p589
        %p1034 = pneg %p586
        %p1035 = pneg %p610
        %p1036 = pneg %p607
        %p1037 = pneg %p631
        %p1038 = pneg %p628
        %p1039 = pneg %p652
        %p1040 = pneg %p649
        %p1041 = pneg %p673
        %p1042 = pneg %p670
        %p1043 = pneg %p694
        %p1044 = pneg %p691
        %p1045 = pneg %p715
        %p1046 = pneg %p712
        %p1047 = pneg %p736
        %p1048 = pneg %p733
        %p1049 = pneg %p757
        %p1050 = pneg %p754
        %p1051 = pneg %p778
        %p1052 = pneg %p775
        %p1053 = pneg %p799
        %p1054 = pneg %p796
        %p1055 = pneg %p820
        %p1056 = pneg %p817
        %p1057 = pneg %p846
        %p1058 = pneg %p843
        %s1059 = sand.u32 %s833, 1
        %s1060 = scalar_lea.sflag [#allocation3], %s1059
        %s1061 = sand.u32 %s833, 1
        %s1062 = scalar_lea.vmem [#allocation2], %s1061
        %p1063 = scmp.lt.s32.totalorder %s85, 1
        %s1064 = scalar_select %p1063, %s85, 1
        %s1065 = smul.addr %s1064, 2
        %s1066 = smul.addr %s1065, 8
        %s1067 = scalar_lea.vmem %s1, %s1066
        %v1068 = vld [vmem:[%s1067] sm:$0xff]
        %v1069 = vld [vmem:[%s1067 + $0x8] sm:$0xff]
        %v1070 = vld [vmem:[%s3] sm:$0xff]
        %v1071 = vld [vmem:[%s3 + $0x8] sm:$0xff]
        %v1072 = vld [vmem:[%s3 + $0x10] sm:$0xff]
        %v1073 = vld [vmem:[%s3 + $0x18] sm:$0xff]
        %v1074 = vld [vmem:[%s3 + $0x20] sm:$0xff]
        %v1075 = vld [vmem:[%s3 + $0x28] sm:$0xff]
        %v1076 = vld [vmem:[%s3 + $0x30] sm:$0xff]
        %v1077 = vld [vmem:[%s3 + $0x38] sm:$0xff]
        %v1078 = vld [vmem:[%s5] sm:$0x1]
        %v1080 = vlaneseq
        %v1081 = vshrl.u32 %v1080, 7
        %v1082 = vsub.s32 0, %v1081
        %v1083 = vrot.slane %v1078, %v1082
        %vm1085 = vcmask 523264
        %v1087 = vsel %vm1085, %v1068, 0
        %v1090 = vsel %vm1085, %v1069, 0
        %1092 = vmatprep.subr.mxu0 0.0
        %1093 = vmatpush1.msra.mxu0 %v1070
        %1094 = vmatprep.subr.mxu0 0.0
        %1095 = vmatpush1.msra.mxu0 %v1071
        %1096 = vmatprep.subr.mxu0 0.0
        %1097 = vmatpush1.msra.mxu0 %v1072
        %1098 = vmatprep.subr.mxu0 0.0
        %1099 = vmatpush1.msra.mxu0 %v1073
        %1100 = vmatprep.subr.mxu0 0.0
        %1101 = vmatpush1.msra.mxu0 %v1074
        %1102 = vmatprep.subr.mxu0 0.0
        %1103 = vmatpush1.msra.mxu0 %v1075
        %1104 = vmatprep.subr.mxu0 0.0
        %1105 = vmatpush1.msra.mxu0 %v1076
        %1106 = vmatprep.subr.mxu0 0.0
        %1107 = vmatpush1.msra.mxu0 %v1077
        %1108 = vmatprep.subr.mxu0 0.0
        %1109 = vmatpush1.msra.mxu0 0.0
        %1110 = vmatprep.subr.mxu0 0.0
        %1111 = vmatpush1.msra.mxu0 0.0
        %1112 = vmatprep.subr.mxu0 0.0
        %1113 = vmatpush1.msra.mxu0 0.0
        %1114 = vmatprep.subr.mxu0 0.0
        %1115 = vmatpush1.msra.mxu0 0.0
        %1116 = vmatprep.subr.mxu0 0.0
        %1117 = vmatpush1.msra.mxu0 0.0
        %1118 = vmatprep.subr.mxu0 0.0
        %1119 = vmatpush1.msra.mxu0 0.0
        %1120 = vmatprep.subr.mxu0 0.0
        %1121 = vmatpush1.msra.mxu0 0.0
        %1122 = vmatprep.subr.mxu0 0.0
        %1123 = vmatpush1.msra.mxu0 0.0
        %1124 = vmatprep.subr.mxu0 0.0
        %1125 = vmatpush1.msra.mxu0 0.0
        %1126 = vmatprep.subr.mxu0 0.0
        %1127 = vmatpush1.msra.mxu0 0.0
        %1128 = vmatprep.subr.mxu0 0.0
        %1129 = vmatpush1.msra.mxu0 0.0
        %1130 = vmatprep.subr.mxu0 0.0
        %1131 = vmatpush1.msra.mxu0 0.0
        %1132 = vmatprep.subr.mxu0 0.0
        %1133 = vmatpush1.msra.mxu0 0.0
        %1134 = vmatprep.subr.mxu0 0.0
        %1135 = vmatpush1.msra.mxu0 0.0
        %1136 = vmatprep.subr.mxu0 0.0
        %1137 = vmatpush1.msra.mxu0 0.0
        %1138 = vmatprep.subr.mxu0 0.0
        %1139 = vmatpush1.msra.mxu0 0.0
        %1140 = vmatprep.subr.mxu0 0.0
        %1141 = vmatpush1.msra.mxu0 0.0
        %1142 = vmatprep.subr.mxu0 0.0
        %1143 = vmatpush1.msra.mxu0 0.0
        %1144 = vmatprep.subr.mxu0 0.0
        %1145 = vmatpush1.msra.mxu0 0.0
        %1146 = vmatprep.subr.mxu0 0.0
        %1147 = vmatpush1.msra.mxu0 0.0
        %1148 = vmatprep.subr.mxu0 0.0
        %1149 = vmatpush1.msra.mxu0 0.0
        %1150 = vmatprep.subr.mxu0 0.0
        %1151 = vmatpush1.msra.mxu0 0.0
        %1152 = vmatprep.subr.mxu0 0.0
        %1153 = vmatpush1.msra.mxu0 0.0
        %1154 = vmatprep.subr.mxu0 0.0
        %1155 = vmatpush1.msra.mxu0 0.0
        %1156 = vmatprep.mubr.f32.mxu0 0.0
        %1157 = vmatmul.mubr.f32.gmra.mrb[0].mxu0 %v1087
        %v1158 = vpop.f32.mrb[0].mxu0
        %v1159 = vadd.f32 %v1083, %v1158
        %v1160 = vpop.f32.mrb[0].mxu0
        %1161 = vmatprep.mubr.f32.mxu0 0.0
        %1162 = vmatmul.mubr.f32.gmra.mrb[0].mxu0 %v1090
        %v1163 = vpop.f32.mrb[0].mxu0
        %v1164 = vadd.f32 %v1083, %v1163
        %v1165 = vpop.f32.mrb[0].mxu0
        %1166 = vdwg.mxu0
        %vm1167 = vcmask 261120
        %v1168 = vsel %vm1167, %v1159, 0.0
        %v1169 = vsel %vm1167, %v1164, 0.0
        %v1170 = vadd.f32 %v1168, %v1169
        %v1171 = vrot.slane %v1170, 4
        %v1172 = vadd.f32 %v1170, %v1171
        %v1173 = vrot.slane %v1172, 2
        %v1174 = vadd.f32 %v1172, %v1173
        %v1175 = vrot.slane %v1174, 1
        %v1176 = vadd.f32 %v1174, %v1175
        %v1177 = vrcp.pop 16.0
        %v1178 = vmul.f32 %v1176, %v1177
        %v1179 = vld [vmem:[%s43] sm:$0xff]
        %v1180 = vld [vmem:[%s43 + $0x8] sm:$0xff]
        %v1181 = vld [vmem:[%s43 + $0x10] sm:$0xff]
        %v1182 = vld [vmem:[%s43 + $0x18] sm:$0xff]
        %v1183 = vld [vmem:[%s45] sm:$0x1]
        %v1185 = vsel %vm1167, %v1178, 0
        %1187 = vmatprep.subr.mxu0 0.0
        %1188 = vmatpush1.msra.mxu0 %v1179
        %1189 = vmatprep.subr.mxu0 0.0
        %1190 = vmatpush1.msra.mxu0 %v1180
        %1191 = vmatprep.subr.mxu0 0.0
        %1192 = vmatpush1.msra.mxu0 %v1181
        %1193 = vmatprep.subr.mxu0 0.0
        %1194 = vmatpush1.msra.mxu0 %v1182
        %1195 = vmatprep.subr.mxu0 0.0
        %1196 = vmatpush1.msra.mxu0 0.0
        %1197 = vmatprep.subr.mxu0 0.0
        %1198 = vmatpush1.msra.mxu0 0.0
        %1199 = vmatprep.subr.mxu0 0.0
        %1200 = vmatpush1.msra.mxu0 0.0
        %1201 = vmatprep.subr.mxu0 0.0
        %1202 = vmatpush1.msra.mxu0 0.0
        %1203 = vmatprep.subr.mxu0 0.0
        %1204 = vmatpush1.msra.mxu0 0.0
        %1205 = vmatprep.subr.mxu0 0.0
        %1206 = vmatpush1.msra.mxu0 0.0
        %1207 = vmatprep.subr.mxu0 0.0
        %1208 = vmatpush1.msra.mxu0 0.0
        %1209 = vmatprep.subr.mxu0 0.0
        %1210 = vmatpush1.msra.mxu0 0.0
        %1211 = vmatprep.subr.mxu0 0.0
        %1212 = vmatpush1.msra.mxu0 0.0
        %1213 = vmatprep.subr.mxu0 0.0
        %1214 = vmatpush1.msra.mxu0 0.0
        %1215 = vmatprep.subr.mxu0 0.0
        %1216 = vmatpush1.msra.mxu0 0.0
        %1217 = vmatprep.subr.mxu0 0.0
        %1218 = vmatpush1.msra.mxu0 0.0
        %1219 = vmatprep.subr.mxu0 0.0
        %1220 = vmatpush1.msra.mxu0 0.0
        %1221 = vmatprep.subr.mxu0 0.0
        %1222 = vmatpush1.msra.mxu0 0.0
        %1223 = vmatprep.subr.mxu0 0.0
        %1224 = vmatpush1.msra.mxu0 0.0
        %1225 = vmatprep.subr.mxu0 0.0
        %1226 = vmatpush1.msra.mxu0 0.0
        %1227 = vmatprep.subr.mxu0 0.0
        %1228 = vmatpush1.msra.mxu0 0.0
        %1229 = vmatprep.subr.mxu0 0.0
        %1230 = vmatpush1.msra.mxu0 0.0
        %1231 = vmatprep.subr.mxu0 0.0
        %1232 = vmatpush1.msra.mxu0 0.0
        %1233 = vmatprep.subr.mxu0 0.0
        %1234 = vmatpush1.msra.mxu0 0.0
        %1235 = vmatprep.subr.mxu0 0.0
        %1236 = vmatpush1.msra.mxu0 0.0
        %1237 = vmatprep.subr.mxu0 0.0
        %1238 = vmatpush1.msra.mxu0 0.0
        %1239 = vmatprep.subr.mxu0 0.0
        %1240 = vmatpush1.msra.mxu0 0.0
        %1241 = vmatprep.subr.mxu0 0.0
        %1242 = vmatpush1.msra.mxu0 0.0
        %1243 = vmatprep.subr.mxu0 0.0
        %1244 = vmatpush1.msra.mxu0 0.0
        %1245 = vmatprep.subr.mxu0 0.0
        %1246 = vmatpush1.msra.mxu0 0.0
        %1247 = vmatprep.subr.mxu0 0.0
        %1248 = vmatpush1.msra.mxu0 0.0
        %1249 = vmatprep.subr.mxu0 0.0
        %1250 = vmatpush1.msra.mxu0 0.0
        %1251 = vmatprep.mubr.f32.mxu0 0.0
        %1252 = vmatmul.mubr.f32.gmra.mrb[0].mxu0 %v1185
        %v1253 = vpop.f32.mrb[0].mxu0
        %v1254 = vadd.f32 %v1183, %v1253
        %v1255 = vpop.f32.mrb[0].mxu0
        %1256 = vdwg.mxu0
        %v1257 = vmul.f32 %v1254, 0.5
        %v1258 = vmul.f32 %v1254, 0.044715
        %v1259 = vmul.f32 %v1258, %v1254
        %v1260 = vmul.f32 %v1259, %v1254
        %v1261 = vadd.f32 %v1254, %v1260
        %v1262 = vmul.f32 %v1261, 0.7978846
        %v1263 = vtanh.pop %v1262
        %v1264 = vadd.f32 %v1263, 1.0
        %v1265 = vmul.f32 %v1257, %v1264
        %v1266 = vld [vmem:[%s47] sm:$0xff]
        %v1267 = vld [vmem:[%s47 + $0x8] sm:$0xff]
        %v1268 = vld [vmem:[%s47 + $0x10] sm:$0xff]
        %v1269 = vld [vmem:[%s47 + $0x18] sm:$0xff]
        %v1270 = vld [vmem:[%s47 + $0x20] sm:$0xff]
        %v1271 = vld [vmem:[%s47 + $0x28] sm:$0xff]
        %v1272 = vld [vmem:[%s47 + $0x30] sm:$0xff]
        %v1273 = vld [vmem:[%s47 + $0x38] sm:$0xff]
        %v1274 = vld [vmem:[%s49] sm:$0x1]
        %v1276 = vsel %vm1085, %v1265, 0
        %1278 = vmatprep.subr.mxu0 0.0
        %1279 = vmatpush1.msra.mxu0 %v1266
        %1280 = vmatprep.subr.mxu0 0.0
        %1281 = vmatpush1.msra.mxu0 %v1267
        %1282 = vmatprep.subr.mxu0 0.0
        %1283 = vmatpush1.msra.mxu0 %v1268
        %1284 = vmatprep.subr.mxu0 0.0
        %1285 = vmatpush1.msra.mxu0 %v1269
        %1286 = vmatprep.subr.mxu0 0.0
        %1287 = vmatpush1.msra.mxu0 %v1270
        %1288 = vmatprep.subr.mxu0 0.0
        %1289 = vmatpush1.msra.mxu0 %v1271
        %1290 = vmatprep.subr.mxu0 0.0
        %1291 = vmatpush1.msra.mxu0 %v1272
        %1292 = vmatprep.subr.mxu0 0.0
        %1293 = vmatpush1.msra.mxu0 %v1273
        %1294 = vmatprep.subr.mxu0 0.0
        %1295 = vmatpush1.msra.mxu0 0.0
        %1296 = vmatprep.subr.mxu0 0.0
        %1297 = vmatpush1.msra.mxu0 0.0
        %1298 = vmatprep.subr.mxu0 0.0
        %1299 = vmatpush1.msra.mxu0 0.0
        %1300 = vmatprep.subr.mxu0 0.0
        %1301 = vmatpush1.msra.mxu0 0.0
        %1302 = vmatprep.subr.mxu0 0.0
        %1303 = vmatpush1.msra.mxu0 0.0
        %1304 = vmatprep.subr.mxu0 0.0
        %1305 = vmatpush1.msra.mxu0 0.0
        %1306 = vmatprep.subr.mxu0 0.0
        %1307 = vmatpush1.msra.mxu0 0.0
        %1308 = vmatprep.subr.mxu0 0.0
        %1309 = vmatpush1.msra.mxu0 0.0
        %1310 = vmatprep.subr.mxu0 0.0
        %1311 = vmatpush1.msra.mxu0 0.0
        %1312 = vmatprep.subr.mxu0 0.0
        %1313 = vmatpush1.msra.mxu0 0.0
        %1314 = vmatprep.subr.mxu0 0.0
        %1315 = vmatpush1.msra.mxu0 0.0
        %1316 = vmatprep.subr.mxu0 0.0
        %1317 = vmatpush1.msra.mxu0 0.0
        %1318 = vmatprep.subr.mxu0 0.0
        %1319 = vmatpush1.msra.mxu0 0.0
        %1320 = vmatprep.subr.mxu0 0.0
        %1321 = vmatpush1.msra.mxu0 0.0
        %1322 = vmatprep.subr.mxu0 0.0
        %1323 = vmatpush1.msra.mxu0 0.0
        %1324 = vmatprep.subr.mxu0 0.0
        %1325 = vmatpush1.msra.mxu0 0.0
        %1326 = vmatprep.subr.mxu0 0.0
        %1327 = vmatpush1.msra.mxu0 0.0
        %1328 = vmatprep.subr.mxu0 0.0
        %1329 = vmatpush1.msra.mxu0 0.0
        %1330 = vmatprep.subr.mxu0 0.0
        %1331 = vmatpush1.msra.mxu0 0.0
        %1332 = vmatprep.subr.mxu0 0.0
        %1333 = vmatpush1.msra.mxu0 0.0
        %1334 = vmatprep.subr.mxu0 0.0
        %1335 = vmatpush1.msra.mxu0 0.0
        %1336 = vmatprep.subr.mxu0 0.0
        %1337 = vmatpush1.msra.mxu0 0.0
        %1338 = vmatprep.subr.mxu0 0.0
        %1339 = vmatpush1.msra.mxu0 0.0
        %1340 = vmatprep.subr.mxu0 0.0
        %1341 = vmatpush1.msra.mxu0 0.0
        %1342 = vmatprep.mubr.f32.mxu0 0.0
        %1343 = vmatmul.mubr.f32.gmra.mrb[0].mxu0 %v1276
        %v1344 = vpop.f32.mrb[0].mxu0
        %v1345 = vadd.f32 %v1274, %v1344
        %v1346 = vpop.f32.mrb[0].mxu0
        %1347 = vdwg.mxu0
        %v1348 = vld [vmem:[%s7] sm:$0x1f]
        %v1349 = vld [vmem:[%s9] sm:$0xff]
        %v1350 = vld [vmem:[%s9 + $0x8] sm:$0xff]
        %v1351 = vadd.f32 %v1159, %v1349
        %v1352 = vadd.f32 %v1164, %v1350
        %vm1355 = vcmask 1044480
        %v1356 = vrot.slane %v1351, 3
        %v1357 = vrot.slane %v1352, 3
        %v1358 = vsel %vm1355, %v1356, %v1357
        %v1362 = vsel %vm1355, %v1348, %v1356
        %v1363 = vld [vmem:[%s11] sm:$0x1]
        %v1364 = vld [vmem:[%s13] sm:$0x1]
        %v1365 = vsel %vm1167, %v1362, 0.0
        %1366 = vadd.xlane.f32.xlu0 %v1365
        %v1367 = vpop.xlane.xlu0 %1366
        %v1368 = vsel %vm1167, %v1358, 0.0
        %1369 = vadd.xlane.f32.xlu0 %v1368
        %v1370 = vpop.xlane.xlu0 %1369
        %vm1371 = vcmask 258048
        %v1372 = vsel %vm1371, %v1357, 0.0
        %1373 = vadd.xlane.f32.xlu0 %v1372
        %v1374 = vpop.xlane.xlu0 %1373
        %v1375 = vrcp.pop 32.0
        %v1376 = vmul.f32 %v1367, %v1375
        %v1377 = vmul.f32 %v1370, %v1375
        %v1378 = vmul.f32 %v1374, %v1375
        %v1379 = vsub.f32 %v1362, %v1376
        %v1380 = vsub.f32 %v1358, %v1377
        %v1381 = vsub.f32 %v1357, %v1378
        %v1382 = vmul.f32 %v1379, %v1379
        %v1383 = vmul.f32 %v1380, %v1380
        %v1384 = vmul.f32 %v1381, %v1381
        %v1385 = vsel %vm1167, %v1382, 0.0
        %1386 = vadd.xlane.f32.xlu0 %v1385
        %v1387 = vpop.xlane.xlu0 %1386
        %v1388 = vsel %vm1167, %v1383, 0.0
        %1389 = vadd.xlane.f32.xlu0 %v1388
        %v1390 = vpop.xlane.xlu0 %1389
        %v1391 = vsel %vm1371, %v1384, 0.0
        %1392 = vadd.xlane.f32.xlu0 %v1391
        %v1393 = vpop.xlane.xlu0 %1392
        %v1394 = vmul.f32 %v1387, %v1375
        %v1395 = vmul.f32 %v1390, %v1375
        %v1396 = vmul.f32 %v1393, %v1375
        %v1397 = vadd.f32 %v1394, 1e-05
        %v1398 = vadd.f32 %v1395, 1e-05
        %v1399 = vadd.f32 %v1396, 1e-05
        %v1400 = vrsqrt.pop %v1397
        %v1401 = vrsqrt.pop %v1398
        %v1402 = vrsqrt.pop %v1399
        %v1403 = vmul.f32 %v1379, %v1400
        %v1404 = vmul.f32 %v1380, %v1401
        %v1405 = vmul.f32 %v1381, %v1402
        %v1407 = vlaneseq
        %v1408 = vshrl.u32 %v1407, 7
        %v1409 = vsub.s32 0, %v1408
        %v1410 = vrot.slane %v1363, %v1409
        %v1412 = vmul.f32 %v1403, %v1410
        %v1413 = vmul.f32 %v1404, %v1410
        %v1414 = vmul.f32 %v1405, %v1410
        %v1416 = vlaneseq
        %v1417 = vshrl.u32 %v1416, 7
        %v1418 = vsub.s32 0, %v1417
        %v1419 = vrot.slane %v1364, %v1418
        %v1421 = vadd.f32 %v1412, %v1419
        %v1422 = vadd.f32 %v1413, %v1419
        %v1423 = vadd.f32 %v1414, %v1419
        %v1424 = vld [vmem:[%s15] sm:$0xff]
        %v1425 = vld [vmem:[%s15 + $0x8] sm:$0xff]
        %v1426 = vld [vmem:[%s15 + $0x10] sm:$0xff]
        %v1427 = vld [vmem:[%s15 + $0x18] sm:$0xff]
        %v1428 = vld [vmem:[%s21] sm:$0x1]
        %v1430 = vlaneseq
        %v1431 = vshrl.u32 %v1430, 7
        %v1432 = vsub.s32 0, %v1431
        %v1433 = vrot.slane %v1428, %v1432
        %v1436 = vsel %vm1167, %v1421, 0
        %v1439 = vsel %vm1167, %v1422, 0
        %v1442 = vsel %vm1167, %v1423, 0
        %1444 = vmatprep.subr.mxu0 0.0
        %1445 = vmatpush1.msra.mxu0 %v1424
        %1446 = vmatprep.subr.mxu0 0.0
        %1447 = vmatpush1.msra.mxu0 %v1425
        %1448 = vmatprep.subr.mxu0 0.0
        %1449 = vmatpush1.msra.mxu0 %v1426
        %1450 = vmatprep.subr.mxu0 0.0
        %1451 = vmatpush1.msra.mxu0 %v1427
        %1452 = vmatprep.subr.mxu0 0.0
        %1453 = vmatpush1.msra.mxu0 0.0
        %1454 = vmatprep.subr.mxu0 0.0
        %1455 = vmatpush1.msra.mxu0 0.0
        %1456 = vmatprep.subr.mxu0 0.0
        %1457 = vmatpush1.msra.mxu0 0.0
        %1458 = vmatprep.subr.mxu0 0.0
        %1459 = vmatpush1.msra.mxu0 0.0
        %1460 = vmatprep.subr.mxu0 0.0
        %1461 = vmatpush1.msra.mxu0 0.0
        %1462 = vmatprep.subr.mxu0 0.0
        %1463 = vmatpush1.msra.mxu0 0.0
        %1464 = vmatprep.subr.mxu0 0.0
        %1465 = vmatpush1.msra.mxu0 0.0
        %1466 = vmatprep.subr.mxu0 0.0
        %1467 = vmatpush1.msra.mxu0 0.0
        %1468 = vmatprep.subr.mxu0 0.0
        %1469 = vmatpush1.msra.mxu0 0.0
        %1470 = vmatprep.subr.mxu0 0.0
        %1471 = vmatpush1.msra.mxu0 0.0
        %1472 = vmatprep.subr.mxu0 0.0
        %1473 = vmatpush1.msra.mxu0 0.0
        %1474 = vmatprep.subr.mxu0 0.0
        %1475 = vmatpush1.msra.mxu0 0.0
        %1476 = vmatprep.subr.mxu0 0.0
        %1477 = vmatpush1.msra.mxu0 0.0
        %1478 = vmatprep.subr.mxu0 0.0
        %1479 = vmatpush1.msra.mxu0 0.0
        %1480 = vmatprep.subr.mxu0 0.0
        %1481 = vmatpush1.msra.mxu0 0.0
        %1482 = vmatprep.subr.mxu0 0.0
        %1483 = vmatpush1.msra.mxu0 0.0
        %1484 = vmatprep.subr.mxu0 0.0
        %1485 = vmatpush1.msra.mxu0 0.0
        %1486 = vmatprep.subr.mxu0 0.0
        %1487 = vmatpush1.msra.mxu0 0.0
        %1488 = vmatprep.subr.mxu0 0.0
        %1489 = vmatpush1.msra.mxu0 0.0
        %1490 = vmatprep.subr.mxu0 0.0
        %1491 = vmatpush1.msra.mxu0 0.0
        %1492 = vmatprep.subr.mxu0 0.0
        %1493 = vmatpush1.msra.mxu0 0.0
        %1494 = vmatprep.subr.mxu0 0.0
        %1495 = vmatpush1.msra.mxu0 0.0
        %1496 = vmatprep.subr.mxu0 0.0
        %1497 = vmatpush1.msra.mxu0 0.0
        %1498 = vmatprep.subr.mxu0 0.0
        %1499 = vmatpush1.msra.mxu0 0.0
        %1500 = vmatprep.subr.mxu0 0.0
        %1501 = vmatpush1.msra.mxu0 0.0
        %1502 = vmatprep.subr.mxu0 0.0
        %1503 = vmatpush1.msra.mxu0 0.0
        %1504 = vmatprep.subr.mxu0 0.0
        %1505 = vmatpush1.msra.mxu0 0.0
        %1506 = vmatprep.subr.mxu0 0.0
        %1507 = vmatpush1.msra.mxu0 0.0
        %1508 = vmatprep.mubr.f32.mxu0 0.0
        %1509 = vmatmul.mubr.f32.gmra.mrb[0].mxu0 %v1436
        %v1510 = vpop.f32.mrb[0].mxu0
        %v1511 = vadd.f32 %v1433, %v1510
        %v1512 = vpop.f32.mrb[0].mxu0
        %1513 = vmatprep.mubr.f32.mxu0 0.0
        %1514 = vmatmul.mubr.f32.gmra.mrb[0].mxu0 %v1439
        %v1515 = vpop.f32.mrb[0].mxu0
        %v1516 = vadd.f32 %v1433, %v1515
        %v1517 = vpop.f32.mrb[0].mxu0
        %1518 = vmatprep.mubr.f32.mxu0 0.0
        %1519 = vmatmul.mubr.f32.gmra.mrb[0].mxu0 %v1442
        %v1520 = vpop.f32.mrb[0].mxu0
        %v1521 = vadd.f32 %v1433, %v1520
        %v1522 = vpop.f32.mrb[0].mxu0
        %1523 = vdwg.mxu0
        %v1524 = vld [vmem:[%s17] sm:$0xff]
        %v1525 = vld [vmem:[%s17 + $0x8] sm:$0xff]
        %v1526 = vld [vmem:[%s17 + $0x10] sm:$0xff]
        %v1527 = vld [vmem:[%s17 + $0x18] sm:$0xff]
        %v1528 = vld [vmem:[%s23] sm:$0x1]
        %v1530 = vlaneseq
        %v1531 = vshrl.u32 %v1530, 7
        %v1532 = vsub.s32 0, %v1531
        %v1533 = vrot.slane %v1528, %v1532
        %1535 = vmatprep.subr.mxu0 0.0
        %1536 = vmatpush1.msra.mxu0 %v1524
        %1537 = vmatprep.subr.mxu0 0.0
        %1538 = vmatpush1.msra.mxu0 %v1525
        %1539 = vmatprep.subr.mxu0 0.0
        %1540 = vmatpush1.msra.mxu0 %v1526
        %1541 = vmatprep.subr.mxu0 0.0
        %1542 = vmatpush1.msra.mxu0 %v1527
        %1543 = vmatprep.subr.mxu0 0.0
        %1544 = vmatpush1.msra.mxu0 0.0
        %1545 = vmatprep.subr.mxu0 0.0
        %1546 = vmatpush1.msra.mxu0 0.0
        %1547 = vmatprep.subr.mxu0 0.0
        %1548 = vmatpush1.msra.mxu0 0.0
        %1549 = vmatprep.subr.mxu0 0.0
        %1550 = vmatpush1.msra.mxu0 0.0
        %1551 = vmatprep.subr.mxu0 0.0
        %1552 = vmatpush1.msra.mxu0 0.0
        %1553 = vmatprep.subr.mxu0 0.0
        %1554 = vmatpush1.msra.mxu0 0.0
        %1555 = vmatprep.subr.mxu0 0.0
        %1556 = vmatpush1.msra.mxu0 0.0
        %1557 = vmatprep.subr.mxu0 0.0
        %1558 = vmatpush1.msra.mxu0 0.0
        %1559 = vmatprep.subr.mxu0 0.0
        %1560 = vmatpush1.msra.mxu0 0.0
        %1561 = vmatprep.subr.mxu0 0.0
        %1562 = vmatpush1.msra.mxu0 0.0
        %1563 = vmatprep.subr.mxu0 0.0
        %1564 = vmatpush1.msra.mxu0 0.0
        %1565 = vmatprep.subr.mxu0 0.0
        %1566 = vmatpush1.msra.mxu0 0.0
        %1567 = vmatprep.subr.mxu0 0.0
        %1568 = vmatpush1.msra.mxu0 0.0
        %1569 = vmatprep.subr.mxu0 0.0
        %1570 = vmatpush1.msra.mxu0 0.0
        %1571 = vmatprep.subr.mxu0 0.0
        %1572 = vmatpush1.msra.mxu0 0.0
        %1573 = vmatprep.subr.mxu0 0.0
        %1574 = vmatpush1.msra.mxu0 0.0
        %1575 = vmatprep.subr.mxu0 0.0
        %1576 = vmatpush1.msra.mxu0 0.0
        %1577 = vmatprep.subr.mxu0 0.0
        %1578 = vmatpush1.msra.mxu0 0.0
        %1579 = vmatprep.subr.mxu0 0.0
        %1580 = vmatpush1.msra.mxu0 0.0
        %1581 = vmatprep.subr.mxu0 0.0
        %1582 = vmatpush1.msra.mxu0 0.0
        %1583 = vmatprep.subr.mxu0 0.0
        %1584 = vmatpush1.msra.mxu0 0.0
        %1585 = vmatprep.subr.mxu0 0.0
        %1586 = vmatpush1.msra.mxu0 0.0
        %1587 = vmatprep.subr.mxu0 0.0
        %1588 = vmatpush1.msra.mxu0 0.0
        %1589 = vmatprep.subr.mxu0 0.0
        %1590 = vmatpush1.msra.mxu0 0.0
        %1591 = vmatprep.subr.mxu0 0.0
        %1592 = vmatpush1.msra.mxu0 0.0
        %1593 = vmatprep.subr.mxu0 0.0
        %1594 = vmatpush1.msra.mxu0 0.0
        %1595 = vmatprep.subr.mxu0 0.0
        %1596 = vmatpush1.msra.mxu0 0.0
        %1597 = vmatprep.subr.mxu0 0.0
        %1598 = vmatpush1.msra.mxu0 0.0
        %1599 = vmatprep.mubr.f32.mxu0 0.0
        %1600 = vmatmul.mubr.f32.gmra.mrb[0].mxu0 %v1436
        %v1601 = vpop.f32.mrb[0].mxu0
        %v1602 = vadd.f32 %v1533, %v1601
        %v1603 = vpop.f32.mrb[0].mxu0
        %1604 = vmatprep.mubr.f32.mxu0 0.0
        %1605 = vmatmul.mubr.f32.gmra.mrb[0].mxu0 %v1439
        %v1606 = vpop.f32.mrb[0].mxu0
        %v1607 = vadd.f32 %v1533, %v1606
        %v1608 = vpop.f32.mrb[0].mxu0
        %1609 = vmatprep.mubr.f32.mxu0 0.0
        %1610 = vmatmul.mubr.f32.gmra.mrb[0].mxu0 %v1442
        %v1611 = vpop.f32.mrb[0].mxu0
        %v1612 = vadd.f32 %v1533, %v1611
        %v1613 = vpop.f32.mrb[0].mxu0
        %1614 = vdwg.mxu0
        %v1615 = vld [vmem:[%s19] sm:$0xff]
        %v1616 = vld [vmem:[%s19 + $0x8] sm:$0xff]
        %v1617 = vld [vmem:[%s19 + $0x10] sm:$0xff]
        %v1618 = vld [vmem:[%s19 + $0x18] sm:$0xff]
        %v1619 = vld [vmem:[%s25] sm:$0x1]
        %v1621 = vlaneseq
        %v1622 = vshrl.u32 %v1621, 7
        %v1623 = vsub.s32 0, %v1622
        %v1624 = vrot.slane %v1619, %v1623
        %1626 = vmatprep.subr.mxu0 0.0
        %1627 = vmatpush1.msra.mxu0 %v1615
        %1628 = vmatprep.subr.mxu0 0.0
        %1629 = vmatpush1.msra.mxu0 %v1616
        %1630 = vmatprep.subr.mxu0 0.0
        %1631 = vmatpush1.msra.mxu0 %v1617
        %1632 = vmatprep.subr.mxu0 0.0
        %1633 = vmatpush1.msra.mxu0 %v1618
        %1634 = vmatprep.subr.mxu0 0.0
        %1635 = vmatpush1.msra.mxu0 0.0
        %1636 = vmatprep.subr.mxu0 0.0
        %1637 = vmatpush1.msra.mxu0 0.0
        %1638 = vmatprep.subr.mxu0 0.0
        %1639 = vmatpush1.msra.mxu0 0.0
        %1640 = vmatprep.subr.mxu0 0.0
        %1641 = vmatpush1.msra.mxu0 0.0
        %1642 = vmatprep.subr.mxu0 0.0
        %1643 = vmatpush1.msra.mxu0 0.0
        %1644 = vmatprep.subr.mxu0 0.0
        %1645 = vmatpush1.msra.mxu0 0.0
        %1646 = vmatprep.subr.mxu0 0.0
        %1647 = vmatpush1.msra.mxu0 0.0
        %1648 = vmatprep.subr.mxu0 0.0
        %1649 = vmatpush1.msra.mxu0 0.0
        %1650 = vmatprep.subr.mxu0 0.0
        %1651 = vmatpush1.msra.mxu0 0.0
        %1652 = vmatprep.subr.mxu0 0.0
        %1653 = vmatpush1.msra.mxu0 0.0
        %1654 = vmatprep.subr.mxu0 0.0
        %1655 = vmatpush1.msra.mxu0 0.0
        %1656 = vmatprep.subr.mxu0 0.0
        %1657 = vmatpush1.msra.mxu0 0.0
        %1658 = vmatprep.subr.mxu0 0.0
        %1659 = vmatpush1.msra.mxu0 0.0
        %1660 = vmatprep.subr.mxu0 0.0
        %1661 = vmatpush1.msra.mxu0 0.0
        %1662 = vmatprep.subr.mxu0 0.0
        %1663 = vmatpush1.msra.mxu0 0.0
        %1664 = vmatprep.subr.mxu0 0.0
        %1665 = vmatpush1.msra.mxu0 0.0
        %1666 = vmatprep.subr.mxu0 0.0
        %1667 = vmatpush1.msra.mxu0 0.0
        %1668 = vmatprep.subr.mxu0 0.0
        %1669 = vmatpush1.msra.mxu0 0.0
        %1670 = vmatprep.subr.mxu0 0.0
        %1671 = vmatpush1.msra.mxu0 0.0
        %1672 = vmatprep.subr.mxu0 0.0
        %1673 = vmatpush1.msra.mxu0 0.0
        %1674 = vmatprep.subr.mxu0 0.0
        %1675 = vmatpush1.msra.mxu0 0.0
        %1676 = vmatprep.subr.mxu0 0.0
        %1677 = vmatpush1.msra.mxu0 0.0
        %1678 = vmatprep.subr.mxu0 0.0
        %1679 = vmatpush1.msra.mxu0 0.0
        %1680 = vmatprep.subr.mxu0 0.0
        %1681 = vmatpush1.msra.mxu0 0.0
        %1682 = vmatprep.subr.mxu0 0.0
        %1683 = vmatpush1.msra.mxu0 0.0
        %1684 = vmatprep.subr.mxu0 0.0
        %1685 = vmatpush1.msra.mxu0 0.0
        %1686 = vmatprep.subr.mxu0 0.0
        %1687 = vmatpush1.msra.mxu0 0.0
        %1688 = vmatprep.subr.mxu0 0.0
        %1689 = vmatpush1.msra.mxu0 0.0
        %1690 = vmatprep.mubr.f32.mxu0 0.0
        %1691 = vmatmul.mubr.f32.gmra.mrb[0].mxu0 %v1436
        %v1692 = vpop.f32.mrb[0].mxu0
        %v1693 = vadd.f32 %v1624, %v1692
        %v1694 = vpop.f32.mrb[0].mxu0
        %1695 = vmatprep.mubr.f32.mxu0 0.0
        %1696 = vmatmul.mubr.f32.gmra.mrb[0].mxu0 %v1439
        %v1697 = vpop.f32.mrb[0].mxu0
        %v1698 = vadd.f32 %v1624, %v1697
        %v1699 = vpop.f32.mrb[0].mxu0
        %1700 = vmatprep.mubr.f32.mxu0 0.0
        %1701 = vmatmul.mubr.f32.gmra.mrb[0].mxu0 %v1442
        %v1702 = vpop.f32.mrb[0].mxu0
        %v1703 = vadd.f32 %v1624, %v1702
        %v1704 = vpop.f32.mrb[0].mxu0
        %1705 = vdwg.mxu0
        %vm1706 = vcmask 130048
        %v1708 = vsel %vm1706, %v1511, 0
        %v1711 = vsel %vm1706, %v1516, 0
        %v1714 = vsel %vm1706, %v1521, 0
        %v1717 = vsel %vm1706, %v1602, 0
        %v1720 = vsel %vm1706, %v1607, 0
        %v1723 = vsel %vm1706, %v1612, 0
        %1725 = vmatprep.subr.mxu0 0.0
        %1726 = vmatpush1.xpose.msra.mxu0 %v1717
        %1727 = vmatprep.subr.mxu0 0.0
        %1728 = vmatpush1.xpose.msra.mxu0 %v1720
        %1729 = vmatprep.subr.mxu0 0.0
        %1730 = vmatpush1.xpose.msra.mxu0 %v1723
        %1731 = vmatprep.subr.mxu0 0.0
        %1732 = vmatpush1.xpose.msra.mxu0 0.0
        %1733 = vmatprep.subr.mxu0 0.0
        %1734 = vmatpush1.xpose.msra.mxu0 0.0
        %1735 = vmatprep.subr.mxu0 0.0
        %1736 = vmatpush1.xpose.msra.mxu0 0.0
        %1737 = vmatprep.subr.mxu0 0.0
        %1738 = vmatpush1.xpose.msra.mxu0 0.0
        %1739 = vmatprep.subr.mxu0 0.0
        %1740 = vmatpush1.xpose.msra.mxu0 0.0
        %1741 = vmatprep.subr.mxu0 0.0
        %1742 = vmatpush1.xpose.msra.mxu0 0.0
        %1743 = vmatprep.subr.mxu0 0.0
        %1744 = vmatpush1.xpose.msra.mxu0 0.0
        %1745 = vmatprep.subr.mxu0 0.0
        %1746 = vmatpush1.xpose.msra.mxu0 0.0
        %1747 = vmatprep.subr.mxu0 0.0
        %1748 = vmatpush1.xpose.msra.mxu0 0.0
        %1749 = vmatprep.subr.mxu0 0.0
        %1750 = vmatpush1.xpose.msra.mxu0 0.0
        %1751 = vmatprep.subr.mxu0 0.0
        %1752 = vmatpush1.xpose.msra.mxu0 0.0
        %1753 = vmatprep.subr.mxu0 0.0
        %1754 = vmatpush1.xpose.msra.mxu0 0.0
        %1755 = vmatprep.subr.mxu0 0.0
        %1756 = vmatpush1.xpose.msra.mxu0 0.0
        %1757 = vmatprep.subr.mxu0 0.0
        %1758 = vmatpush1.xpose.msra.mxu0 0.0
        %1759 = vmatprep.subr.mxu0 0.0
        %1760 = vmatpush1.xpose.msra.mxu0 0.0
        %1761 = vmatprep.subr.mxu0 0.0
        %1762 = vmatpush1.xpose.msra.mxu0 0.0
        %1763 = vmatprep.subr.mxu0 0.0
        %1764 = vmatpush1.xpose.msra.mxu0 0.0
        %1765 = vmatprep.subr.mxu0 0.0
        %1766 = vmatpush1.xpose.msra.mxu0 0.0
        %1767 = vmatprep.subr.mxu0 0.0
        %1768 = vmatpush1.xpose.msra.mxu0 0.0
        %1769 = vmatprep.subr.mxu0 0.0
        %1770 = vmatpush1.xpose.msra.mxu0 0.0
        %1771 = vmatprep.subr.mxu0 0.0
        %1772 = vmatpush1.xpose.msra.mxu0 0.0
        %1773 = vmatprep.subr.mxu0 0.0
        %1774 = vmatpush1.xpose.msra.mxu0 0.0
        %1775 = vmatprep.subr.mxu0 0.0
        %1776 = vmatpush1.xpose.msra.mxu0 0.0
        %1777 = vmatprep.subr.mxu0 0.0
        %1778 = vmatpush1.xpose.msra.mxu0 0.0
        %1779 = vmatprep.subr.mxu0 0.0
        %1780 = vmatpush1.xpose.msra.mxu0 0.0
        %1781 = vmatprep.subr.mxu0 0.0
        %1782 = vmatpush1.xpose.msra.mxu0 0.0
        %1783 = vmatprep.subr.mxu0 0.0
        %1784 = vmatpush1.xpose.msra.mxu0 0.0
        %1785 = vmatprep.subr.mxu0 0.0
        %1786 = vmatpush1.xpose.msra.mxu0 0.0
        %1787 = vmatprep.subr.mxu0 0.0
        %1788 = vmatpush1.xpose.msra.mxu0 0.0
        %1789 = vmatprep.mubr.f32.mxu0 0.0
        %1790 = vmatmul.mubr.f32.gmra.mrb[0].mxu0 %v1708
        %v1791 = vpop.f32.mrb[0].mxu0
        %v1792 = vadd.f32 0.0, %v1791
        %v1793 = vpop.f32.mrb[0].mxu0
        %1794 = vmatprep.mubr.f32.mxu0 0.0
        %1795 = vmatmul.mubr.f32.gmra.mrb[0].mxu0 %v1711
        %v1796 = vpop.f32.mrb[0].mxu0
        %v1797 = vadd.f32 0.0, %v1796
        %v1798 = vpop.f32.mrb[0].mxu0
        %1799 = vmatprep.mubr.f32.mxu0 0.0
        %1800 = vmatmul.mubr.f32.gmra.mrb[0].mxu0 %v1714
        %v1801 = vpop.f32.mrb[0].mxu0
        %v1802 = vadd.f32 0.0, %v1801
        %v1803 = vpop.f32.mrb[0].mxu0
        %1804 = vdwg.mxu0
        %v1805 = vmul.f32 %v1792, 0.25
        %v1806 = vmul.f32 %v1797, 0.25
        %v1807 = vmul.f32 %v1802, 0.25
        %vm1808 = vcmask 171008
        %v1809 = vsel %vm1808, %v1805, -inf
        %1810 = vmax.xlane.f32.xlu0 %v1809
        %v1811 = vpop.xlane.xlu0 %1810
        %v1812 = vsel %vm1808, %v1806, -inf
        %1813 = vmax.xlane.f32.xlu0 %v1812
        %v1814 = vpop.xlane.xlu0 %1813
        %vm1815 = vcmask 167936
        %v1816 = vsel %vm1815, %v1807, -inf
        %1817 = vmax.xlane.f32.xlu0 %v1816
        %v1818 = vpop.xlane.xlu0 %1817
        %v1819 = vsub.f32 %v1805, %v1811
        %v1820 = vsub.f32 %v1806, %v1814
        %v1821 = vsub.f32 %v1807, %v1818
        %v1822 = vmul.f32 %v1819, 1.442695
        %v1823 = vpow.pop %v1822
        %v1824 = vmul.f32 %v1820, 1.442695
        %v1825 = vpow.pop %v1824
        %v1826 = vmul.f32 %v1821, 1.442695
        %v1827 = vpow.pop %v1826
        %v1828 = vsel %vm1808, %v1823, 0.0
        %1829 = vadd.xlane.f32.xlu0 %v1828
        %v1830 = vpop.xlane.xlu0 %1829
        %v1831 = vsel %vm1808, %v1825, 0.0
        %1832 = vadd.xlane.f32.xlu0 %v1831
        %v1833 = vpop.xlane.xlu0 %1832
        %v1834 = vsel %vm1815, %v1827, 0.0
        %1835 = vadd.xlane.f32.xlu0 %v1834
        %v1836 = vpop.xlane.xlu0 %1835
        %v1837 = vrcp.pop %v1830
        %v1838 = vrcp.pop %v1833
        %v1839 = vrcp.pop %v1836
        %v1840 = vmul.f32 %v1823, %v1837
        %v1841 = vmul.f32 %v1825, %v1838
        %v1842 = vmul.f32 %v1827, %v1839
        %v1844 = vsel %vm1808, %v1840, 0
        %v1847 = vsel %vm1808, %v1841, 0
        %v1850 = vsel %vm1808, %v1842, 0
        %v1853 = vsel %vm1355, %v1703, 0
        %1855 = vmatprep.subr.mxu0 0.0
        %1856 = vmatpush1.msra.mxu0 %v1693
        %1857 = vmatprep.subr.mxu0 0.0
        %1858 = vmatpush1.msra.mxu0 %v1698
        %1859 = vmatprep.subr.mxu0 0.0
        %1860 = vmatpush1.msra.mxu0 %v1853
        %1861 = vmatprep.subr.mxu0 0.0
        %1862 = vmatpush1.msra.mxu0 0.0
        %1863 = vmatprep.subr.mxu0 0.0
        %1864 = vmatpush1.msra.mxu0 0.0
        %1865 = vmatprep.subr.mxu0 0.0
        %1866 = vmatpush1.msra.mxu0 0.0
        %1867 = vmatprep.subr.mxu0 0.0
        %1868 = vmatpush1.msra.mxu0 0.0
        %1869 = vmatprep.subr.mxu0 0.0
        %1870 = vmatpush1.msra.mxu0 0.0
        %1871 = vmatprep.subr.mxu0 0.0
        %1872 = vmatpush1.msra.mxu0 0.0
        %1873 = vmatprep.subr.mxu0 0.0
        %1874 = vmatpush1.msra.mxu0 0.0
        %1875 = vmatprep.subr.mxu0 0.0
        %1876 = vmatpush1.msra.mxu0 0.0
        %1877 = vmatprep.subr.mxu0 0.0
        %1878 = vmatpush1.msra.mxu0 0.0
        %1879 = vmatprep.subr.mxu0 0.0
        %1880 = vmatpush1.msra.mxu0 0.0
        %1881 = vmatprep.subr.mxu0 0.0
        %1882 = vmatpush1.msra.mxu0 0.0
        %1883 = vmatprep.subr.mxu0 0.0
        %1884 = vmatpush1.msra.mxu0 0.0
        %1885 = vmatprep.subr.mxu0 0.0
        %1886 = vmatpush1.msra.mxu0 0.0
        %1887 = vmatprep.subr.mxu0 0.0
        %1888 = vmatpush1.msra.mxu0 0.0
        %1889 = vmatprep.subr.mxu0 0.0
        %1890 = vmatpush1.msra.mxu0 0.0
        %1891 = vmatprep.subr.mxu0 0.0
        %1892 = vmatpush1.msra.mxu0 0.0
        %1893 = vmatprep.subr.mxu0 0.0
        %1894 = vmatpush1.msra.mxu0 0.0
        %1895 = vmatprep.subr.mxu0 0.0
        %1896 = vmatpush1.msra.mxu0 0.0
        %1897 = vmatprep.subr.mxu0 0.0
        %1898 = vmatpush1.msra.mxu0 0.0
        %1899 = vmatprep.subr.mxu0 0.0
        %1900 = vmatpush1.msra.mxu0 0.0
        %1901 = vmatprep.subr.mxu0 0.0
        %1902 = vmatpush1.msra.mxu0 0.0
        %1903 = vmatprep.subr.mxu0 0.0
        %1904 = vmatpush1.msra.mxu0 0.0
        %1905 = vmatprep.subr.mxu0 0.0
        %1906 = vmatpush1.msra.mxu0 0.0
        %1907 = vmatprep.subr.mxu0 0.0
        %1908 = vmatpush1.msra.mxu0 0.0
        %1909 = vmatprep.subr.mxu0 0.0
        %1910 = vmatpush1.msra.mxu0 0.0
        %1911 = vmatprep.subr.mxu0 0.0
        %1912 = vmatpush1.msra.mxu0 0.0
        %1913 = vmatprep.subr.mxu0 0.0
        %1914 = vmatpush1.msra.mxu0 0.0
        %1915 = vmatprep.subr.mxu0 0.0
        %1916 = vmatpush1.msra.mxu0 0.0
        %1917 = vmatprep.subr.mxu0 0.0
        %1918 = vmatpush1.msra.mxu0 0.0
        %1919 = vmatprep.mubr.f32.mxu0 0.0
        %1920 = vmatmul.mubr.f32.gmra.mrb[0].mxu0 %v1844
        %v1921 = vpop.f32.mrb[0].mxu0
        %v1922 = vadd.f32 0.0, %v1921
        %v1923 = vpop.f32.mrb[0].mxu0
        %1924 = vmatprep.mubr.f32.mxu0 0.0
        %1925 = vmatmul.mubr.f32.gmra.mrb[0].mxu0 %v1847
        %v1926 = vpop.f32.mrb[0].mxu0
        %v1927 = vadd.f32 0.0, %v1926
        %v1928 = vpop.f32.mrb[0].mxu0
        %1929 = vmatprep.mubr.f32.mxu0 0.0
        %1930 = vmatmul.mubr.f32.gmra.mrb[0].mxu0 %v1850
        %v1931 = vpop.f32.mrb[0].mxu0
        %v1932 = vadd.f32 0.0, %v1931
        %v1933 = vpop.f32.mrb[0].mxu0
        %1934 = vdwg.mxu0
        %s1935 = scalar_lea.vmem %s15, 32
        %v1936 = vld [vmem:[%s1935] sm:$0xff]
        %v1937 = vld [vmem:[%s1935 + $0x8] sm:$0xff]
        %v1938 = vld [vmem:[%s1935 + $0x10] sm:$0xff]
        %v1939 = vld [vmem:[%s1935 + $0x18] sm:$0xff]
        %s1940 = scalar_lea.vmem %s21, 1
        %v1941 = vld [vmem:[%s1940] sm:$0x1]
        %v1943 = vlaneseq
        %v1944 = vshrl.u32 %v1943, 7
        %v1945 = vsub.s32 0, %v1944
        %v1946 = vrot.slane %v1941, %v1945
        %1948 = vmatprep.subr.mxu0 0.0
        %1949 = vmatpush1.msra.mxu0 %v1936
        %1950 = vmatprep.subr.mxu0 0.0
        %1951 = vmatpush1.msra.mxu0 %v1937
        %1952 = vmatprep.subr.mxu0 0.0
        %1953 = vmatpush1.msra.mxu0 %v1938
        %1954 = vmatprep.subr.mxu0 0.0
        %1955 = vmatpush1.msra.mxu0 %v1939
        %1956 = vmatprep.subr.mxu0 0.0
        %1957 = vmatpush1.msra.mxu0 0.0
        %1958 = vmatprep.subr.mxu0 0.0
        %1959 = vmatpush1.msra.mxu0 0.0
        %1960 = vmatprep.subr.mxu0 0.0
        %1961 = vmatpush1.msra.mxu0 0.0
        %1962 = vmatprep.subr.mxu0 0.0
        %1963 = vmatpush1.msra.mxu0 0.0
        %1964 = vmatprep.subr.mxu0 0.0
        %1965 = vmatpush1.msra.mxu0 0.0
        %1966 = vmatprep.subr.mxu0 0.0
        %1967 = vmatpush1.msra.mxu0 0.0
        %1968 = vmatprep.subr.mxu0 0.0
        %1969 = vmatpush1.msra.mxu0 0.0
        %1970 = vmatprep.subr.mxu0 0.0
        %1971 = vmatpush1.msra.mxu0 0.0
        %1972 = vmatprep.subr.mxu0 0.0
        %1973 = vmatpush1.msra.mxu0 0.0
        %1974 = vmatprep.subr.mxu0 0.0
        %1975 = vmatpush1.msra.mxu0 0.0
        %1976 = vmatprep.subr.mxu0 0.0
        %1977 = vmatpush1.msra.mxu0 0.0
        %1978 = vmatprep.subr.mxu0 0.0
        %1979 = vmatpush1.msra.mxu0 0.0
        %1980 = vmatprep.subr.mxu0 0.0
        %1981 = vmatpush1.msra.mxu0 0.0
        %1982 = vmatprep.subr.mxu0 0.0
        %1983 = vmatpush1.msra.mxu0 0.0
        %1984 = vmatprep.subr.mxu0 0.0
        %1985 = vmatpush1.msra.mxu0 0.0
        %1986 = vmatprep.subr.mxu0 0.0
        %1987 = vmatpush1.msra.mxu0 0.0
        %1988 = vmatprep.subr.mxu0 0.0
        %1989 = vmatpush1.msra.mxu0 0.0
        %1990 = vmatprep.subr.mxu0 0.0
        %1991 = vmatpush1.msra.mxu0 0.0
        %1992 = vmatprep.subr.mxu0 0.0
        %1993 = vmatpush1.msra.mxu0 0.0
        %1994 = vmatprep.subr.mxu0 0.0
        %1995 = vmatpush1.msra.mxu0 0.0
        %1996 = vmatprep.subr.mxu0 0.0
        %1997 = vmatpush1.msra.mxu0 0.0
        %1998 = vmatprep.subr.mxu0 0.0
        %1999 = vmatpush1.msra.mxu0 0.0
        %2000 = vmatprep.subr.mxu0 0.0
        %2001 = vmatpush1.msra.mxu0 0.0
        %2002 = vmatprep.subr.mxu0 0.0
        %2003 = vmatpush1.msra.mxu0 0.0
        %2004 = vmatprep.subr.mxu0 0.0
        %2005 = vmatpush1.msra.mxu0 0.0
        %2006 = vmatprep.subr.mxu0 0.0
        %2007 = vmatpush1.msra.mxu0 0.0
        %2008 = vmatprep.subr.mxu0 0.0
        %2009 = vmatpush1.msra.mxu0 0.0
        %2010 = vmatprep.subr.mxu0 0.0
        %2011 = vmatpush1.msra.mxu0 0.0
        %2012 = vmatprep.mubr.f32.mxu0 0.0
        %2013 = vmatmul.mubr.f32.gmra.mrb[0].mxu0 %v1436
        %v2014 = vpop.f32.mrb[0].mxu0
        %v2015 = vadd.f32 %v1946, %v2014
        %v2016 = vpop.f32.mrb[0].mxu0
        %2017 = vmatprep.mubr.f32.mxu0 0.0
        %2018 = vmatmul.mubr.f32.gmra.mrb[0].mxu0 %v1439
        %v2019 = vpop.f32.mrb[0].mxu0
        %v2020 = vadd.f32 %v1946, %v2019
        %v2021 = vpop.f32.mrb[0].mxu0
        %2022 = vmatprep.mubr.f32.mxu0 0.0
        %2023 = vmatmul.mubr.f32.gmra.mrb[0].mxu0 %v1442
        %v2024 = vpop.f32.mrb[0].mxu0
        %v2025 = vadd.f32 %v1946, %v2024
        %v2026 = vpop.f32.mrb[0].mxu0
        %2027 = vdwg.mxu0
        %s2028 = scalar_lea.vmem %s17, 32
        %v2029 = vld [vmem:[%s2028] sm:$0xff]
        %v2030 = vld [vmem:[%s2028 + $0x8] sm:$0xff]
        %v2031 = vld [vmem:[%s2028 + $0x10] sm:$0xff]
        %v2032 = vld [vmem:[%s2028 + $0x18] sm:$0xff]
        %s2033 = scalar_lea.vmem %s23, 1
        %v2034 = vld [vmem:[%s2033] sm:$0x1]
        %v2036 = vlaneseq
        %v2037 = vshrl.u32 %v2036, 7
        %v2038 = vsub.s32 0, %v2037
        %v2039 = vrot.slane %v2034, %v2038
        %2041 = vmatprep.subr.mxu0 0.0
        %2042 = vmatpush1.msra.mxu0 %v2029
        %2043 = vmatprep.subr.mxu0 0.0
        %2044 = vmatpush1.msra.mxu0 %v2030
        %2045 = vmatprep.subr.mxu0 0.0
        %2046 = vmatpush1.msra.mxu0 %v2031
        %2047 = vmatprep.subr.mxu0 0.0
        %2048 = vmatpush1.msra.mxu0 %v2032
        %2049 = vmatprep.subr.mxu0 0.0
        %2050 = vmatpush1.msra.mxu0 0.0
        %2051 = vmatprep.subr.mxu0 0.0
        %2052 = vmatpush1.msra.mxu0 0.0
        %2053 = vmatprep.subr.mxu0 0.0
        %2054 = vmatpush1.msra.mxu0 0.0
        %2055 = vmatprep.subr.mxu0 0.0
        %2056 = vmatpush1.msra.mxu0 0.0
        %2057 = vmatprep.subr.mxu0 0.0
        %2058 = vmatpush1.msra.mxu0 0.0
        %2059 = vmatprep.subr.mxu0 0.0
        %2060 = vmatpush1.msra.mxu0 0.0
        %2061 = vmatprep.subr.mxu0 0.0
        %2062 = vmatpush1.msra.mxu0 0.0
        %2063 = vmatprep.subr.mxu0 0.0
        %2064 = vmatpush1.msra.mxu0 0.0
        %2065 = vmatprep.subr.mxu0 0.0
        %2066 = vmatpush1.msra.mxu0 0.0
        %2067 = vmatprep.subr.mxu0 0.0
        %2068 = vmatpush1.msra.mxu0 0.0
        %2069 = vmatprep.subr.mxu0 0.0
        %2070 = vmatpush1.msra.mxu0 0.0
        %2071 = vmatprep.subr.mxu0 0.0
        %2072 = vmatpush1.msra.mxu0 0.0
        %2073 = vmatprep.subr.mxu0 0.0
        %2074 = vmatpush1.msra.mxu0 0.0
        %2075 = vmatprep.subr.mxu0 0.0
        %2076 = vmatpush1.msra.mxu0 0.0
        %2077 = vmatprep.subr.mxu0 0.0
        %2078 = vmatpush1.msra.mxu0 0.0
        %2079 = vmatprep.subr.mxu0 0.0
        %2080 = vmatpush1.msra.mxu0 0.0
        %2081 = vmatprep.subr.mxu0 0.0
        %2082 = vmatpush1.msra.mxu0 0.0
        %2083 = vmatprep.subr.mxu0 0.0
        %2084 = vmatpush1.msra.mxu0 0.0
        %2085 = vmatprep.subr.mxu0 0.0
        %2086 = vmatpush1.msra.mxu0 0.0
        %2087 = vmatprep.subr.mxu0 0.0
        %2088 = vmatpush1.msra.mxu0 0.0
        %2089 = vmatprep.subr.mxu0 0.0
        %2090 = vmatpush1.msra.mxu0 0.0
        %2091 = vmatprep.subr.mxu0 0.0
        %2092 = vmatpush1.msra.mxu0 0.0
        %2093 = vmatprep.subr.mxu0 0.0
        %2094 = vmatpush1.msra.mxu0 0.0
        %2095 = vmatprep.subr.mxu0 0.0
        %2096 = vmatpush1.msra.mxu0 0.0
        %2097 = vmatprep.subr.mxu0 0.0
        %2098 = vmatpush1.msra.mxu0 0.0
        %2099 = vmatprep.subr.mxu0 0.0
        %2100 = vmatpush1.msra.mxu0 0.0
        %2101 = vmatprep.subr.mxu0 0.0
        %2102 = vmatpush1.msra.mxu0 0.0
        %2103 = vmatprep.subr.mxu0 0.0
        %2104 = vmatpush1.msra.mxu0 0.0
        %2105 = vmatprep.mubr.f32.mxu0 0.0
        %2106 = vmatmul.mubr.f32.gmra.mrb[0].mxu0 %v1436
        %v2107 = vpop.f32.mrb[0].mxu0
        %v2108 = vadd.f32 %v2039, %v2107
        %v2109 = vpop.f32.mrb[0].mxu0
        %2110 = vmatprep.mubr.f32.mxu0 0.0
        %2111 = vmatmul.mubr.f32.gmra.mrb[0].mxu0 %v1439
        %v2112 = vpop.f32.mrb[0].mxu0
        %v2113 = vadd.f32 %v2039, %v2112
        %v2114 = vpop.f32.mrb[0].mxu0
        %2115 = vmatprep.mubr.f32.mxu0 0.0
        %2116 = vmatmul.mubr.f32.gmra.mrb[0].mxu0 %v1442
        %v2117 = vpop.f32.mrb[0].mxu0
        %v2118 = vadd.f32 %v2039, %v2117
        %v2119 = vpop.f32.mrb[0].mxu0
        %2120 = vdwg.mxu0
        %s2121 = scalar_lea.vmem %s19, 32
        %v2122 = vld [vmem:[%s2121] sm:$0xff]
        %v2123 = vld [vmem:[%s2121 + $0x8] sm:$0xff]
        %v2124 = vld [vmem:[%s2121 + $0x10] sm:$0xff]
        %v2125 = vld [vmem:[%s2121 + $0x18] sm:$0xff]
        %s2126 = scalar_lea.vmem %s25, 1
        %v2127 = vld [vmem:[%s2126] sm:$0x1]
        %v2129 = vlaneseq
        %v2130 = vshrl.u32 %v2129, 7
        %v2131 = vsub.s32 0, %v2130
        %v2132 = vrot.slane %v2127, %v2131
        %2134 = vmatprep.subr.mxu0 0.0
        %2135 = vmatpush1.msra.mxu0 %v2122
        %2136 = vmatprep.subr.mxu0 0.0
        %2137 = vmatpush1.msra.mxu0 %v2123
        %2138 = vmatprep.subr.mxu0 0.0
        %2139 = vmatpush1.msra.mxu0 %v2124
        %2140 = vmatprep.subr.mxu0 0.0
        %2141 = vmatpush1.msra.mxu0 %v2125
        %2142 = vmatprep.subr.mxu0 0.0
        %2143 = vmatpush1.msra.mxu0 0.0
        %2144 = vmatprep.subr.mxu0 0.0
        %2145 = vmatpush1.msra.mxu0 0.0
        %2146 = vmatprep.subr.mxu0 0.0
        %2147 = vmatpush1.msra.mxu0 0.0
        %2148 = vmatprep.subr.mxu0 0.0
        %2149 = vmatpush1.msra.mxu0 0.0
        %2150 = vmatprep.subr.mxu0 0.0
        %2151 = vmatpush1.msra.mxu0 0.0
        %2152 = vmatprep.subr.mxu0 0.0
        %2153 = vmatpush1.msra.mxu0 0.0
        %2154 = vmatprep.subr.mxu0 0.0
        %2155 = vmatpush1.msra.mxu0 0.0
        %2156 = vmatprep.subr.mxu0 0.0
        %2157 = vmatpush1.msra.mxu0 0.0
        %2158 = vmatprep.subr.mxu0 0.0
        %2159 = vmatpush1.msra.mxu0 0.0
        %2160 = vmatprep.subr.mxu0 0.0
        %2161 = vmatpush1.msra.mxu0 0.0
        %2162 = vmatprep.subr.mxu0 0.0
        %2163 = vmatpush1.msra.mxu0 0.0
        %2164 = vmatprep.subr.mxu0 0.0
        %2165 = vmatpush1.msra.mxu0 0.0
        %2166 = vmatprep.subr.mxu0 0.0
        %2167 = vmatpush1.msra.mxu0 0.0
        %2168 = vmatprep.subr.mxu0 0.0
        %2169 = vmatpush1.msra.mxu0 0.0
        %2170 = vmatprep.subr.mxu0 0.0
        %2171 = vmatpush1.msra.mxu0 0.0
        %2172 = vmatprep.subr.mxu0 0.0
        %2173 = vmatpush1.msra.mxu0 0.0
        %2174 = vmatprep.subr.mxu0 0.0
        %2175 = vmatpush1.msra.mxu0 0.0
        %2176 = vmatprep.subr.mxu0 0.0
        %2177 = vmatpush1.msra.mxu0 0.0
        %2178 = vmatprep.subr.mxu0 0.0
        %2179 = vmatpush1.msra.mxu0 0.0
        %2180 = vmatprep.subr.mxu0 0.0
        %2181 = vmatpush1.msra.mxu0 0.0
        %2182 = vmatprep.subr.mxu0 0.0
        %2183 = vmatpush1.msra.mxu0 0.0
        %2184 = vmatprep.subr.mxu0 0.0
        %2185 = vmatpush1.msra.mxu0 0.0
        %2186 = vmatprep.subr.mxu0 0.0
        %2187 = vmatpush1.msra.mxu0 0.0
        %2188 = vmatprep.subr.mxu0 0.0
        %2189 = vmatpush1.msra.mxu0 0.0
        %2190 = vmatprep.subr.mxu0 0.0
        %2191 = vmatpush1.msra.mxu0 0.0
        %2192 = vmatprep.subr.mxu0 0.0
        %2193 = vmatpush1.msra.mxu0 0.0
        %2194 = vmatprep.subr.mxu0 0.0
        %2195 = vmatpush1.msra.mxu0 0.0
        %2196 = vmatprep.subr.mxu0 0.0
        %2197 = vmatpush1.msra.mxu0 0.0
        %2198 = vmatprep.mubr.f32.mxu0 0.0
        %2199 = vmatmul.mubr.f32.gmra.mrb[0].mxu0 %v1436
        %v2200 = vpop.f32.mrb[0].mxu0
        %v2201 = vadd.f32 %v2132, %v2200
        %v2202 = vpop.f32.mrb[0].mxu0
        %2203 = vmatprep.mubr.f32.mxu0 0.0
        %2204 = vmatmul.mubr.f32.gmra.mrb[0].mxu0 %v1439
        %v2205 = vpop.f32.mrb[0].mxu0
        %v2206 = vadd.f32 %v2132, %v2205
        %v2207 = vpop.f32.mrb[0].mxu0
        %2208 = vmatprep.mubr.f32.mxu0 0.0
        %2209 = vmatmul.mubr.f32.gmra.mrb[0].mxu0 %v1442
        %v2210 = vpop.f32.mrb[0].mxu0
        %v2211 = vadd.f32 %v2132, %v2210
        %v2212 = vpop.f32.mrb[0].mxu0
        %2213 = vdwg.mxu0
        %v2215 = vsel %vm1706, %v2015, 0
        %v2218 = vsel %vm1706, %v2020, 0
        %v2221 = vsel %vm1706, %v2025, 0
        %v2224 = vsel %vm1706, %v2108, 0
        %v2227 = vsel %vm1706, %v2113, 0
        %v2230 = vsel %vm1706, %v2118, 0
        %2232 = vmatprep.subr.mxu0 0.0
        %2233 = vmatpush1.xpose.msra.mxu0 %v2224
        %2234 = vmatprep.subr.mxu0 0.0
        %2235 = vmatpush1.xpose.msra.mxu0 %v2227
        %2236 = vmatprep.subr.mxu0 0.0
        %2237 = vmatpush1.xpose.msra.mxu0 %v2230
        %2238 = vmatprep.subr.mxu0 0.0
        %2239 = vmatpush1.xpose.msra.mxu0 0.0
        %2240 = vmatprep.subr.mxu0 0.0
        %2241 = vmatpush1.xpose.msra.mxu0 0.0
        %2242 = vmatprep.subr.mxu0 0.0
        %2243 = vmatpush1.xpose.msra.mxu0 0.0
        %2244 = vmatprep.subr.mxu0 0.0
        %2245 = vmatpush1.xpose.msra.mxu0 0.0
        %2246 = vmatprep.subr.mxu0 0.0
        %2247 = vmatpush1.xpose.msra.mxu0 0.0
        %2248 = vmatprep.subr.mxu0 0.0
        %2249 = vmatpush1.xpose.msra.mxu0 0.0
        %2250 = vmatprep.subr.mxu0 0.0
        %2251 = vmatpush1.xpose.msra.mxu0 0.0
        %2252 = vmatprep.subr.mxu0 0.0
        %2253 = vmatpush1.xpose.msra.mxu0 0.0
        %2254 = vmatprep.subr.mxu0 0.0
        %2255 = vmatpush1.xpose.msra.mxu0 0.0
        %2256 = vmatprep.subr.mxu0 0.0
        %2257 = vmatpush1.xpose.msra.mxu0 0.0
        %2258 = vmatprep.subr.mxu0 0.0
        %2259 = vmatpush1.xpose.msra.mxu0 0.0
        %2260 = vmatprep.subr.mxu0 0.0
        %2261 = vmatpush1.xpose.msra.mxu0 0.0
        %2262 = vmatprep.subr.mxu0 0.0
        %2263 = vmatpush1.xpose.msra.mxu0 0.0
        %2264 = vmatprep.subr.mxu0 0.0
        %2265 = vmatpush1.xpose.msra.mxu0 0.0
        %2266 = vmatprep.subr.mxu0 0.0
        %2267 = vmatpush1.xpose.msra.mxu0 0.0
        %2268 = vmatprep.subr.mxu0 0.0
        %2269 = vmatpush1.xpose.msra.mxu0 0.0
        %2270 = vmatprep.subr.mxu0 0.0
        %2271 = vmatpush1.xpose.msra.mxu0 0.0
        %2272 = vmatprep.subr.mxu0 0.0
        %2273 = vmatpush1.xpose.msra.mxu0 0.0
        %2274 = vmatprep.subr.mxu0 0.0
        %2275 = vmatpush1.xpose.msra.mxu0 0.0
        %2276 = vmatprep.subr.mxu0 0.0
        %2277 = vmatpush1.xpose.msra.mxu0 0.0
        %2278 = vmatprep.subr.mxu0 0.0
        %2279 = vmatpush1.xpose.msra.mxu0 0.0
        %2280 = vmatprep.subr.mxu0 0.0
        %2281 = vmatpush1.xpose.msra.mxu0 0.0
        %2282 = vmatprep.subr.mxu0 0.0
        %2283 = vmatpush1.xpose.msra.mxu0 0.0
        %2284 = vmatprep.subr.mxu0 0.0
        %2285 = vmatpush1.xpose.msra.mxu0 0.0
        %2286 = vmatprep.subr.mxu0 0.0
        %2287 = vmatpush1.xpose.msra.mxu0 0.0
        %2288 = vmatprep.subr.mxu0 0.0
        %2289 = vmatpush1.xpose.msra.mxu0 0.0
        %2290 = vmatprep.subr.mxu0 0.0
        %2291 = vmatpush1.xpose.msra.mxu0 0.0
        %2292 = vmatprep.subr.mxu0 0.0
        %2293 = vmatpush1.xpose.msra.mxu0 0.0
        %2294 = vmatprep.subr.mxu0 0.0
        %2295 = vmatpush1.xpose.msra.mxu0 0.0
        %2296 = vmatprep.mubr.f32.mxu0 0.0
        %2297 = vmatmul.mubr.f32.gmra.mrb[0].mxu0 %v2215
        %v2298 = vpop.f32.mrb[0].mxu0
        %v2299 = vadd.f32 0.0, %v2298
        %v2300 = vpop.f32.mrb[0].mxu0
        %2301 = vmatprep.mubr.f32.mxu0 0.0
        %2302 = vmatmul.mubr.f32.gmra.mrb[0].mxu0 %v2218
        %v2303 = vpop.f32.mrb[0].mxu0
        %v2304 = vadd.f32 0.0, %v2303
        %v2305 = vpop.f32.mrb[0].mxu0
        %2306 = vmatprep.mubr.f32.mxu0 0.0
        %2307 = vmatmul.mubr.f32.gmra.mrb[0].mxu0 %v2221
        %v2308 = vpop.f32.mrb[0].mxu0
        %v2309 = vadd.f32 0.0, %v2308
        %v2310 = vpop.f32.mrb[0].mxu0
        %2311 = vdwg.mxu0
        %v2312 = vmul.f32 %v2299, 0.25
        %v2313 = vmul.f32 %v2304, 0.25
        %v2314 = vmul.f32 %v2309, 0.25
        %v2315 = vsel %vm1808, %v2312, -inf
        %2316 = vmax.xlane.f32.xlu0 %v2315
        %v2317 = vpop.xlane.xlu0 %2316
        %v2318 = vsel %vm1808, %v2313, -inf
        %2319 = vmax.xlane.f32.xlu0 %v2318
        %v2320 = vpop.xlane.xlu0 %2319
        %v2321 = vsel %vm1815, %v2314, -inf
        %2322 = vmax.xlane.f32.xlu0 %v2321
        %v2323 = vpop.xlane.xlu0 %2322
        %v2324 = vsub.f32 %v2312, %v2317
        %v2325 = vsub.f32 %v2313, %v2320
        %v2326 = vsub.f32 %v2314, %v2323
        %v2327 = vmul.f32 %v2324, 1.442695
        %v2328 = vpow.pop %v2327
        %v2329 = vmul.f32 %v2325, 1.442695
        %v2330 = vpow.pop %v2329
        %v2331 = vmul.f32 %v2326, 1.442695
        %v2332 = vpow.pop %v2331
        %v2333 = vsel %vm1808, %v2328, 0.0
        %2334 = vadd.xlane.f32.xlu0 %v2333
        %v2335 = vpop.xlane.xlu0 %2334
        %v2336 = vsel %vm1808, %v2330, 0.0
        %2337 = vadd.xlane.f32.xlu0 %v2336
        %v2338 = vpop.xlane.xlu0 %2337
        %v2339 = vsel %vm1815, %v2332, 0.0
        %2340 = vadd.xlane.f32.xlu0 %v2339
        %v2341 = vpop.xlane.xlu0 %2340
        %v2342 = vrcp.pop %v2335
        %v2343 = vrcp.pop %v2338
        %v2344 = vrcp.pop %v2341
        %v2345 = vmul.f32 %v2328, %v2342
        %v2346 = vmul.f32 %v2330, %v2343
        %v2347 = vmul.f32 %v2332, %v2344
        %v2349 = vsel %vm1808, %v2345, 0
        %v2352 = vsel %vm1808, %v2346, 0
        %v2355 = vsel %vm1808, %v2347, 0
        %v2358 = vsel %vm1355, %v2211, 0
        %2360 = vmatprep.subr.mxu0 0.0
        %2361 = vmatpush1.msra.mxu0 %v2201
        %2362 = vmatprep.subr.mxu0 0.0
        %2363 = vmatpush1.msra.mxu0 %v2206
        %2364 = vmatprep.subr.mxu0 0.0
        %2365 = vmatpush1.msra.mxu0 %v2358
        %2366 = vmatprep.subr.mxu0 0.0
        %2367 = vmatpush1.msra.mxu0 0.0
        %2368 = vmatprep.subr.mxu0 0.0
        %2369 = vmatpush1.msra.mxu0 0.0
        %2370 = vmatprep.subr.mxu0 0.0
        %2371 = vmatpush1.msra.mxu0 0.0
        %2372 = vmatprep.subr.mxu0 0.0
        %2373 = vmatpush1.msra.mxu0 0.0
        %2374 = vmatprep.subr.mxu0 0.0
        %2375 = vmatpush1.msra.mxu0 0.0
        %2376 = vmatprep.subr.mxu0 0.0
        %2377 = vmatpush1.msra.mxu0 0.0
        %2378 = vmatprep.subr.mxu0 0.0
        %2379 = vmatpush1.msra.mxu0 0.0
        %2380 = vmatprep.subr.mxu0 0.0
        %2381 = vmatpush1.msra.mxu0 0.0
        %2382 = vmatprep.subr.mxu0 0.0
        %2383 = vmatpush1.msra.mxu0 0.0
        %2384 = vmatprep.subr.mxu0 0.0
        %2385 = vmatpush1.msra.mxu0 0.0
        %2386 = vmatprep.subr.mxu0 0.0
        %2387 = vmatpush1.msra.mxu0 0.0
        %2388 = vmatprep.subr.mxu0 0.0
        %2389 = vmatpush1.msra.mxu0 0.0
        %2390 = vmatprep.subr.mxu0 0.0
        %2391 = vmatpush1.msra.mxu0 0.0
        %2392 = vmatprep.subr.mxu0 0.0
        %2393 = vmatpush1.msra.mxu0 0.0
        %2394 = vmatprep.subr.mxu0 0.0
        %2395 = vmatpush1.msra.mxu0 0.0
        %2396 = vmatprep.subr.mxu0 0.0
        %2397 = vmatpush1.msra.mxu0 0.0
        %2398 = vmatprep.subr.mxu0 0.0
        %2399 = vmatpush1.msra.mxu0 0.0
        %2400 = vmatprep.subr.mxu0 0.0
        %2401 = vmatpush1.msra.mxu0 0.0
        %2402 = vmatprep.subr.mxu0 0.0
        %2403 = vmatpush1.msra.mxu0 0.0
        %2404 = vmatprep.subr.mxu0 0.0
        %2405 = vmatpush1.msra.mxu0 0.0
        %2406 = vmatprep.subr.mxu0 0.0
        %2407 = vmatpush1.msra.mxu0 0.0
        %2408 = vmatprep.subr.mxu0 0.0
        %2409 = vmatpush1.msra.mxu0 0.0
        %2410 = vmatprep.subr.mxu0 0.0
        %2411 = vmatpush1.msra.mxu0 0.0
        %2412 = vmatprep.subr.mxu0 0.0
        %2413 = vmatpush1.msra.mxu0 0.0
        %2414 = vmatprep.subr.mxu0 0.0
        %2415 = vmatpush1.msra.mxu0 0.0
        %2416 = vmatprep.subr.mxu0 0.0
        %2417 = vmatpush1.msra.mxu0 0.0
        %2418 = vmatprep.subr.mxu0 0.0
        %2419 = vmatpush1.msra.mxu0 0.0
        %2420 = vmatprep.subr.mxu0 0.0
        %2421 = vmatpush1.msra.mxu0 0.0
        %2422 = vmatprep.subr.mxu0 0.0
        %2423 = vmatpush1.msra.mxu0 0.0
        %2424 = vmatprep.mubr.f32.mxu0 0.0
        %2425 = vmatmul.mubr.f32.gmra.mrb[0].mxu0 %v2349
        %v2426 = vpop.f32.mrb[0].mxu0
        %v2427 = vadd.f32 0.0, %v2426
        %v2428 = vpop.f32.mrb[0].mxu0
        %2429 = vmatprep.mubr.f32.mxu0 0.0
        %2430 = vmatmul.mubr.f32.gmra.mrb[0].mxu0 %v2352
        %v2431 = vpop.f32.mrb[0].mxu0
        %v2432 = vadd.f32 0.0, %v2431
        %v2433 = vpop.f32.mrb[0].mxu0
        %2434 = vmatprep.mubr.f32.mxu0 0.0
        %2435 = vmatmul.mubr.f32.gmra.mrb[0].mxu0 %v2355
        %v2436 = vpop.f32.mrb[0].mxu0
        %v2437 = vadd.f32 0.0, %v2436
        %v2438 = vpop.f32.mrb[0].mxu0
        %2439 = vdwg.mxu0
        %2443 = vrot.lane.b32.xlu0 %v2427, 16
        %v2444 = vpop.permute.xlu0 %2443
        %2445 = vrot.lane.b32.xlu0 %v2432, 16
        %v2446 = vpop.permute.xlu0 %2445
        %2447 = vrot.lane.b32.xlu0 %v2437, 16
        %v2448 = vpop.permute.xlu0 %2447
        %v2452 = vsel %vm1706, %v1922, %v2444
        %v2453 = vsel %vm1706, %v1927, %v2446
        %v2454 = vsel %vm1706, %v1932, %v2448
        %v2455 = vld [vmem:[%s27] sm:$0xff]
        %v2456 = vld [vmem:[%s27 + $0x8] sm:$0xff]
        %v2457 = vld [vmem:[%s27 + $0x10] sm:$0xff]
        %v2458 = vld [vmem:[%s27 + $0x18] sm:$0xff]
        %v2460 = vsel %vm1167, %v2452, 0
        %v2463 = vsel %vm1167, %v2453, 0
        %v2466 = vsel %vm1167, %v2454, 0
        %2468 = vmatprep.subr.mxu0 0.0
        %2469 = vmatpush1.msra.mxu0 %v2455
        %2470 = vmatprep.subr.mxu0 0.0
        %2471 = vmatpush1.msra.mxu0 %v2456
        %2472 = vmatprep.subr.mxu0 0.0
        %2473 = vmatpush1.msra.mxu0 %v2457
        %2474 = vmatprep.subr.mxu0 0.0
        %2475 = vmatpush1.msra.mxu0 %v2458
        %2476 = vmatprep.subr.mxu0 0.0
        %2477 = vmatpush1.msra.mxu0 0.0
        %2478 = vmatprep.subr.mxu0 0.0
        %2479 = vmatpush1.msra.mxu0 0.0
        %2480 = vmatprep.subr.mxu0 0.0
        %2481 = vmatpush1.msra.mxu0 0.0
        %2482 = vmatprep.subr.mxu0 0.0
        %2483 = vmatpush1.msra.mxu0 0.0
        %2484 = vmatprep.subr.mxu0 0.0
        %2485 = vmatpush1.msra.mxu0 0.0
        %2486 = vmatprep.subr.mxu0 0.0
        %2487 = vmatpush1.msra.mxu0 0.0
        %2488 = vmatprep.subr.mxu0 0.0
        %2489 = vmatpush1.msra.mxu0 0.0
        %2490 = vmatprep.subr.mxu0 0.0
        %2491 = vmatpush1.msra.mxu0 0.0
        %2492 = vmatprep.subr.mxu0 0.0
        %2493 = vmatpush1.msra.mxu0 0.0
        %2494 = vmatprep.subr.mxu0 0.0
        %2495 = vmatpush1.msra.mxu0 0.0
        %2496 = vmatprep.subr.mxu0 0.0
        %2497 = vmatpush1.msra.mxu0 0.0
        %2498 = vmatprep.subr.mxu0 0.0
        %2499 = vmatpush1.msra.mxu0 0.0
        %2500 = vmatprep.subr.mxu0 0.0
        %2501 = vmatpush1.msra.mxu0 0.0
        %2502 = vmatprep.subr.mxu0 0.0
        %2503 = vmatpush1.msra.mxu0 0.0
        %2504 = vmatprep.subr.mxu0 0.0
        %2505 = vmatpush1.msra.mxu0 0.0
        %2506 = vmatprep.subr.mxu0 0.0
        %2507 = vmatpush1.msra.mxu0 0.0
        %2508 = vmatprep.subr.mxu0 0.0
        %2509 = vmatpush1.msra.mxu0 0.0
        %2510 = vmatprep.subr.mxu0 0.0
        %2511 = vmatpush1.msra.mxu0 0.0
        %2512 = vmatprep.subr.mxu0 0.0
        %2513 = vmatpush1.msra.mxu0 0.0
        %2514 = vmatprep.subr.mxu0 0.0
        %2515 = vmatpush1.msra.mxu0 0.0
        %2516 = vmatprep.subr.mxu0 0.0
        %2517 = vmatpush1.msra.mxu0 0.0
        %2518 = vmatprep.subr.mxu0 0.0
        %2519 = vmatpush1.msra.mxu0 0.0
        %2520 = vmatprep.subr.mxu0 0.0
        %2521 = vmatpush1.msra.mxu0 0.0
        %2522 = vmatprep.subr.mxu0 0.0
        %2523 = vmatpush1.msra.mxu0 0.0
        %2524 = vmatprep.subr.mxu0 0.0
        %2525 = vmatpush1.msra.mxu0 0.0
        %2526 = vmatprep.subr.mxu0 0.0
        %2527 = vmatpush1.msra.mxu0 0.0
        %2528 = vmatprep.subr.mxu0 0.0
        %2529 = vmatpush1.msra.mxu0 0.0
        %2530 = vmatprep.subr.mxu0 0.0
        %2531 = vmatpush1.msra.mxu0 0.0
        %2532 = vmatprep.mubr.f32.mxu0 0.0
        %2533 = vmatmul.mubr.f32.gmra.mrb[0].mxu0 %v2460
        %v2534 = vpop.f32.mrb[0].mxu0
        %v2535 = vadd.f32 0.0, %v2534
        %v2536 = vpop.f32.mrb[0].mxu0
        %2537 = vmatprep.mubr.f32.mxu0 0.0
        %2538 = vmatmul.mubr.f32.gmra.mrb[0].mxu0 %v2463
        %v2539 = vpop.f32.mrb[0].mxu0
        %v2540 = vadd.f32 0.0, %v2539
        %v2541 = vpop.f32.mrb[0].mxu0
        %2542 = vmatprep.mubr.f32.mxu0 0.0
        %2543 = vmatmul.mubr.f32.gmra.mrb[0].mxu0 %v2466
        %v2544 = vpop.f32.mrb[0].mxu0
        %v2545 = vadd.f32 0.0, %v2544
        %v2546 = vpop.f32.mrb[0].mxu0
        %2547 = vdwg.mxu0
        %v2548 = vadd.f32 %v1362, %v2535
        %v2549 = vadd.f32 %v1358, %v2540
        %v2550 = vadd.f32 %v1357, %v2545
        %v2551 = vld [vmem:[%s29] sm:$0x1]
        %v2553 = vlaneseq
        %v2554 = vshrl.u32 %v2553, 7
        %v2555 = vsub.s32 0, %v2554
        %v2556 = vrot.slane %v2551, %v2555
        %v2558 = vadd.f32 %v2548, %v2556
        %v2559 = vadd.f32 %v2549, %v2556
        %v2560 = vadd.f32 %v2550, %v2556
        %v2561 = vld [vmem:[%s31] sm:$0x1]
        %v2562 = vld [vmem:[%s33] sm:$0x1]
        %v2563 = vsel %vm1167, %v2558, 0.0
        %2564 = vadd.xlane.f32.xlu0 %v2563
        %v2565 = vpop.xlane.xlu0 %2564
        %v2566 = vsel %vm1167, %v2559, 0.0
        %2567 = vadd.xlane.f32.xlu0 %v2566
        %v2568 = vpop.xlane.xlu0 %2567
        %v2569 = vsel %vm1371, %v2560, 0.0
        %2570 = vadd.xlane.f32.xlu0 %v2569
        %v2571 = vpop.xlane.xlu0 %2570
        %v2572 = vmul.f32 %v2565, %v1375
        %v2573 = vmul.f32 %v2568, %v1375
        %v2574 = vmul.f32 %v2571, %v1375
        %v2575 = vsub.f32 %v2558, %v2572
        %v2576 = vsub.f32 %v2559, %v2573
        %v2577 = vsub.f32 %v2560, %v2574
        %v2578 = vmul.f32 %v2575, %v2575
        %v2579 = vmul.f32 %v2576, %v2576
        %v2580 = vmul.f32 %v2577, %v2577
        %v2581 = vsel %vm1167, %v2578, 0.0
        %2582 = vadd.xlane.f32.xlu0 %v2581
        %v2583 = vpop.xlane.xlu0 %2582
        %v2584 = vsel %vm1167, %v2579, 0.0
        %2585 = vadd.xlane.f32.xlu0 %v2584
        %v2586 = vpop.xlane.xlu0 %2585
        %v2587 = vsel %vm1371, %v2580, 0.0
        %2588 = vadd.xlane.f32.xlu0 %v2587
        %v2589 = vpop.xlane.xlu0 %2588
        %v2590 = vmul.f32 %v2583, %v1375
        %v2591 = vmul.f32 %v2586, %v1375
        %v2592 = vmul.f32 %v2589, %v1375
        %v2593 = vadd.f32 %v2590, 1e-05
        %v2594 = vadd.f32 %v2591, 1e-05
        %v2595 = vadd.f32 %v2592, 1e-05
        %v2596 = vrsqrt.pop %v2593
        %v2597 = vrsqrt.pop %v2594
        %v2598 = vrsqrt.pop %v2595
        %v2599 = vmul.f32 %v2575, %v2596
        %v2600 = vmul.f32 %v2576, %v2597
        %v2601 = vmul.f32 %v2577, %v2598
        %v2603 = vlaneseq
        %v2604 = vshrl.u32 %v2603, 7
        %v2605 = vsub.s32 0, %v2604
        %v2606 = vrot.slane %v2561, %v2605
        %v2608 = vmul.f32 %v2599, %v2606
        %v2609 = vmul.f32 %v2600, %v2606
        %v2610 = vmul.f32 %v2601, %v2606
        %v2612 = vlaneseq
        %v2613 = vshrl.u32 %v2612, 7
        %v2614 = vsub.s32 0, %v2613
        %v2615 = vrot.slane %v2562, %v2614
        %v2617 = vadd.f32 %v2608, %v2615
        %v2618 = vadd.f32 %v2609, %v2615
        %v2619 = vadd.f32 %v2610, %v2615
        %v2620 = vld [vmem:[%s35] sm:$0xff]
        %v2621 = vld [vmem:[%s35 + $0x8] sm:$0xff]
        %v2622 = vld [vmem:[%s35 + $0x10] sm:$0xff]
        %v2623 = vld [vmem:[%s35 + $0x18] sm:$0xff]
        %v2624 = vld [vmem:[%s37] sm:$0x1]
        %v2626 = vlaneseq
        %v2627 = vshrl.u32 %v2626, 7
        %v2628 = vsub.s32 0, %v2627
        %v2629 = vrot.slane %v2624, %v2628
        %v2632 = vsel %vm1167, %v2617, 0
        %v2635 = vsel %vm1167, %v2618, 0
        %v2638 = vsel %vm1167, %v2619, 0
        %2640 = vmatprep.subr.mxu0 0.0
        %2641 = vmatpush1.msra.mxu0 %v2620
        %2642 = vmatprep.subr.mxu0 0.0
        %2643 = vmatpush1.msra.mxu0 %v2621
        %2644 = vmatprep.subr.mxu0 0.0
        %2645 = vmatpush1.msra.mxu0 %v2622
        %2646 = vmatprep.subr.mxu0 0.0
        %2647 = vmatpush1.msra.mxu0 %v2623
        %2648 = vmatprep.subr.mxu0 0.0
        %2649 = vmatpush1.msra.mxu0 0.0
        %2650 = vmatprep.subr.mxu0 0.0
        %2651 = vmatpush1.msra.mxu0 0.0
        %2652 = vmatprep.subr.mxu0 0.0
        %2653 = vmatpush1.msra.mxu0 0.0
        %2654 = vmatprep.subr.mxu0 0.0
        %2655 = vmatpush1.msra.mxu0 0.0
        %2656 = vmatprep.subr.mxu0 0.0
        %2657 = vmatpush1.msra.mxu0 0.0
        %2658 = vmatprep.subr.mxu0 0.0
        %2659 = vmatpush1.msra.mxu0 0.0
        %2660 = vmatprep.subr.mxu0 0.0
        %2661 = vmatpush1.msra.mxu0 0.0
        %2662 = vmatprep.subr.mxu0 0.0
        %2663 = vmatpush1.msra.mxu0 0.0
        %2664 = vmatprep.subr.mxu0 0.0
        %2665 = vmatpush1.msra.mxu0 0.0
        %2666 = vmatprep.subr.mxu0 0.0
        %2667 = vmatpush1.msra.mxu0 0.0
        %2668 = vmatprep.subr.mxu0 0.0
        %2669 = vmatpush1.msra.mxu0 0.0
        %2670 = vmatprep.subr.mxu0 0.0
        %2671 = vmatpush1.msra.mxu0 0.0
        %2672 = vmatprep.subr.mxu0 0.0
        %2673 = vmatpush1.msra.mxu0 0.0
        %2674 = vmatprep.subr.mxu0 0.0
        %2675 = vmatpush1.msra.mxu0 0.0
        %2676 = vmatprep.subr.mxu0 0.0
        %2677 = vmatpush1.msra.mxu0 0.0
        %2678 = vmatprep.subr.mxu0 0.0
        %2679 = vmatpush1.msra.mxu0 0.0
        %2680 = vmatprep.subr.mxu0 0.0
        %2681 = vmatpush1.msra.mxu0 0.0
        %2682 = vmatprep.subr.mxu0 0.0
        %2683 = vmatpush1.msra.mxu0 0.0
        %2684 = vmatprep.subr.mxu0 0.0
        %2685 = vmatpush1.msra.mxu0 0.0
        %2686 = vmatprep.subr.mxu0 0.0
        %2687 = vmatpush1.msra.mxu0 0.0
        %2688 = vmatprep.subr.mxu0 0.0
        %2689 = vmatpush1.msra.mxu0 0.0
        %2690 = vmatprep.subr.mxu0 0.0
        %2691 = vmatpush1.msra.mxu0 0.0
        %2692 = vmatprep.subr.mxu0 0.0
        %2693 = vmatpush1.msra.mxu0 0.0
        %2694 = vmatprep.subr.mxu0 0.0
        %2695 = vmatpush1.msra.mxu0 0.0
        %2696 = vmatprep.subr.mxu0 0.0
        %2697 = vmatpush1.msra.mxu0 0.0
        %2698 = vmatprep.subr.mxu0 0.0
        %2699 = vmatpush1.msra.mxu0 0.0
        %2700 = vmatprep.subr.mxu0 0.0
        %2701 = vmatpush1.msra.mxu0 0.0
        %2702 = vmatprep.subr.mxu0 0.0
        %2703 = vmatpush1.msra.mxu0 0.0
        %2704 = vmatprep.mubr.f32.mxu0 0.0
        %2705 = vmatmul.mubr.f32.gmra.mrb[0].mxu0 %v2632
        %v2706 = vpop.f32.mrb[0].mxu0
        %v2707 = vadd.f32 %v2629, %v2706
        %v2708 = vpop.f32.mrb[0].mxu0
        %2709 = vmatprep.mubr.f32.mxu0 0.0
        %2710 = vmatmul.mubr.f32.gmra.mrb[0].mxu0 %v2635
        %v2711 = vpop.f32.mrb[0].mxu0
        %v2712 = vadd.f32 %v2629, %v2711
        %v2713 = vpop.f32.mrb[0].mxu0
        %2714 = vmatprep.mubr.f32.mxu0 0.0
        %2715 = vmatmul.mubr.f32.gmra.mrb[0].mxu0 %v2638
        %v2716 = vpop.f32.mrb[0].mxu0
        %v2717 = vadd.f32 %v2629, %v2716
        %v2718 = vpop.f32.mrb[0].mxu0
        %2719 = vdwg.mxu0
        %v2720 = vmul.f32 %v2707, 0.5
        %v2721 = vmul.f32 %v2712, 0.5
        %v2722 = vmul.f32 %v2717, 0.5
        %v2723 = vmul.f32 %v2707, 0.044715
        %v2724 = vmul.f32 %v2712, 0.044715
        %v2725 = vmul.f32 %v2717, 0.044715
        %v2726 = vmul.f32 %v2723, %v2707
        %v2727 = vmul.f32 %v2724, %v2712
        %v2728 = vmul.f32 %v2725, %v2717
        %v2729 = vmul.f32 %v2726, %v2707
        %v2730 = vmul.f32 %v2727, %v2712
        %v2731 = vmul.f32 %v2728, %v2717
        %v2732 = vadd.f32 %v2707, %v2729
        %v2733 = vadd.f32 %v2712, %v2730
        %v2734 = vadd.f32 %v2717, %v2731
        %v2735 = vmul.f32 %v2732, 0.7978846
        %v2736 = vmul.f32 %v2733, 0.7978846
        %v2737 = vmul.f32 %v2734, 0.7978846
        %v2738 = vtanh.pop %v2735
        %v2739 = vtanh.pop %v2736
        %v2740 = vtanh.pop %v2737
        %v2741 = vadd.f32 %v2738, 1.0
        %v2742 = vadd.f32 %v2739, 1.0
        %v2743 = vadd.f32 %v2740, 1.0
        %v2744 = vmul.f32 %v2720, %v2741
        %v2745 = vmul.f32 %v2721, %v2742
        %v2746 = vmul.f32 %v2722, %v2743
        %v2747 = vld [vmem:[%s39] sm:$0xff]
        %v2748 = vld [vmem:[%s39 + $0x8] sm:$0xff]
        %v2749 = vld [vmem:[%s39 + $0x10] sm:$0xff]
        %v2750 = vld [vmem:[%s39 + $0x18] sm:$0xff]
        %v2751 = vld [vmem:[%s39 + $0x20] sm:$0xff]
        %v2752 = vld [vmem:[%s39 + $0x28] sm:$0xff]
        %v2753 = vld [vmem:[%s39 + $0x30] sm:$0xff]
        %v2754 = vld [vmem:[%s39 + $0x38] sm:$0xff]
        %v2755 = vld [vmem:[%s39 + $0x40] sm:$0xff]
        %v2756 = vld [vmem:[%s39 + $0x48] sm:$0xff]
        %v2757 = vld [vmem:[%s39 + $0x50] sm:$0xff]
        %v2758 = vld [vmem:[%s39 + $0x58] sm:$0xff]
        %v2759 = vld [vmem:[%s39 + $0x60] sm:$0xff]
        %v2760 = vld [vmem:[%s39 + $0x68] sm:$0xff]
        %v2761 = vld [vmem:[%s39 + $0x70] sm:$0xff]
        %v2762 = vld [vmem:[%s39 + $0x78] sm:$0xff]
        %2763 = vmatprep.subr.mxu0 0.0
        %2764 = vmatpush1.msra.mxu0 %v2747
        %2765 = vmatprep.subr.mxu0 0.0
        %2766 = vmatpush1.msra.mxu0 %v2748
        %2767 = vmatprep.subr.mxu0 0.0
        %2768 = vmatpush1.msra.mxu0 %v2749
        %2769 = vmatprep.subr.mxu0 0.0
        %2770 = vmatpush1.msra.mxu0 %v2750
        %2771 = vmatprep.subr.mxu0 0.0
        %2772 = vmatpush1.msra.mxu0 %v2751
        %2773 = vmatprep.subr.mxu0 0.0
        %2774 = vmatpush1.msra.mxu0 %v2752
        %2775 = vmatprep.subr.mxu0 0.0
        %2776 = vmatpush1.msra.mxu0 %v2753
        %2777 = vmatprep.subr.mxu0 0.0
        %2778 = vmatpush1.msra.mxu0 %v2754
        %2779 = vmatprep.subr.mxu0 0.0
        %2780 = vmatpush1.msra.mxu0 %v2755
        %2781 = vmatprep.subr.mxu0 0.0
        %2782 = vmatpush1.msra.mxu0 %v2756
        %2783 = vmatprep.subr.mxu0 0.0
        %2784 = vmatpush1.msra.mxu0 %v2757
        %2785 = vmatprep.subr.mxu0 0.0
        %2786 = vmatpush1.msra.mxu0 %v2758
        %2787 = vmatprep.subr.mxu0 0.0
        %2788 = vmatpush1.msra.mxu0 %v2759
        %2789 = vmatprep.subr.mxu0 0.0
        %2790 = vmatpush1.msra.mxu0 %v2760
        %2791 = vmatprep.subr.mxu0 0.0
        %2792 = vmatpush1.msra.mxu0 %v2761
        %2793 = vmatprep.subr.mxu0 0.0
        %2794 = vmatpush1.msra.mxu0 %v2762
        %2795 = vmatprep.subr.mxu0 0.0
        %2796 = vmatpush1.msra.mxu0 0.0
        %2797 = vmatprep.subr.mxu0 0.0
        %2798 = vmatpush1.msra.mxu0 0.0
        %2799 = vmatprep.subr.mxu0 0.0
        %2800 = vmatpush1.msra.mxu0 0.0
        %2801 = vmatprep.subr.mxu0 0.0
        %2802 = vmatpush1.msra.mxu0 0.0
        %2803 = vmatprep.subr.mxu0 0.0
        %2804 = vmatpush1.msra.mxu0 0.0
        %2805 = vmatprep.subr.mxu0 0.0
        %2806 = vmatpush1.msra.mxu0 0.0
        %2807 = vmatprep.subr.mxu0 0.0
        %2808 = vmatpush1.msra.mxu0 0.0
        %2809 = vmatprep.subr.mxu0 0.0
        %2810 = vmatpush1.msra.mxu0 0.0
        %2811 = vmatprep.subr.mxu0 0.0
        %2812 = vmatpush1.msra.mxu0 0.0
        %2813 = vmatprep.subr.mxu0 0.0
        %2814 = vmatpush1.msra.mxu0 0.0
        %2815 = vmatprep.subr.mxu0 0.0
        %2816 = vmatpush1.msra.mxu0 0.0
        %2817 = vmatprep.subr.mxu0 0.0
        %2818 = vmatpush1.msra.mxu0 0.0
        %2819 = vmatprep.subr.mxu0 0.0
        %2820 = vmatpush1.msra.mxu0 0.0
        %2821 = vmatprep.subr.mxu0 0.0
        %2822 = vmatpush1.msra.mxu0 0.0
        %2823 = vmatprep.subr.mxu0 0.0
        %2824 = vmatpush1.msra.mxu0 0.0
        %2825 = vmatprep.subr.mxu0 0.0
        %2826 = vmatpush1.msra.mxu0 0.0
        %2827 = vmatprep.mubr.f32.mxu0 0.0
        %2828 = vmatmul.mubr.f32.gmra.mrb[0].mxu0 %v2744
        %v2829 = vpop.f32.mrb[0].mxu0
        %v2830 = vadd.f32 0.0, %v2829
        %v2831 = vpop.f32.mrb[0].mxu0
        %2832 = vmatprep.mubr.f32.mxu0 0.0
        %2833 = vmatmul.mubr.f32.gmra.mrb[0].mxu0 %v2745
        %v2834 = vpop.f32.mrb[0].mxu0
        %v2835 = vadd.f32 0.0, %v2834
        %v2836 = vpop.f32.mrb[0].mxu0
        %2837 = vmatprep.mubr.f32.mxu0 0.0
        %2838 = vmatmul.mubr.f32.gmra.mrb[0].mxu0 %v2746
        %v2839 = vpop.f32.mrb[0].mxu0
        %v2840 = vadd.f32 0.0, %v2839
        %v2841 = vpop.f32.mrb[0].mxu0
        %2842 = vdwg.mxu0
        %v2843 = vadd.f32 %v2558, %v2830
        %v2844 = vadd.f32 %v2559, %v2835
        %v2845 = vadd.f32 %v2560, %v2840
        %v2846 = vld [vmem:[%s41] sm:$0x1]
        %v2848 = vlaneseq
        %v2849 = vshrl.u32 %v2848, 7
        %v2850 = vsub.s32 0, %v2849
        %v2851 = vrot.slane %v2846, %v2850
        %v2853 = vadd.f32 %v2843, %v2851
        %v2854 = vadd.f32 %v2844, %v2851
        %v2855 = vadd.f32 %v2845, %v2851
        %s2856 = scalar_lea.vmem %s11, 1
        %v2857 = vld [vmem:[%s2856] sm:$0x1]
        %s2858 = scalar_lea.vmem %s13, 1
        %v2859 = vld [vmem:[%s2858] sm:$0x1]
        %v2860 = vsel %vm1167, %v2853, 0.0
        %2861 = vadd.xlane.f32.xlu0 %v2860
        %v2862 = vpop.xlane.xlu0 %2861
        %v2863 = vsel %vm1167, %v2854, 0.0
        %2864 = vadd.xlane.f32.xlu0 %v2863
        %v2865 = vpop.xlane.xlu0 %2864
        %v2866 = vsel %vm1371, %v2855, 0.0
        %2867 = vadd.xlane.f32.xlu0 %v2866
        %v2868 = vpop.xlane.xlu0 %2867
        %v2869 = vmul.f32 %v2862, %v1375
        %v2870 = vmul.f32 %v2865, %v1375
        %v2871 = vmul.f32 %v2868, %v1375
        %v2872 = vsub.f32 %v2853, %v2869
        %v2873 = vsub.f32 %v2854, %v2870
        %v2874 = vsub.f32 %v2855, %v2871
        %v2875 = vmul.f32 %v2872, %v2872
        %v2876 = vmul.f32 %v2873, %v2873
        %v2877 = vmul.f32 %v2874, %v2874
        %v2878 = vsel %vm1167, %v2875, 0.0
        %2879 = vadd.xlane.f32.xlu0 %v2878
        %v2880 = vpop.xlane.xlu0 %2879
        %v2881 = vsel %vm1167, %v2876, 0.0
        %2882 = vadd.xlane.f32.xlu0 %v2881
        %v2883 = vpop.xlane.xlu0 %2882
        %v2884 = vsel %vm1371, %v2877, 0.0
        %2885 = vadd.xlane.f32.xlu0 %v2884
        %v2886 = vpop.xlane.xlu0 %2885
        %v2887 = vmul.f32 %v2880, %v1375
        %v2888 = vmul.f32 %v2883, %v1375
        %v2889 = vmul.f32 %v2886, %v1375
        %v2890 = vadd.f32 %v2887, 1e-05
        %v2891 = vadd.f32 %v2888, 1e-05
        %v2892 = vadd.f32 %v2889, 1e-05
        %v2893 = vrsqrt.pop %v2890
        %v2894 = vrsqrt.pop %v2891
        %v2895 = vrsqrt.pop %v2892
        %v2896 = vmul.f32 %v2872, %v2893
        %v2897 = vmul.f32 %v2873, %v2894
        %v2898 = vmul.f32 %v2874, %v2895
        %v2900 = vlaneseq
        %v2901 = vshrl.u32 %v2900, 7
        %v2902 = vsub.s32 0, %v2901
        %v2903 = vrot.slane %v2857, %v2902
        %v2905 = vmul.f32 %v2896, %v2903
        %v2906 = vmul.f32 %v2897, %v2903
        %v2907 = vmul.f32 %v2898, %v2903
        %v2909 = vlaneseq
        %v2910 = vshrl.u32 %v2909, 7
        %v2911 = vsub.s32 0, %v2910
        %v2912 = vrot.slane %v2859, %v2911
        %v2914 = vadd.f32 %v2905, %v2912
        %v2915 = vadd.f32 %v2906, %v2912
        %v2916 = vadd.f32 %v2907, %v2912
        %s2917 = scalar_lea.vmem %s15, 64
        %v2918 = vld [vmem:[%s2917] sm:$0xff]
        %v2919 = vld [vmem:[%s2917 + $0x8] sm:$0xff]
        %v2920 = vld [vmem:[%s2917 + $0x10] sm:$0xff]
        %v2921 = vld [vmem:[%s2917 + $0x18] sm:$0xff]
        %s2922 = scalar_lea.vmem %s21, 2
        %v2923 = vld [vmem:[%s2922] sm:$0x1]
        %v2925 = vlaneseq
        %v2926 = vshrl.u32 %v2925, 7
        %v2927 = vsub.s32 0, %v2926
        %v2928 = vrot.slane %v2923, %v2927
        %v2931 = vsel %vm1167, %v2914, 0
        %v2934 = vsel %vm1167, %v2915, 0
        %v2937 = vsel %vm1167, %v2916, 0
        %2939 = vmatprep.subr.mxu0 0.0
        %2940 = vmatpush1.msra.mxu0 %v2918
        %2941 = vmatprep.subr.mxu0 0.0
        %2942 = vmatpush1.msra.mxu0 %v2919
        %2943 = vmatprep.subr.mxu0 0.0
        %2944 = vmatpush1.msra.mxu0 %v2920
        %2945 = vmatprep.subr.mxu0 0.0
        %2946 = vmatpush1.msra.mxu0 %v2921
        %2947 = vmatprep.subr.mxu0 0.0
        %2948 = vmatpush1.msra.mxu0 0.0
        %2949 = vmatprep.subr.mxu0 0.0
        %2950 = vmatpush1.msra.mxu0 0.0
        %2951 = vmatprep.subr.mxu0 0.0
        %2952 = vmatpush1.msra.mxu0 0.0
        %2953 = vmatprep.subr.mxu0 0.0
        %2954 = vmatpush1.msra.mxu0 0.0
        %2955 = vmatprep.subr.mxu0 0.0
        %2956 = vmatpush1.msra.mxu0 0.0
        %2957 = vmatprep.subr.mxu0 0.0
        %2958 = vmatpush1.msra.mxu0 0.0
        %2959 = vmatprep.subr.mxu0 0.0
        %2960 = vmatpush1.msra.mxu0 0.0
        %2961 = vmatprep.subr.mxu0 0.0
        %2962 = vmatpush1.msra.mxu0 0.0
        %2963 = vmatprep.subr.mxu0 0.0
        %2964 = vmatpush1.msra.mxu0 0.0
        %2965 = vmatprep.subr.mxu0 0.0
        %2966 = vmatpush1.msra.mxu0 0.0
        %2967 = vmatprep.subr.mxu0 0.0
        %2968 = vmatpush1.msra.mxu0 0.0
        %2969 = vmatprep.subr.mxu0 0.0
        %2970 = vmatpush1.msra.mxu0 0.0
        %2971 = vmatprep.subr.mxu0 0.0
        %2972 = vmatpush1.msra.mxu0 0.0
        %2973 = vmatprep.subr.mxu0 0.0
        %2974 = vmatpush1.msra.mxu0 0.0
        %2975 = vmatprep.subr.mxu0 0.0
        %2976 = vmatpush1.msra.mxu0 0.0
        %2977 = vmatprep.subr.mxu0 0.0
        %2978 = vmatpush1.msra.mxu0 0.0
        %2979 = vmatprep.subr.mxu0 0.0
        %2980 = vmatpush1.msra.mxu0 0.0
        %2981 = vmatprep.subr.mxu0 0.0
        %2982 = vmatpush1.msra.mxu0 0.0
        %2983 = vmatprep.subr.mxu0 0.0
        %2984 = vmatpush1.msra.mxu0 0.0
        %2985 = vmatprep.subr.mxu0 0.0
        %2986 = vmatpush1.msra.mxu0 0.0
        %2987 = vmatprep.subr.mxu0 0.0
        %2988 = vmatpush1.msra.mxu0 0.0
        %2989 = vmatprep.subr.mxu0 0.0
        %2990 = vmatpush1.msra.mxu0 0.0
        %2991 = vmatprep.subr.mxu0 0.0
        %2992 = vmatpush1.msra.mxu0 0.0
        %2993 = vmatprep.subr.mxu0 0.0
        %2994 = vmatpush1.msra.mxu0 0.0
        %2995 = vmatprep.subr.mxu0 0.0
        %2996 = vmatpush1.msra.mxu0 0.0
        %2997 = vmatprep.subr.mxu0 0.0
        %2998 = vmatpush1.msra.mxu0 0.0
        %2999 = vmatprep.subr.mxu0 0.0
        %3000 = vmatpush1.msra.mxu0 0.0
        %3001 = vmatprep.subr.mxu0 0.0
        %3002 = vmatpush1.msra.mxu0 0.0
        %3003 = vmatprep.mubr.f32.mxu0 0.0
        %3004 = vmatmul.mubr.f32.gmra.mrb[0].mxu0 %v2931
        %v3005 = vpop.f32.mrb[0].mxu0
        %v3006 = vadd.f32 %v2928, %v3005
        %v3007 = vpop.f32.mrb[0].mxu0
        %3008 = vmatprep.mubr.f32.mxu0 0.0
        %3009 = vmatmul.mubr.f32.gmra.mrb[0].mxu0 %v2934
        %v3010 = vpop.f32.mrb[0].mxu0
        %v3011 = vadd.f32 %v2928, %v3010
        %v3012 = vpop.f32.mrb[0].mxu0
        %3013 = vmatprep.mubr.f32.mxu0 0.0
        %3014 = vmatmul.mubr.f32.gmra.mrb[0].mxu0 %v2937
        %v3015 = vpop.f32.mrb[0].mxu0
        %v3016 = vadd.f32 %v2928, %v3015
        %v3017 = vpop.f32.mrb[0].mxu0
        %3018 = vdwg.mxu0
        %s3019 = scalar_lea.vmem %s17, 64
        %v3020 = vld [vmem:[%s3019] sm:$0xff]
        %v3021 = vld [vmem:[%s3019 + $0x8] sm:$0xff]
        %v3022 = vld [vmem:[%s3019 + $0x10] sm:$0xff]
        %v3023 = vld [vmem:[%s3019 + $0x18] sm:$0xff]
        %s3024 = scalar_lea.vmem %s23, 2
        %v3025 = vld [vmem:[%s3024] sm:$0x1]
        %v3027 = vlaneseq
        %v3028 = vshrl.u32 %v3027, 7
        %v3029 = vsub.s32 0, %v3028
        %v3030 = vrot.slane %v3025, %v3029
        %3032 = vmatprep.subr.mxu0 0.0
        %3033 = vmatpush1.msra.mxu0 %v3020
        %3034 = vmatprep.subr.mxu0 0.0
        %3035 = vmatpush1.msra.mxu0 %v3021
        %3036 = vmatprep.subr.mxu0 0.0
        %3037 = vmatpush1.msra.mxu0 %v3022
        %3038 = vmatprep.subr.mxu0 0.0
        %3039 = vmatpush1.msra.mxu0 %v3023
        %3040 = vmatprep.subr.mxu0 0.0
        %3041 = vmatpush1.msra.mxu0 0.0
        %3042 = vmatprep.subr.mxu0 0.0
        %3043 = vmatpush1.msra.mxu0 0.0
        %3044 = vmatprep.subr.mxu0 0.0
        %3045 = vmatpush1.msra.mxu0 0.0
        %3046 = vmatprep.subr.mxu0 0.0
        %3047 = vmatpush1.msra.mxu0 0.0
        %3048 = vmatprep.subr.mxu0 0.0
        %3049 = vmatpush1.msra.mxu0 0.0
        %3050 = vmatprep.subr.mxu0 0.0
        %3051 = vmatpush1.msra.mxu0 0.0
        %3052 = vmatprep.subr.mxu0 0.0
        %3053 = vmatpush1.msra.mxu0 0.0
        %3054 = vmatprep.subr.mxu0 0.0
        %3055 = vmatpush1.msra.mxu0 0.0
        %3056 = vmatprep.subr.mxu0 0.0
        %3057 = vmatpush1.msra.mxu0 0.0
        %3058 = vmatprep.subr.mxu0 0.0
        %3059 = vmatpush1.msra.mxu0 0.0
        %3060 = vmatprep.subr.mxu0 0.0
        %3061 = vmatpush1.msra.mxu0 0.0
        %3062 = vmatprep.subr.mxu0 0.0
        %3063 = vmatpush1.msra.mxu0 0.0
        %3064 = vmatprep.subr.mxu0 0.0
        %3065 = vmatpush1.msra.mxu0 0.0
        %3066 = vmatprep.subr.mxu0 0.0
        %3067 = vmatpush1.msra.mxu0 0.0
        %3068 = vmatprep.subr.mxu0 0.0
        %3069 = vmatpush1.msra.mxu0 0.0
        %3070 = vmatprep.subr.mxu0 0.0
        %3071 = vmatpush1.msra.mxu0 0.0
        %3072 = vmatprep.subr.mxu0 0.0
        %3073 = vmatpush1.msra.mxu0 0.0
        %3074 = vmatprep.subr.mxu0 0.0
        %3075 = vmatpush1.msra.mxu0 0.0
        %3076 = vmatprep.subr.mxu0 0.0
        %3077 = vmatpush1.msra.mxu0 0.0
        %3078 = vmatprep.subr.mxu0 0.0
        %3079 = vmatpush1.msra.mxu0 0.0
        %3080 = vmatprep.subr.mxu0 0.0
        %3081 = vmatpush1.msra.mxu0 0.0
        %3082 = vmatprep.subr.mxu0 0.0
        %3083 = vmatpush1.msra.mxu0 0.0
        %3084 = vmatprep.subr.mxu0 0.0
        %3085 = vmatpush1.msra.mxu0 0.0
        %3086 = vmatprep.subr.mxu0 0.0
        %3087 = vmatpush1.msra.mxu0 0.0
        %3088 = vmatprep.subr.mxu0 0.0
        %3089 = vmatpush1.msra.mxu0 0.0
        %3090 = vmatprep.subr.mxu0 0.0
        %3091 = vmatpush1.msra.mxu0 0.0
        %3092 = vmatprep.subr.mxu0 0.0
        %3093 = vmatpush1.msra.mxu0 0.0
        %3094 = vmatprep.subr.mxu0 0.0
        %3095 = vmatpush1.msra.mxu0 0.0
        %3096 = vmatprep.mubr.f32.mxu0 0.0
        %3097 = vmatmul.mubr.f32.gmra.mrb[0].mxu0 %v2931
        %v3098 = vpop.f32.mrb[0].mxu0
        %v3099 = vadd.f32 %v3030, %v3098
        %v3100 = vpop.f32.mrb[0].mxu0
        %3101 = vmatprep.mubr.f32.mxu0 0.0
        %3102 = vmatmul.mubr.f32.gmra.mrb[0].mxu0 %v2934
        %v3103 = vpop.f32.mrb[0].mxu0
        %v3104 = vadd.f32 %v3030, %v3103
        %v3105 = vpop.f32.mrb[0].mxu0
        %3106 = vmatprep.mubr.f32.mxu0 0.0
        %3107 = vmatmul.mubr.f32.gmra.mrb[0].mxu0 %v2937
        %v3108 = vpop.f32.mrb[0].mxu0
        %v3109 = vadd.f32 %v3030, %v3108
        %v3110 = vpop.f32.mrb[0].mxu0
        %3111 = vdwg.mxu0
        %s3112 = scalar_lea.vmem %s19, 64
        %v3113 = vld [vmem:[%s3112] sm:$0xff]
        %v3114 = vld [vmem:[%s3112 + $0x8] sm:$0xff]
        %v3115 = vld [vmem:[%s3112 + $0x10] sm:$0xff]
        %v3116 = vld [vmem:[%s3112 + $0x18] sm:$0xff]
        %s3117 = scalar_lea.vmem %s25, 2
        %v3118 = vld [vmem:[%s3117] sm:$0x1]
        %v3120 = vlaneseq
        %v3121 = vshrl.u32 %v3120, 7
        %v3122 = vsub.s32 0, %v3121
        %v3123 = vrot.slane %v3118, %v3122
        %3125 = vmatprep.subr.mxu0 0.0
        %3126 = vmatpush1.msra.mxu0 %v3113
        %3127 = vmatprep.subr.mxu0 0.0
        %3128 = vmatpush1.msra.mxu0 %v3114
        %3129 = vmatprep.subr.mxu0 0.0
        %3130 = vmatpush1.msra.mxu0 %v3115
        %3131 = vmatprep.subr.mxu0 0.0
        %3132 = vmatpush1.msra.mxu0 %v3116
        %3133 = vmatprep.subr.mxu0 0.0
        %3134 = vmatpush1.msra.mxu0 0.0
        %3135 = vmatprep.subr.mxu0 0.0
        %3136 = vmatpush1.msra.mxu0 0.0
        %3137 = vmatprep.subr.mxu0 0.0
        %3138 = vmatpush1.msra.mxu0 0.0
        %3139 = vmatprep.subr.mxu0 0.0
        %3140 = vmatpush1.msra.mxu0 0.0
        %3141 = vmatprep.subr.mxu0 0.0
        %3142 = vmatpush1.msra.mxu0 0.0
        %3143 = vmatprep.subr.mxu0 0.0
        %3144 = vmatpush1.msra.mxu0 0.0
        %3145 = vmatprep.subr.mxu0 0.0
        %3146 = vmatpush1.msra.mxu0 0.0
        %3147 = vmatprep.subr.mxu0 0.0
        %3148 = vmatpush1.msra.mxu0 0.0
        %3149 = vmatprep.subr.mxu0 0.0
        %3150 = vmatpush1.msra.mxu0 0.0
        %3151 = vmatprep.subr.mxu0 0.0
        %3152 = vmatpush1.msra.mxu0 0.0
        %3153 = vmatprep.subr.mxu0 0.0
        %3154 = vmatpush1.msra.mxu0 0.0
        %3155 = vmatprep.subr.mxu0 0.0
        %3156 = vmatpush1.msra.mxu0 0.0
        %3157 = vmatprep.subr.mxu0 0.0
        %3158 = vmatpush1.msra.mxu0 0.0
        %3159 = vmatprep.subr.mxu0 0.0
        %3160 = vmatpush1.msra.mxu0 0.0
        %3161 = vmatprep.subr.mxu0 0.0
        %3162 = vmatpush1.msra.mxu0 0.0
        %3163 = vmatprep.subr.mxu0 0.0
        %3164 = vmatpush1.msra.mxu0 0.0
        %3165 = vmatprep.subr.mxu0 0.0
        %3166 = vmatpush1.msra.mxu0 0.0
        %3167 = vmatprep.subr.mxu0 0.0
        %3168 = vmatpush1.msra.mxu0 0.0
        %3169 = vmatprep.subr.mxu0 0.0
        %3170 = vmatpush1.msra.mxu0 0.0
        %3171 = vmatprep.subr.mxu0 0.0
        %3172 = vmatpush1.msra.mxu0 0.0
        %3173 = vmatprep.subr.mxu0 0.0
        %3174 = vmatpush1.msra.mxu0 0.0
        %3175 = vmatprep.subr.mxu0 0.0
        %3176 = vmatpush1.msra.mxu0 0.0
        %3177 = vmatprep.subr.mxu0 0.0
        %3178 = vmatpush1.msra.mxu0 0.0
        %3179 = vmatprep.subr.mxu0 0.0
        %3180 = vmatpush1.msra.mxu0 0.0
        %3181 = vmatprep.subr.mxu0 0.0
        %3182 = vmatpush1.msra.mxu0 0.0
        %3183 = vmatprep.subr.mxu0 0.0
        %3184 = vmatpush1.msra.mxu0 0.0
        %3185 = vmatprep.subr.mxu0 0.0
        %3186 = vmatpush1.msra.mxu0 0.0
        %3187 = vmatprep.subr.mxu0 0.0
        %3188 = vmatpush1.msra.mxu0 0.0
        %3189 = vmatprep.mubr.f32.mxu0 0.0
        %3190 = vmatmul.mubr.f32.gmra.mrb[0].mxu0 %v2931
        %v3191 = vpop.f32.mrb[0].mxu0
        %v3192 = vadd.f32 %v3123, %v3191
        %v3193 = vpop.f32.mrb[0].mxu0
        %3194 = vmatprep.mubr.f32.mxu0 0.0
        %3195 = vmatmul.mubr.f32.gmra.mrb[0].mxu0 %v2934
        %v3196 = vpop.f32.mrb[0].mxu0
        %v3197 = vadd.f32 %v3123, %v3196
        %v3198 = vpop.f32.mrb[0].mxu0
        %3199 = vmatprep.mubr.f32.mxu0 0.0
        %3200 = vmatmul.mubr.f32.gmra.mrb[0].mxu0 %v2937
        %v3201 = vpop.f32.mrb[0].mxu0
        %v3202 = vadd.f32 %v3123, %v3201
        %v3203 = vpop.f32.mrb[0].mxu0
        %3204 = vdwg.mxu0
        %v3206 = vsel %vm1706, %v3006, 0
        %v3209 = vsel %vm1706, %v3011, 0
        %v3212 = vsel %vm1706, %v3016, 0
        %v3215 = vsel %vm1706, %v3099, 0
        %v3218 = vsel %vm1706, %v3104, 0
        %v3221 = vsel %vm1706, %v3109, 0
        %3223 = vmatprep.subr.mxu0 0.0
        %3224 = vmatpush1.xpose.msra.mxu0 %v3215
        %3225 = vmatprep.subr.mxu0 0.0
        %3226 = vmatpush1.xpose.msra.mxu0 %v3218
        %3227 = vmatprep.subr.mxu0 0.0
        %3228 = vmatpush1.xpose.msra.mxu0 %v3221
        %3229 = vmatprep.subr.mxu0 0.0
        %3230 = vmatpush1.xpose.msra.mxu0 0.0
        %3231 = vmatprep.subr.mxu0 0.0
        %3232 = vmatpush1.xpose.msra.mxu0 0.0
        %3233 = vmatprep.subr.mxu0 0.0
        %3234 = vmatpush1.xpose.msra.mxu0 0.0
        %3235 = vmatprep.subr.mxu0 0.0
        %3236 = vmatpush1.xpose.msra.mxu0 0.0
        %3237 = vmatprep.subr.mxu0 0.0
        %3238 = vmatpush1.xpose.msra.mxu0 0.0
        %3239 = vmatprep.subr.mxu0 0.0
        %3240 = vmatpush1.xpose.msra.mxu0 0.0
        %3241 = vmatprep.subr.mxu0 0.0
        %3242 = vmatpush1.xpose.msra.mxu0 0.0
        %3243 = vmatprep.subr.mxu0 0.0
        %3244 = vmatpush1.xpose.msra.mxu0 0.0
        %3245 = vmatprep.subr.mxu0 0.0
        %3246 = vmatpush1.xpose.msra.mxu0 0.0
        %3247 = vmatprep.subr.mxu0 0.0
        %3248 = vmatpush1.xpose.msra.mxu0 0.0
        %3249 = vmatprep.subr.mxu0 0.0
        %3250 = vmatpush1.xpose.msra.mxu0 0.0
        %3251 = vmatprep.subr.mxu0 0.0
        %3252 = vmatpush1.xpose.msra.mxu0 0.0
        %3253 = vmatprep.subr.mxu0 0.0
        %3254 = vmatpush1.xpose.msra.mxu0 0.0
        %3255 = vmatprep.subr.mxu0 0.0
        %3256 = vmatpush1.xpose.msra.mxu0 0.0
        %3257 = vmatprep.subr.mxu0 0.0
        %3258 = vmatpush1.xpose.msra.mxu0 0.0
        %3259 = vmatprep.subr.mxu0 0.0
        %3260 = vmatpush1.xpose.msra.mxu0 0.0
        %3261 = vmatprep.subr.mxu0 0.0
        %3262 = vmatpush1.xpose.msra.mxu0 0.0
        %3263 = vmatprep.subr.mxu0 0.0
        %3264 = vmatpush1.xpose.msra.mxu0 0.0
        %3265 = vmatprep.subr.mxu0 0.0
        %3266 = vmatpush1.xpose.msra.mxu0 0.0
        %3267 = vmatprep.subr.mxu0 0.0
        %3268 = vmatpush1.xpose.msra.mxu0 0.0
        %3269 = vmatprep.subr.mxu0 0.0
        %3270 = vmatpush1.xpose.msra.mxu0 0.0
        %3271 = vmatprep.subr.mxu0 0.0
        %3272 = vmatpush1.xpose.msra.mxu0 0.0
        %3273 = vmatprep.subr.mxu0 0.0
        %3274 = vmatpush1.xpose.msra.mxu0 0.0
        %3275 = vmatprep.subr.mxu0 0.0
        %3276 = vmatpush1.xpose.msra.mxu0 0.0
        %3277 = vmatprep.subr.mxu0 0.0
        %3278 = vmatpush1.xpose.msra.mxu0 0.0
        %3279 = vmatprep.subr.mxu0 0.0
        %3280 = vmatpush1.xpose.msra.mxu0 0.0
        %3281 = vmatprep.subr.mxu0 0.0
        %3282 = vmatpush1.xpose.msra.mxu0 0.0
        %3283 = vmatprep.subr.mxu0 0.0
        %3284 = vmatpush1.xpose.msra.mxu0 0.0
        %3285 = vmatprep.subr.mxu0 0.0
        %3286 = vmatpush1.xpose.msra.mxu0 0.0
        %3287 = vmatprep.mubr.f32.mxu0 0.0
        %3288 = vmatmul.mubr.f32.gmra.mrb[0].mxu0 %v3206
        %v3289 = vpop.f32.mrb[0].mxu0
        %v3290 = vadd.f32 0.0, %v3289
        %v3291 = vpop.f32.mrb[0].mxu0
        %3292 = vmatprep.mubr.f32.mxu0 0.0
        %3293 = vmatmul.mubr.f32.gmra.mrb[0].mxu0 %v3209
        %v3294 = vpop.f32.mrb[0].mxu0
        %v3295 = vadd.f32 0.0, %v3294
        %v3296 = vpop.f32.mrb[0].mxu0
        %3297 = vmatprep.mubr.f32.mxu0 0.0
        %3298 = vmatmul.mubr.f32.gmra.mrb[0].mxu0 %v3212
        %v3299 = vpop.f32.mrb[0].mxu0
        %v3300 = vadd.f32 0.0, %v3299
        %v3301 = vpop.f32.mrb[0].mxu0
        %3302 = vdwg.mxu0
        %v3303 = vmul.f32 %v3290, 0.25
        %v3304 = vmul.f32 %v3295, 0.25
        %v3305 = vmul.f32 %v3300, 0.25
        %v3306 = vsel %vm1808, %v3303, -inf
        %3307 = vmax.xlane.f32.xlu0 %v3306
        %v3308 = vpop.xlane.xlu0 %3307
        %v3309 = vsel %vm1808, %v3304, -inf
        %3310 = vmax.xlane.f32.xlu0 %v3309
        %v3311 = vpop.xlane.xlu0 %3310
        %v3312 = vsel %vm1815, %v3305, -inf
        %3313 = vmax.xlane.f32.xlu0 %v3312
        %v3314 = vpop.xlane.xlu0 %3313
        %v3315 = vsub.f32 %v3303, %v3308
        %v3316 = vsub.f32 %v3304, %v3311
        %v3317 = vsub.f32 %v3305, %v3314
        %v3318 = vmul.f32 %v3315, 1.442695
        %v3319 = vpow.pop %v3318
        %v3320 = vmul.f32 %v3316, 1.442695
        %v3321 = vpow.pop %v3320
        %v3322 = vmul.f32 %v3317, 1.442695
        %v3323 = vpow.pop %v3322
        %v3324 = vsel %vm1808, %v3319, 0.0
        %3325 = vadd.xlane.f32.xlu0 %v3324
        %v3326 = vpop.xlane.xlu0 %3325
        %v3327 = vsel %vm1808, %v3321, 0.0
        %3328 = vadd.xlane.f32.xlu0 %v3327
        %v3329 = vpop.xlane.xlu0 %3328
        %v3330 = vsel %vm1815, %v3323, 0.0
        %3331 = vadd.xlane.f32.xlu0 %v3330
        %v3332 = vpop.xlane.xlu0 %3331
        %v3333 = vrcp.pop %v3326
        %v3334 = vrcp.pop %v3329
        %v3335 = vrcp.pop %v3332
        %v3336 = vmul.f32 %v3319, %v3333
        %v3337 = vmul.f32 %v3321, %v3334
        %v3338 = vmul.f32 %v3323, %v3335
        %v3340 = vsel %vm1808, %v3336, 0
        %v3343 = vsel %vm1808, %v3337, 0
        %v3346 = vsel %vm1808, %v3338, 0
        %v3349 = vsel %vm1355, %v3202, 0
        %3351 = vmatprep.subr.mxu0 0.0
        %3352 = vmatpush1.msra.mxu0 %v3192
        %3353 = vmatprep.subr.mxu0 0.0
        %3354 = vmatpush1.msra.mxu0 %v3197
        %3355 = vmatprep.subr.mxu0 0.0
        %3356 = vmatpush1.msra.mxu0 %v3349
        %3357 = vmatprep.subr.mxu0 0.0
        %3358 = vmatpush1.msra.mxu0 0.0
        %3359 = vmatprep.subr.mxu0 0.0
        %3360 = vmatpush1.msra.mxu0 0.0
        %3361 = vmatprep.subr.mxu0 0.0
        %3362 = vmatpush1.msra.mxu0 0.0
        %3363 = vmatprep.subr.mxu0 0.0
        %3364 = vmatpush1.msra.mxu0 0.0
        %3365 = vmatprep.subr.mxu0 0.0
        %3366 = vmatpush1.msra.mxu0 0.0
        %3367 = vmatprep.subr.mxu0 0.0
        %3368 = vmatpush1.msra.mxu0 0.0
        %3369 = vmatprep.subr.mxu0 0.0
        %3370 = vmatpush1.msra.mxu0 0.0
        %3371 = vmatprep.subr.mxu0 0.0
        %3372 = vmatpush1.msra.mxu0 0.0
        %3373 = vmatprep.subr.mxu0 0.0
        %3374 = vmatpush1.msra.mxu0 0.0
        %3375 = vmatprep.subr.mxu0 0.0
        %3376 = vmatpush1.msra.mxu0 0.0
        %3377 = vmatprep.subr.mxu0 0.0
        %3378 = vmatpush1.msra.mxu0 0.0
        %3379 = vmatprep.subr.mxu0 0.0
        %3380 = vmatpush1.msra.mxu0 0.0
        %3381 = vmatprep.subr.mxu0 0.0
        %3382 = vmatpush1.msra.mxu0 0.0
        %3383 = vmatprep.subr.mxu0 0.0
        %3384 = vmatpush1.msra.mxu0 0.0
        %3385 = vmatprep.subr.mxu0 0.0
        %3386 = vmatpush1.msra.mxu0 0.0
        %3387 = vmatprep.subr.mxu0 0.0
        %3388 = vmatpush1.msra.mxu0 0.0
        %3389 = vmatprep.subr.mxu0 0.0
        %3390 = vmatpush1.msra.mxu0 0.0
        %3391 = vmatprep.subr.mxu0 0.0
        %3392 = vmatpush1.msra.mxu0 0.0
        %3393 = vmatprep.subr.mxu0 0.0
        %3394 = vmatpush1.msra.mxu0 0.0
        %3395 = vmatprep.subr.mxu0 0.0
        %3396 = vmatpush1.msra.mxu0 0.0
        %3397 = vmatprep.subr.mxu0 0.0
        %3398 = vmatpush1.msra.mxu0 0.0
        %3399 = vmatprep.subr.mxu0 0.0
        %3400 = vmatpush1.msra.mxu0 0.0
        %3401 = vmatprep.subr.mxu0 0.0
        %3402 = vmatpush1.msra.mxu0 0.0
        %3403 = vmatprep.subr.mxu0 0.0
        %3404 = vmatpush1.msra.mxu0 0.0
        %3405 = vmatprep.subr.mxu0 0.0
        %3406 = vmatpush1.msra.mxu0 0.0
        %3407 = vmatprep.subr.mxu0 0.0
        %3408 = vmatpush1.msra.mxu0 0.0
        %3409 = vmatprep.subr.mxu0 0.0
        %3410 = vmatpush1.msra.mxu0 0.0
        %3411 = vmatprep.subr.mxu0 0.0
        %3412 = vmatpush1.msra.mxu0 0.0
        %3413 = vmatprep.subr.mxu0 0.0
        %3414 = vmatpush1.msra.mxu0 0.0
        %3415 = vmatprep.mubr.f32.mxu0 0.0
        %3416 = vmatmul.mubr.f32.gmra.mrb[0].mxu0 %v3340
        %v3417 = vpop.f32.mrb[0].mxu0
        %v3418 = vadd.f32 0.0, %v3417
        %v3419 = vpop.f32.mrb[0].mxu0
        %3420 = vmatprep.mubr.f32.mxu0 0.0
        %3421 = vmatmul.mubr.f32.gmra.mrb[0].mxu0 %v3343
        %v3422 = vpop.f32.mrb[0].mxu0
        %v3423 = vadd.f32 0.0, %v3422
        %v3424 = vpop.f32.mrb[0].mxu0
        %3425 = vmatprep.mubr.f32.mxu0 0.0
        %3426 = vmatmul.mubr.f32.gmra.mrb[0].mxu0 %v3346
        %v3427 = vpop.f32.mrb[0].mxu0
        %v3428 = vadd.f32 0.0, %v3427
        %v3429 = vpop.f32.mrb[0].mxu0
        %3430 = vdwg.mxu0
        %s3431 = scalar_lea.vmem %s15, 96
        %v3432 = vld [vmem:[%s3431] sm:$0xff]
        %v3433 = vld [vmem:[%s3431 + $0x8] sm:$0xff]
        %v3434 = vld [vmem:[%s3431 + $0x10] sm:$0xff]
        %v3435 = vld [vmem:[%s3431 + $0x18] sm:$0xff]
        %s3436 = scalar_lea.vmem %s21, 3
        %v3437 = vld [vmem:[%s3436] sm:$0x1]
        %v3439 = vlaneseq
        %v3440 = vshrl.u32 %v3439, 7
        %v3441 = vsub.s32 0, %v3440
        %v3442 = vrot.slane %v3437, %v3441
        %3444 = vmatprep.subr.mxu0 0.0
        %3445 = vmatpush1.msra.mxu0 %v3432
        %3446 = vmatprep.subr.mxu0 0.0
        %3447 = vmatpush1.msra.mxu0 %v3433
        %3448 = vmatprep.subr.mxu0 0.0
        %3449 = vmatpush1.msra.mxu0 %v3434
        %3450 = vmatprep.subr.mxu0 0.0
        %3451 = vmatpush1.msra.mxu0 %v3435
        %3452 = vmatprep.subr.mxu0 0.0
        %3453 = vmatpush1.msra.mxu0 0.0
        %3454 = vmatprep.subr.mxu0 0.0
        %3455 = vmatpush1.msra.mxu0 0.0
        %3456 = vmatprep.subr.mxu0 0.0
        %3457 = vmatpush1.msra.mxu0 0.0
        %3458 = vmatprep.subr.mxu0 0.0
        %3459 = vmatpush1.msra.mxu0 0.0
        %3460 = vmatprep.subr.mxu0 0.0
        %3461 = vmatpush1.msra.mxu0 0.0
        %3462 = vmatprep.subr.mxu0 0.0
        %3463 = vmatpush1.msra.mxu0 0.0
        %3464 = vmatprep.subr.mxu0 0.0
        %3465 = vmatpush1.msra.mxu0 0.0
        %3466 = vmatprep.subr.mxu0 0.0
        %3467 = vmatpush1.msra.mxu0 0.0
        %3468 = vmatprep.subr.mxu0 0.0
        %3469 = vmatpush1.msra.mxu0 0.0
        %3470 = vmatprep.subr.mxu0 0.0
        %3471 = vmatpush1.msra.mxu0 0.0
        %3472 = vmatprep.subr.mxu0 0.0
        %3473 = vmatpush1.msra.mxu0 0.0
        %3474 = vmatprep.subr.mxu0 0.0
        %3475 = vmatpush1.msra.mxu0 0.0
        %3476 = vmatprep.subr.mxu0 0.0
        %3477 = vmatpush1.msra.mxu0 0.0
        %3478 = vmatprep.subr.mxu0 0.0
        %3479 = vmatpush1.msra.mxu0 0.0
        %3480 = vmatprep.subr.mxu0 0.0
        %3481 = vmatpush1.msra.mxu0 0.0
        %3482 = vmatprep.subr.mxu0 0.0
        %3483 = vmatpush1.msra.mxu0 0.0
        %3484 = vmatprep.subr.mxu0 0.0
        %3485 = vmatpush1.msra.mxu0 0.0
        %3486 = vmatprep.subr.mxu0 0.0
        %3487 = vmatpush1.msra.mxu0 0.0
        %3488 = vmatprep.subr.mxu0 0.0
        %3489 = vmatpush1.msra.mxu0 0.0
        %3490 = vmatprep.subr.mxu0 0.0
        %3491 = vmatpush1.msra.mxu0 0.0
        %3492 = vmatprep.subr.mxu0 0.0
        %3493 = vmatpush1.msra.mxu0 0.0
        %3494 = vmatprep.subr.mxu0 0.0
        %3495 = vmatpush1.msra.mxu0 0.0
        %3496 = vmatprep.subr.mxu0 0.0
        %3497 = vmatpush1.msra.mxu0 0.0
        %3498 = vmatprep.subr.mxu0 0.0
        %3499 = vmatpush1.msra.mxu0 0.0
        %3500 = vmatprep.subr.mxu0 0.0
        %3501 = vmatpush1.msra.mxu0 0.0
        %3502 = vmatprep.subr.mxu0 0.0
        %3503 = vmatpush1.msra.mxu0 0.0
        %3504 = vmatprep.subr.mxu0 0.0
        %3505 = vmatpush1.msra.mxu0 0.0
        %3506 = vmatprep.subr.mxu0 0.0
        %3507 = vmatpush1.msra.mxu0 0.0
        %3508 = vmatprep.mubr.f32.mxu0 0.0
        %3509 = vmatmul.mubr.f32.gmra.mrb[0].mxu0 %v2931
        %v3510 = vpop.f32.mrb[0].mxu0
        %v3511 = vadd.f32 %v3442, %v3510
        %v3512 = vpop.f32.mrb[0].mxu0
        %3513 = vmatprep.mubr.f32.mxu0 0.0
        %3514 = vmatmul.mubr.f32.gmra.mrb[0].mxu0 %v2934
        %v3515 = vpop.f32.mrb[0].mxu0
        %v3516 = vadd.f32 %v3442, %v3515
        %v3517 = vpop.f32.mrb[0].mxu0
        %3518 = vmatprep.mubr.f32.mxu0 0.0
        %3519 = vmatmul.mubr.f32.gmra.mrb[0].mxu0 %v2937
        %v3520 = vpop.f32.mrb[0].mxu0
        %v3521 = vadd.f32 %v3442, %v3520
        %v3522 = vpop.f32.mrb[0].mxu0
        %3523 = vdwg.mxu0
        %s3524 = scalar_lea.vmem %s17, 96
        %v3525 = vld [vmem:[%s3524] sm:$0xff]
        %v3526 = vld [vmem:[%s3524 + $0x8] sm:$0xff]
        %v3527 = vld [vmem:[%s3524 + $0x10] sm:$0xff]
        %v3528 = vld [vmem:[%s3524 + $0x18] sm:$0xff]
        %s3529 = scalar_lea.vmem %s23, 3
        %v3530 = vld [vmem:[%s3529] sm:$0x1]
        %v3532 = vlaneseq
        %v3533 = vshrl.u32 %v3532, 7
        %v3534 = vsub.s32 0, %v3533
        %v3535 = vrot.slane %v3530, %v3534
        %3537 = vmatprep.subr.mxu0 0.0
        %3538 = vmatpush1.msra.mxu0 %v3525
        %3539 = vmatprep.subr.mxu0 0.0
        %3540 = vmatpush1.msra.mxu0 %v3526
        %3541 = vmatprep.subr.mxu0 0.0
        %3542 = vmatpush1.msra.mxu0 %v3527
        %3543 = vmatprep.subr.mxu0 0.0
        %3544 = vmatpush1.msra.mxu0 %v3528
        %3545 = vmatprep.subr.mxu0 0.0
        %3546 = vmatpush1.msra.mxu0 0.0
        %3547 = vmatprep.subr.mxu0 0.0
        %3548 = vmatpush1.msra.mxu0 0.0
        %3549 = vmatprep.subr.mxu0 0.0
        %3550 = vmatpush1.msra.mxu0 0.0
        %3551 = vmatprep.subr.mxu0 0.0
        %3552 = vmatpush1.msra.mxu0 0.0
        %3553 = vmatprep.subr.mxu0 0.0
        %3554 = vmatpush1.msra.mxu0 0.0
        %3555 = vmatprep.subr.mxu0 0.0
        %3556 = vmatpush1.msra.mxu0 0.0
        %3557 = vmatprep.subr.mxu0 0.0
        %3558 = vmatpush1.msra.mxu0 0.0
        %3559 = vmatprep.subr.mxu0 0.0
        %3560 = vmatpush1.msra.mxu0 0.0
        %3561 = vmatprep.subr.mxu0 0.0
        %3562 = vmatpush1.msra.mxu0 0.0
        %3563 = vmatprep.subr.mxu0 0.0
        %3564 = vmatpush1.msra.mxu0 0.0
        %3565 = vmatprep.subr.mxu0 0.0
        %3566 = vmatpush1.msra.mxu0 0.0
        %3567 = vmatprep.subr.mxu0 0.0
        %3568 = vmatpush1.msra.mxu0 0.0
        %3569 = vmatprep.subr.mxu0 0.0
        %3570 = vmatpush1.msra.mxu0 0.0
        %3571 = vmatprep.subr.mxu0 0.0
        %3572 = vmatpush1.msra.mxu0 0.0
        %3573 = vmatprep.subr.mxu0 0.0
        %3574 = vmatpush1.msra.mxu0 0.0
        %3575 = vmatprep.subr.mxu0 0.0
        %3576 = vmatpush1.msra.mxu0 0.0
        %3577 = vmatprep.subr.mxu0 0.0
        %3578 = vmatpush1.msra.mxu0 0.0
        %3579 = vmatprep.subr.mxu0 0.0
        %3580 = vmatpush1.msra.mxu0 0.0
        %3581 = vmatprep.subr.mxu0 0.0
        %3582 = vmatpush1.msra.mxu0 0.0
        %3583 = vmatprep.subr.mxu0 0.0
        %3584 = vmatpush1.msra.mxu0 0.0
        %3585 = vmatprep.subr.mxu0 0.0
        %3586 = vmatpush1.msra.mxu0 0.0
        %3587 = vmatprep.subr.mxu0 0.0
        %3588 = vmatpush1.msra.mxu0 0.0
        %3589 = vmatprep.subr.mxu0 0.0
        %3590 = vmatpush1.msra.mxu0 0.0
        %3591 = vmatprep.subr.mxu0 0.0
        %3592 = vmatpush1.msra.mxu0 0.0
        %3593 = vmatprep.subr.mxu0 0.0
        %3594 = vmatpush1.msra.mxu0 0.0
        %3595 = vmatprep.subr.mxu0 0.0
        %3596 = vmatpush1.msra.mxu0 0.0
        %3597 = vmatprep.subr.mxu0 0.0
        %3598 = vmatpush1.msra.mxu0 0.0
        %3599 = vmatprep.subr.mxu0 0.0
        %3600 = vmatpush1.msra.mxu0 0.0
        %3601 = vmatprep.mubr.f32.mxu0 0.0
        %3602 = vmatmul.mubr.f32.gmra.mrb[0].mxu0 %v2931
        %v3603 = vpop.f32.mrb[0].mxu0
        %v3604 = vadd.f32 %v3535, %v3603
        %v3605 = vpop.f32.mrb[0].mxu0
        %3606 = vmatprep.mubr.f32.mxu0 0.0
        %3607 = vmatmul.mubr.f32.gmra.mrb[0].mxu0 %v2934
        %v3608 = vpop.f32.mrb[0].mxu0
        %v3609 = vadd.f32 %v3535, %v3608
        %v3610 = vpop.f32.mrb[0].mxu0
        %3611 = vmatprep.mubr.f32.mxu0 0.0
        %3612 = vmatmul.mubr.f32.gmra.mrb[0].mxu0 %v2937
        %v3613 = vpop.f32.mrb[0].mxu0
        %v3614 = vadd.f32 %v3535, %v3613
        %v3615 = vpop.f32.mrb[0].mxu0
        %3616 = vdwg.mxu0
        %s3617 = scalar_lea.vmem %s19, 96
        %v3618 = vld [vmem:[%s3617] sm:$0xff]
        %v3619 = vld [vmem:[%s3617 + $0x8] sm:$0xff]
        %v3620 = vld [vmem:[%s3617 + $0x10] sm:$0xff]
        %v3621 = vld [vmem:[%s3617 + $0x18] sm:$0xff]
        %s3622 = scalar_lea.vmem %s25, 3
        %v3623 = vld [vmem:[%s3622] sm:$0x1]
        %v3625 = vlaneseq
        %v3626 = vshrl.u32 %v3625, 7
        %v3627 = vsub.s32 0, %v3626
        %v3628 = vrot.slane %v3623, %v3627
        %3630 = vmatprep.subr.mxu0 0.0
        %3631 = vmatpush1.msra.mxu0 %v3618
        %3632 = vmatprep.subr.mxu0 0.0
        %3633 = vmatpush1.msra.mxu0 %v3619
        %3634 = vmatprep.subr.mxu0 0.0
        %3635 = vmatpush1.msra.mxu0 %v3620
        %3636 = vmatprep.subr.mxu0 0.0
        %3637 = vmatpush1.msra.mxu0 %v3621
        %3638 = vmatprep.subr.mxu0 0.0
        %3639 = vmatpush1.msra.mxu0 0.0
        %3640 = vmatprep.subr.mxu0 0.0
        %3641 = vmatpush1.msra.mxu0 0.0
        %3642 = vmatprep.subr.mxu0 0.0
        %3643 = vmatpush1.msra.mxu0 0.0
        %3644 = vmatprep.subr.mxu0 0.0
        %3645 = vmatpush1.msra.mxu0 0.0
        %3646 = vmatprep.subr.mxu0 0.0
        %3647 = vmatpush1.msra.mxu0 0.0
        %3648 = vmatprep.subr.mxu0 0.0
        %3649 = vmatpush1.msra.mxu0 0.0
        %3650 = vmatprep.subr.mxu0 0.0
        %3651 = vmatpush1.msra.mxu0 0.0
        %3652 = vmatprep.subr.mxu0 0.0
        %3653 = vmatpush1.msra.mxu0 0.0
        %3654 = vmatprep.subr.mxu0 0.0
        %3655 = vmatpush1.msra.mxu0 0.0
        %3656 = vmatprep.subr.mxu0 0.0
        %3657 = vmatpush1.msra.mxu0 0.0
        %3658 = vmatprep.subr.mxu0 0.0
        %3659 = vmatpush1.msra.mxu0 0.0
        %3660 = vmatprep.subr.mxu0 0.0
        %3661 = vmatpush1.msra.mxu0 0.0
        %3662 = vmatprep.subr.mxu0 0.0
        %3663 = vmatpush1.msra.mxu0 0.0
        %3664 = vmatprep.subr.mxu0 0.0
        %3665 = vmatpush1.msra.mxu0 0.0
        %3666 = vmatprep.subr.mxu0 0.0
        %3667 = vmatpush1.msra.mxu0 0.0
        %3668 = vmatprep.subr.mxu0 0.0
        %3669 = vmatpush1.msra.mxu0 0.0
        %3670 = vmatprep.subr.mxu0 0.0
        %3671 = vmatpush1.msra.mxu0 0.0
        %3672 = vmatprep.subr.mxu0 0.0
        %3673 = vmatpush1.msra.mxu0 0.0
        %3674 = vmatprep.subr.mxu0 0.0
        %3675 = vmatpush1.msra.mxu0 0.0
        %3676 = vmatprep.subr.mxu0 0.0
        %3677 = vmatpush1.msra.mxu0 0.0
        %3678 = vmatprep.subr.mxu0 0.0
        %3679 = vmatpush1.msra.mxu0 0.0
        %3680 = vmatprep.subr.mxu0 0.0
        %3681 = vmatpush1.msra.mxu0 0.0
        %3682 = vmatprep.subr.mxu0 0.0
        %3683 = vmatpush1.msra.mxu0 0.0
        %3684 = vmatprep.subr.mxu0 0.0
        %3685 = vmatpush1.msra.mxu0 0.0
        %3686 = vmatprep.subr.mxu0 0.0
        %3687 = vmatpush1.msra.mxu0 0.0
        %3688 = vmatprep.subr.mxu0 0.0
        %3689 = vmatpush1.msra.mxu0 0.0
        %3690 = vmatprep.subr.mxu0 0.0
        %3691 = vmatpush1.msra.mxu0 0.0
        %3692 = vmatprep.subr.mxu0 0.0
        %3693 = vmatpush1.msra.mxu0 0.0
        %3694 = vmatprep.mubr.f32.mxu0 0.0
        %3695 = vmatmul.mubr.f32.gmra.mrb[0].mxu0 %v2931
        %v3696 = vpop.f32.mrb[0].mxu0
        %v3697 = vadd.f32 %v3628, %v3696
        %v3698 = vpop.f32.mrb[0].mxu0
        %3699 = vmatprep.mubr.f32.mxu0 0.0
        %3700 = vmatmul.mubr.f32.gmra.mrb[0].mxu0 %v2934
        %v3701 = vpop.f32.mrb[0].mxu0
        %v3702 = vadd.f32 %v3628, %v3701
        %v3703 = vpop.f32.mrb[0].mxu0
        %3704 = vmatprep.mubr.f32.mxu0 0.0
        %3705 = vmatmul.mubr.f32.gmra.mrb[0].mxu0 %v2937
        %v3706 = vpop.f32.mrb[0].mxu0
        %v3707 = vadd.f32 %v3628, %v3706
        %v3708 = vpop.f32.mrb[0].mxu0
        %3709 = vdwg.mxu0
        %v3711 = vsel %vm1706, %v3511, 0
        %v3714 = vsel %vm1706, %v3516, 0
        %v3717 = vsel %vm1706, %v3521, 0
        %v3720 = vsel %vm1706, %v3604, 0
        %v3723 = vsel %vm1706, %v3609, 0
        %v3726 = vsel %vm1706, %v3614, 0
        %3728 = vmatprep.subr.mxu0 0.0
        %3729 = vmatpush1.xpose.msra.mxu0 %v3720
        %3730 = vmatprep.subr.mxu0 0.0
        %3731 = vmatpush1.xpose.msra.mxu0 %v3723
        %3732 = vmatprep.subr.mxu0 0.0
        %3733 = vmatpush1.xpose.msra.mxu0 %v3726
        %3734 = vmatprep.subr.mxu0 0.0
        %3735 = vmatpush1.xpose.msra.mxu0 0.0
        %3736 = vmatprep.subr.mxu0 0.0
        %3737 = vmatpush1.xpose.msra.mxu0 0.0
        %3738 = vmatprep.subr.mxu0 0.0
        %3739 = vmatpush1.xpose.msra.mxu0 0.0
        %3740 = vmatprep.subr.mxu0 0.0
        %3741 = vmatpush1.xpose.msra.mxu0 0.0
        %3742 = vmatprep.subr.mxu0 0.0
        %3743 = vmatpush1.xpose.msra.mxu0 0.0
        %3744 = vmatprep.subr.mxu0 0.0
        %3745 = vmatpush1.xpose.msra.mxu0 0.0
        %3746 = vmatprep.subr.mxu0 0.0
        %3747 = vmatpush1.xpose.msra.mxu0 0.0
        %3748 = vmatprep.subr.mxu0 0.0
        %3749 = vmatpush1.xpose.msra.mxu0 0.0
        %3750 = vmatprep.subr.mxu0 0.0
        %3751 = vmatpush1.xpose.msra.mxu0 0.0
        %3752 = vmatprep.subr.mxu0 0.0
        %3753 = vmatpush1.xpose.msra.mxu0 0.0
        %3754 = vmatprep.subr.mxu0 0.0
        %3755 = vmatpush1.xpose.msra.mxu0 0.0
        %3756 = vmatprep.subr.mxu0 0.0
        %3757 = vmatpush1.xpose.msra.mxu0 0.0
        %3758 = vmatprep.subr.mxu0 0.0
        %3759 = vmatpush1.xpose.msra.mxu0 0.0
        %3760 = vmatprep.subr.mxu0 0.0
        %3761 = vmatpush1.xpose.msra.mxu0 0.0
        %3762 = vmatprep.subr.mxu0 0.0
        %3763 = vmatpush1.xpose.msra.mxu0 0.0
        %3764 = vmatprep.subr.mxu0 0.0
        %3765 = vmatpush1.xpose.msra.mxu0 0.0
        %3766 = vmatprep.subr.mxu0 0.0
        %3767 = vmatpush1.xpose.msra.mxu0 0.0
        %3768 = vmatprep.subr.mxu0 0.0
        %3769 = vmatpush1.xpose.msra.mxu0 0.0
        %3770 = vmatprep.subr.mxu0 0.0
        %3771 = vmatpush1.xpose.msra.mxu0 0.0
        %3772 = vmatprep.subr.mxu0 0.0
        %3773 = vmatpush1.xpose.msra.mxu0 0.0
        %3774 = vmatprep.subr.mxu0 0.0
        %3775 = vmatpush1.xpose.msra.mxu0 0.0
        %3776 = vmatprep.subr.mxu0 0.0
        %3777 = vmatpush1.xpose.msra.mxu0 0.0
        %3778 = vmatprep.subr.mxu0 0.0
        %3779 = vmatpush1.xpose.msra.mxu0 0.0
        %3780 = vmatprep.subr.mxu0 0.0
        %3781 = vmatpush1.xpose.msra.mxu0 0.0
        %3782 = vmatprep.subr.mxu0 0.0
        %3783 = vmatpush1.xpose.msra.mxu0 0.0
        %3784 = vmatprep.subr.mxu0 0.0
        %3785 = vmatpush1.xpose.msra.mxu0 0.0
        %3786 = vmatprep.subr.mxu0 0.0
        %3787 = vmatpush1.xpose.msra.mxu0 0.0
        %3788 = vmatprep.subr.mxu0 0.0
        %3789 = vmatpush1.xpose.msra.mxu0 0.0
        %3790 = vmatprep.subr.mxu0 0.0
        %3791 = vmatpush1.xpose.msra.mxu0 0.0
        %3792 = vmatprep.mubr.f32.mxu0 0.0
        %3793 = vmatmul.mubr.f32.gmra.mrb[0].mxu0 %v3711
        %v3794 = vpop.f32.mrb[0].mxu0
        %v3795 = vadd.f32 0.0, %v3794
        %v3796 = vpop.f32.mrb[0].mxu0
        %3797 = vmatprep.mubr.f32.mxu0 0.0
        %3798 = vmatmul.mubr.f32.gmra.mrb[0].mxu0 %v3714
        %v3799 = vpop.f32.mrb[0].mxu0
        %v3800 = vadd.f32 0.0, %v3799
        %v3801 = vpop.f32.mrb[0].mxu0
        %3802 = vmatprep.mubr.f32.mxu0 0.0
        %3803 = vmatmul.mubr.f32.gmra.mrb[0].mxu0 %v3717
        %v3804 = vpop.f32.mrb[0].mxu0
        %v3805 = vadd.f32 0.0, %v3804
        %v3806 = vpop.f32.mrb[0].mxu0
        %3807 = vdwg.mxu0
        %v3808 = vmul.f32 %v3795, 0.25
        %v3809 = vmul.f32 %v3800, 0.25
        %v3810 = vmul.f32 %v3805, 0.25
        %v3811 = vsel %vm1808, %v3808, -inf
        %3812 = vmax.xlane.f32.xlu0 %v3811
        %v3813 = vpop.xlane.xlu0 %3812
        %v3814 = vsel %vm1808, %v3809, -inf
        %3815 = vmax.xlane.f32.xlu0 %v3814
        %v3816 = vpop.xlane.xlu0 %3815
        %v3817 = vsel %vm1815, %v3810, -inf
        %3818 = vmax.xlane.f32.xlu0 %v3817
        %v3819 = vpop.xlane.xlu0 %3818
        %v3820 = vsub.f32 %v3808, %v3813
        %v3821 = vsub.f32 %v3809, %v3816
        %v3822 = vsub.f32 %v3810, %v3819
        %v3823 = vmul.f32 %v3820, 1.442695
        %v3824 = vpow.pop %v3823
        %v3825 = vmul.f32 %v3821, 1.442695
        %v3826 = vpow.pop %v3825
        %v3827 = vmul.f32 %v3822, 1.442695
        %v3828 = vpow.pop %v3827
        %v3829 = vsel %vm1808, %v3824, 0.0
        %3830 = vadd.xlane.f32.xlu0 %v3829
        %v3831 = vpop.xlane.xlu0 %3830
        %v3832 = vsel %vm1808, %v3826, 0.0
        %3833 = vadd.xlane.f32.xlu0 %v3832
        %v3834 = vpop.xlane.xlu0 %3833
        %v3835 = vsel %vm1815, %v3828, 0.0
        %3836 = vadd.xlane.f32.xlu0 %v3835
        %v3837 = vpop.xlane.xlu0 %3836
        %v3838 = vrcp.pop %v3831
        %v3839 = vrcp.pop %v3834
        %v3840 = vrcp.pop %v3837
        %v3841 = vmul.f32 %v3824, %v3838
        %v3842 = vmul.f32 %v3826, %v3839
        %v3843 = vmul.f32 %v3828, %v3840
        %v3845 = vsel %vm1808, %v3841, 0
        %v3848 = vsel %vm1808, %v3842, 0
        %v3851 = vsel %vm1808, %v3843, 0
        %v3854 = vsel %vm1355, %v3707, 0
        %3856 = vmatprep.subr.mxu0 0.0
        %3857 = vmatpush1.msra.mxu0 %v3697
        %3858 = vmatprep.subr.mxu0 0.0
        %3859 = vmatpush1.msra.mxu0 %v3702
        %3860 = vmatprep.subr.mxu0 0.0
        %3861 = vmatpush1.msra.mxu0 %v3854
        %3862 = vmatprep.subr.mxu0 0.0
        %3863 = vmatpush1.msra.mxu0 0.0
        %3864 = vmatprep.subr.mxu0 0.0
        %3865 = vmatpush1.msra.mxu0 0.0
        %3866 = vmatprep.subr.mxu0 0.0
        %3867 = vmatpush1.msra.mxu0 0.0
        %3868 = vmatprep.subr.mxu0 0.0
        %3869 = vmatpush1.msra.mxu0 0.0
        %3870 = vmatprep.subr.mxu0 0.0
        %3871 = vmatpush1.msra.mxu0 0.0
        %3872 = vmatprep.subr.mxu0 0.0
        %3873 = vmatpush1.msra.mxu0 0.0
        %3874 = vmatprep.subr.mxu0 0.0
        %3875 = vmatpush1.msra.mxu0 0.0
        %3876 = vmatprep.subr.mxu0 0.0
        %3877 = vmatpush1.msra.mxu0 0.0
        %3878 = vmatprep.subr.mxu0 0.0
        %3879 = vmatpush1.msra.mxu0 0.0
        %3880 = vmatprep.subr.mxu0 0.0
        %3881 = vmatpush1.msra.mxu0 0.0
        %3882 = vmatprep.subr.mxu0 0.0
        %3883 = vmatpush1.msra.mxu0 0.0
        %3884 = vmatprep.subr.mxu0 0.0
        %3885 = vmatpush1.msra.mxu0 0.0
        %3886 = vmatprep.subr.mxu0 0.0
        %3887 = vmatpush1.msra.mxu0 0.0
        %3888 = vmatprep.subr.mxu0 0.0
        %3889 = vmatpush1.msra.mxu0 0.0
        %3890 = vmatprep.subr.mxu0 0.0
        %3891 = vmatpush1.msra.mxu0 0.0
        %3892 = vmatprep.subr.mxu0 0.0
        %3893 = vmatpush1.msra.mxu0 0.0
        %3894 = vmatprep.subr.mxu0 0.0
        %3895 = vmatpush1.msra.mxu0 0.0
        %3896 = vmatprep.subr.mxu0 0.0
        %3897 = vmatpush1.msra.mxu0 0.0
        %3898 = vmatprep.subr.mxu0 0.0
        %3899 = vmatpush1.msra.mxu0 0.0
        %3900 = vmatprep.subr.mxu0 0.0
        %3901 = vmatpush1.msra.mxu0 0.0
        %3902 = vmatprep.subr.mxu0 0.0
        %3903 = vmatpush1.msra.mxu0 0.0
        %3904 = vmatprep.subr.mxu0 0.0
        %3905 = vmatpush1.msra.mxu0 0.0
        %3906 = vmatprep.subr.mxu0 0.0
        %3907 = vmatpush1.msra.mxu0 0.0
        %3908 = vmatprep.subr.mxu0 0.0
        %3909 = vmatpush1.msra.mxu0 0.0
        %3910 = vmatprep.subr.mxu0 0.0
        %3911 = vmatpush1.msra.mxu0 0.0
        %3912 = vmatprep.subr.mxu0 0.0
        %3913 = vmatpush1.msra.mxu0 0.0
        %3914 = vmatprep.subr.mxu0 0.0
        %3915 = vmatpush1.msra.mxu0 0.0
        %3916 = vmatprep.subr.mxu0 0.0
        %3917 = vmatpush1.msra.mxu0 0.0
        %3918 = vmatprep.subr.mxu0 0.0
        %3919 = vmatpush1.msra.mxu0 0.0
        %3920 = vmatprep.mubr.f32.mxu0 0.0
        %3921 = vmatmul.mubr.f32.gmra.mrb[0].mxu0 %v3845
        %v3922 = vpop.f32.mrb[0].mxu0
        %v3923 = vadd.f32 0.0, %v3922
        %v3924 = vpop.f32.mrb[0].mxu0
        %3925 = vmatprep.mubr.f32.mxu0 0.0
        %3926 = vmatmul.mubr.f32.gmra.mrb[0].mxu0 %v3848
        %v3927 = vpop.f32.mrb[0].mxu0
        %v3928 = vadd.f32 0.0, %v3927
        %v3929 = vpop.f32.mrb[0].mxu0
        %3930 = vmatprep.mubr.f32.mxu0 0.0
        %3931 = vmatmul.mubr.f32.gmra.mrb[0].mxu0 %v3851
        %v3932 = vpop.f32.mrb[0].mxu0
        %v3933 = vadd.f32 0.0, %v3932
        %v3934 = vpop.f32.mrb[0].mxu0
        %3935 = vdwg.mxu0
        %3939 = vrot.lane.b32.xlu0 %v3923, 16
        %v3940 = vpop.permute.xlu0 %3939
        %3941 = vrot.lane.b32.xlu0 %v3928, 16
        %v3942 = vpop.permute.xlu0 %3941
        %3943 = vrot.lane.b32.xlu0 %v3933, 16
        %v3944 = vpop.permute.xlu0 %3943
        %v3948 = vsel %vm1706, %v3418, %v3940
        %v3949 = vsel %vm1706, %v3423, %v3942
        %v3950 = vsel %vm1706, %v3428, %v3944
        %s3951 = scalar_lea.vmem %s27, 32
        %v3952 = vld [vmem:[%s3951] sm:$0xff]
        %v3953 = vld [vmem:[%s3951 + $0x8] sm:$0xff]
        %v3954 = vld [vmem:[%s3951 + $0x10] sm:$0xff]
        %v3955 = vld [vmem:[%s3951 + $0x18] sm:$0xff]
        %v3957 = vsel %vm1167, %v3948, 0
        %v3960 = vsel %vm1167, %v3949, 0
        %v3963 = vsel %vm1167, %v3950, 0
        %3965 = vmatprep.subr.mxu0 0.0
        %3966 = vmatpush1.msra.mxu0 %v3952
        %3967 = vmatprep.subr.mxu0 0.0
        %3968 = vmatpush1.msra.mxu0 %v3953
        %3969 = vmatprep.subr.mxu0 0.0
        %3970 = vmatpush1.msra.mxu0 %v3954
        %3971 = vmatprep.subr.mxu0 0.0
        %3972 = vmatpush1.msra.mxu0 %v3955
        %3973 = vmatprep.subr.mxu0 0.0
        %3974 = vmatpush1.msra.mxu0 0.0
        %3975 = vmatprep.subr.mxu0 0.0
        %3976 = vmatpush1.msra.mxu0 0.0
        %3977 = vmatprep.subr.mxu0 0.0
        %3978 = vmatpush1.msra.mxu0 0.0
        %3979 = vmatprep.subr.mxu0 0.0
        %3980 = vmatpush1.msra.mxu0 0.0
        %3981 = vmatprep.subr.mxu0 0.0
        %3982 = vmatpush1.msra.mxu0 0.0
        %3983 = vmatprep.subr.mxu0 0.0
        %3984 = vmatpush1.msra.mxu0 0.0
        %3985 = vmatprep.subr.mxu0 0.0
        %3986 = vmatpush1.msra.mxu0 0.0
        %3987 = vmatprep.subr.mxu0 0.0
        %3988 = vmatpush1.msra.mxu0 0.0
        %3989 = vmatprep.subr.mxu0 0.0
        %3990 = vmatpush1.msra.mxu0 0.0
        %3991 = vmatprep.subr.mxu0 0.0
        %3992 = vmatpush1.msra.mxu0 0.0
        %3993 = vmatprep.subr.mxu0 0.0
        %3994 = vmatpush1.msra.mxu0 0.0
        %3995 = vmatprep.subr.mxu0 0.0
        %3996 = vmatpush1.msra.mxu0 0.0
        %3997 = vmatprep.subr.mxu0 0.0
        %3998 = vmatpush1.msra.mxu0 0.0
        %3999 = vmatprep.subr.mxu0 0.0
        %4000 = vmatpush1.msra.mxu0 0.0
        %4001 = vmatprep.subr.mxu0 0.0
        %4002 = vmatpush1.msra.mxu0 0.0
        %4003 = vmatprep.subr.mxu0 0.0
        %4004 = vmatpush1.msra.mxu0 0.0
        %4005 = vmatprep.subr.mxu0 0.0
        %4006 = vmatpush1.msra.mxu0 0.0
        %4007 = vmatprep.subr.mxu0 0.0
        %4008 = vmatpush1.msra.mxu0 0.0
        %4009 = vmatprep.subr.mxu0 0.0
        %4010 = vmatpush1.msra.mxu0 0.0
        %4011 = vmatprep.subr.mxu0 0.0
        %4012 = vmatpush1.msra.mxu0 0.0
        %4013 = vmatprep.subr.mxu0 0.0
        %4014 = vmatpush1.msra.mxu0 0.0
        %4015 = vmatprep.subr.mxu0 0.0
        %4016 = vmatpush1.msra.mxu0 0.0
        %4017 = vmatprep.subr.mxu0 0.0
        %4018 = vmatpush1.msra.mxu0 0.0
        %4019 = vmatprep.subr.mxu0 0.0
        %4020 = vmatpush1.msra.mxu0 0.0
        %4021 = vmatprep.subr.mxu0 0.0
        %4022 = vmatpush1.msra.mxu0 0.0
        %4023 = vmatprep.subr.mxu0 0.0
        %4024 = vmatpush1.msra.mxu0 0.0
        %4025 = vmatprep.subr.mxu0 0.0
        %4026 = vmatpush1.msra.mxu0 0.0
        %4027 = vmatprep.subr.mxu0 0.0
        %4028 = vmatpush1.msra.mxu0 0.0
        %4029 = vmatprep.mubr.f32.mxu0 0.0
        %4030 = vmatmul.mubr.f32.gmra.mrb[0].mxu0 %v3957
        %v4031 = vpop.f32.mrb[0].mxu0
        %v4032 = vadd.f32 0.0, %v4031
        %v4033 = vpop.f32.mrb[0].mxu0
        %4034 = vmatprep.mubr.f32.mxu0 0.0
        %4035 = vmatmul.mubr.f32.gmra.mrb[0].mxu0 %v3960
        %v4036 = vpop.f32.mrb[0].mxu0
        %v4037 = vadd.f32 0.0, %v4036
        %v4038 = vpop.f32.mrb[0].mxu0
        %4039 = vmatprep.mubr.f32.mxu0 0.0
        %4040 = vmatmul.mubr.f32.gmra.mrb[0].mxu0 %v3963
        %v4041 = vpop.f32.mrb[0].mxu0
        %v4042 = vadd.f32 0.0, %v4041
        %v4043 = vpop.f32.mrb[0].mxu0
        %4044 = vdwg.mxu0
        %v4045 = vadd.f32 %v2853, %v4032
        %v4046 = vadd.f32 %v2854, %v4037
        %v4047 = vadd.f32 %v2855, %v4042
        %s4048 = scalar_lea.vmem %s29, 1
        %v4049 = vld [vmem:[%s4048] sm:$0x1]
        %v4051 = vlaneseq
        %v4052 = vshrl.u32 %v4051, 7
        %v4053 = vsub.s32 0, %v4052
        %v4054 = vrot.slane %v4049, %v4053
        %v4056 = vadd.f32 %v4045, %v4054
        %v4057 = vadd.f32 %v4046, %v4054
        %v4058 = vadd.f32 %v4047, %v4054
        %s4059 = scalar_lea.vmem %s31, 1
        %v4060 = vld [vmem:[%s4059] sm:$0x1]
        %s4061 = scalar_lea.vmem %s33, 1
        %v4062 = vld [vmem:[%s4061] sm:$0x1]
        %v4063 = vsel %vm1167, %v4056, 0.0
        %4064 = vadd.xlane.f32.xlu0 %v4063
        %v4065 = vpop.xlane.xlu0 %4064
        %v4066 = vsel %vm1167, %v4057, 0.0
        %4067 = vadd.xlane.f32.xlu0 %v4066
        %v4068 = vpop.xlane.xlu0 %4067
        %v4069 = vsel %vm1371, %v4058, 0.0
        %4070 = vadd.xlane.f32.xlu0 %v4069
        %v4071 = vpop.xlane.xlu0 %4070
        %v4072 = vmul.f32 %v4065, %v1375
        %v4073 = vmul.f32 %v4068, %v1375
        %v4074 = vmul.f32 %v4071, %v1375
        %v4075 = vsub.f32 %v4056, %v4072
        %v4076 = vsub.f32 %v4057, %v4073
        %v4077 = vsub.f32 %v4058, %v4074
        %v4078 = vmul.f32 %v4075, %v4075
        %v4079 = vmul.f32 %v4076, %v4076
        %v4080 = vmul.f32 %v4077, %v4077
        %v4081 = vsel %vm1167, %v4078, 0.0
        %4082 = vadd.xlane.f32.xlu0 %v4081
        %v4083 = vpop.xlane.xlu0 %4082
        %v4084 = vsel %vm1167, %v4079, 0.0
        %4085 = vadd.xlane.f32.xlu0 %v4084
        %v4086 = vpop.xlane.xlu0 %4085
        %v4087 = vsel %vm1371, %v4080, 0.0
        %4088 = vadd.xlane.f32.xlu0 %v4087
        %v4089 = vpop.xlane.xlu0 %4088
        %v4090 = vmul.f32 %v4083, %v1375
        %v4091 = vmul.f32 %v4086, %v1375
        %v4092 = vmul.f32 %v4089, %v1375
        %v4093 = vadd.f32 %v4090, 1e-05
        %v4094 = vadd.f32 %v4091, 1e-05
        %v4095 = vadd.f32 %v4092, 1e-05
        %v4096 = vrsqrt.pop %v4093
        %v4097 = vrsqrt.pop %v4094
        %v4098 = vrsqrt.pop %v4095
        %v4099 = vmul.f32 %v4075, %v4096
        %v4100 = vmul.f32 %v4076, %v4097
        %v4101 = vmul.f32 %v4077, %v4098
        %v4103 = vlaneseq
        %v4104 = vshrl.u32 %v4103, 7
        %v4105 = vsub.s32 0, %v4104
        %v4106 = vrot.slane %v4060, %v4105
        %v4108 = vmul.f32 %v4099, %v4106
        %v4109 = vmul.f32 %v4100, %v4106
        %v4110 = vmul.f32 %v4101, %v4106
        %v4112 = vlaneseq
        %v4113 = vshrl.u32 %v4112, 7
        %v4114 = vsub.s32 0, %v4113
        %v4115 = vrot.slane %v4062, %v4114
        %v4117 = vadd.f32 %v4108, %v4115
        %v4118 = vadd.f32 %v4109, %v4115
        %v4119 = vadd.f32 %v4110, %v4115
        %s4120 = scalar_lea.vmem %s35, 32
        %v4121 = vld [vmem:[%s4120] sm:$0xff]
        %v4122 = vld [vmem:[%s4120 + $0x8] sm:$0xff]
        %v4123 = vld [vmem:[%s4120 + $0x10] sm:$0xff]
        %v4124 = vld [vmem:[%s4120 + $0x18] sm:$0xff]
        %s4125 = scalar_lea.vmem %s37, 1
        %v4126 = vld [vmem:[%s4125] sm:$0x1]
        %v4128 = vlaneseq
        %v4129 = vshrl.u32 %v4128, 7
        %v4130 = vsub.s32 0, %v4129
        %v4131 = vrot.slane %v4126, %v4130
        %v4134 = vsel %vm1167, %v4117, 0
        %v4137 = vsel %vm1167, %v4118, 0
        %v4140 = vsel %vm1167, %v4119, 0
        %4142 = vmatprep.subr.mxu0 0.0
        %4143 = vmatpush1.msra.mxu0 %v4121
        %4144 = vmatprep.subr.mxu0 0.0
        %4145 = vmatpush1.msra.mxu0 %v4122
        %4146 = vmatprep.subr.mxu0 0.0
        %4147 = vmatpush1.msra.mxu0 %v4123
        %4148 = vmatprep.subr.mxu0 0.0
        %4149 = vmatpush1.msra.mxu0 %v4124
        %4150 = vmatprep.subr.mxu0 0.0
        %4151 = vmatpush1.msra.mxu0 0.0
        %4152 = vmatprep.subr.mxu0 0.0
        %4153 = vmatpush1.msra.mxu0 0.0
        %4154 = vmatprep.subr.mxu0 0.0
        %4155 = vmatpush1.msra.mxu0 0.0
        %4156 = vmatprep.subr.mxu0 0.0
        %4157 = vmatpush1.msra.mxu0 0.0
        %4158 = vmatprep.subr.mxu0 0.0
        %4159 = vmatpush1.msra.mxu0 0.0
        %4160 = vmatprep.subr.mxu0 0.0
        %4161 = vmatpush1.msra.mxu0 0.0
        %4162 = vmatprep.subr.mxu0 0.0
        %4163 = vmatpush1.msra.mxu0 0.0
        %4164 = vmatprep.subr.mxu0 0.0
        %4165 = vmatpush1.msra.mxu0 0.0
        %4166 = vmatprep.subr.mxu0 0.0
        %4167 = vmatpush1.msra.mxu0 0.0
        %4168 = vmatprep.subr.mxu0 0.0
        %4169 = vmatpush1.msra.mxu0 0.0
        %4170 = vmatprep.subr.mxu0 0.0
        %4171 = vmatpush1.msra.mxu0 0.0
        %4172 = vmatprep.subr.mxu0 0.0
        %4173 = vmatpush1.msra.mxu0 0.0
        %4174 = vmatprep.subr.mxu0 0.0
        %4175 = vmatpush1.msra.mxu0 0.0
        %4176 = vmatprep.subr.mxu0 0.0
        %4177 = vmatpush1.msra.mxu0 0.0
        %4178 = vmatprep.subr.mxu0 0.0
        %4179 = vmatpush1.msra.mxu0 0.0
        %4180 = vmatprep.subr.mxu0 0.0
        %4181 = vmatpush1.msra.mxu0 0.0
        %4182 = vmatprep.subr.mxu0 0.0
        %4183 = vmatpush1.msra.mxu0 0.0
        %4184 = vmatprep.subr.mxu0 0.0
        %4185 = vmatpush1.msra.mxu0 0.0
        %4186 = vmatprep.subr.mxu0 0.0
        %4187 = vmatpush1.msra.mxu0 0.0
        %4188 = vmatprep.subr.mxu0 0.0
        %4189 = vmatpush1.msra.mxu0 0.0
        %4190 = vmatprep.subr.mxu0 0.0
        %4191 = vmatpush1.msra.mxu0 0.0
        %4192 = vmatprep.subr.mxu0 0.0
        %4193 = vmatpush1.msra.mxu0 0.0
        %4194 = vmatprep.subr.mxu0 0.0
        %4195 = vmatpush1.msra.mxu0 0.0
        %4196 = vmatprep.subr.mxu0 0.0
        %4197 = vmatpush1.msra.mxu0 0.0
        %4198 = vmatprep.subr.mxu0 0.0
        %4199 = vmatpush1.msra.mxu0 0.0
        %4200 = vmatprep.subr.mxu0 0.0
        %4201 = vmatpush1.msra.mxu0 0.0
        %4202 = vmatprep.subr.mxu0 0.0
        %4203 = vmatpush1.msra.mxu0 0.0
        %4204 = vmatprep.subr.mxu0 0.0
        %4205 = vmatpush1.msra.mxu0 0.0
        %4206 = vmatprep.mubr.f32.mxu0 0.0
        %4207 = vmatmul.mubr.f32.gmra.mrb[0].mxu0 %v4134
        %v4208 = vpop.f32.mrb[0].mxu0
        %v4209 = vadd.f32 %v4131, %v4208
        %v4210 = vpop.f32.mrb[0].mxu0
        %4211 = vmatprep.mubr.f32.mxu0 0.0
        %4212 = vmatmul.mubr.f32.gmra.mrb[0].mxu0 %v4137
        %v4213 = vpop.f32.mrb[0].mxu0
        %v4214 = vadd.f32 %v4131, %v4213
        %v4215 = vpop.f32.mrb[0].mxu0
        %4216 = vmatprep.mubr.f32.mxu0 0.0
        %4217 = vmatmul.mubr.f32.gmra.mrb[0].mxu0 %v4140
        %v4218 = vpop.f32.mrb[0].mxu0
        %v4219 = vadd.f32 %v4131, %v4218
        %v4220 = vpop.f32.mrb[0].mxu0
        %4221 = vdwg.mxu0
        %v4222 = vmul.f32 %v4209, 0.5
        %v4223 = vmul.f32 %v4214, 0.5
        %v4224 = vmul.f32 %v4219, 0.5
        %v4225 = vmul.f32 %v4209, 0.044715
        %v4226 = vmul.f32 %v4214, 0.044715
        %v4227 = vmul.f32 %v4219, 0.044715
        %v4228 = vmul.f32 %v4225, %v4209
        %v4229 = vmul.f32 %v4226, %v4214
        %v4230 = vmul.f32 %v4227, %v4219
        %v4231 = vmul.f32 %v4228, %v4209
        %v4232 = vmul.f32 %v4229, %v4214
        %v4233 = vmul.f32 %v4230, %v4219
        %v4234 = vadd.f32 %v4209, %v4231
        %v4235 = vadd.f32 %v4214, %v4232
        %v4236 = vadd.f32 %v4219, %v4233
        %v4237 = vmul.f32 %v4234, 0.7978846
        %v4238 = vmul.f32 %v4235, 0.7978846
        %v4239 = vmul.f32 %v4236, 0.7978846
        %v4240 = vtanh.pop %v4237
        %v4241 = vtanh.pop %v4238
        %v4242 = vtanh.pop %v4239
        %v4243 = vadd.f32 %v4240, 1.0
        %v4244 = vadd.f32 %v4241, 1.0
        %v4245 = vadd.f32 %v4242, 1.0
        %v4246 = vmul.f32 %v4222, %v4243
        %v4247 = vmul.f32 %v4223, %v4244
        %v4248 = vmul.f32 %v4224, %v4245
        %s4249 = scalar_lea.vmem %s39, 128
        %v4250 = vld [vmem:[%s4249] sm:$0xff]
        %v4251 = vld [vmem:[%s4249 + $0x8] sm:$0xff]
        %v4252 = vld [vmem:[%s4249 + $0x10] sm:$0xff]
        %v4253 = vld [vmem:[%s4249 + $0x18] sm:$0xff]
        %v4254 = vld [vmem:[%s4249 + $0x20] sm:$0xff]
        %v4255 = vld [vmem:[%s4249 + $0x28] sm:$0xff]
        %v4256 = vld [vmem:[%s4249 + $0x30] sm:$0xff]
        %v4257 = vld [vmem:[%s4249 + $0x38] sm:$0xff]
        %v4258 = vld [vmem:[%s4249 + $0x40] sm:$0xff]
        %v4259 = vld [vmem:[%s4249 + $0x48] sm:$0xff]
        %v4260 = vld [vmem:[%s4249 + $0x50] sm:$0xff]
        %v4261 = vld [vmem:[%s4249 + $0x58] sm:$0xff]
        %v4262 = vld [vmem:[%s4249 + $0x60] sm:$0xff]
        %v4263 = vld [vmem:[%s4249 + $0x68] sm:$0xff]
        %v4264 = vld [vmem:[%s4249 + $0x70] sm:$0xff]
        %v4265 = vld [vmem:[%s4249 + $0x78] sm:$0xff]
        %4266 = vmatprep.subr.mxu0 0.0
        %4267 = vmatpush1.msra.mxu0 %v4250
        %4268 = vmatprep.subr.mxu0 0.0
        %4269 = vmatpush1.msra.mxu0 %v4251
        %4270 = vmatprep.subr.mxu0 0.0
        %4271 = vmatpush1.msra.mxu0 %v4252
        %4272 = vmatprep.subr.mxu0 0.0
        %4273 = vmatpush1.msra.mxu0 %v4253
        %4274 = vmatprep.subr.mxu0 0.0
        %4275 = vmatpush1.msra.mxu0 %v4254
        %4276 = vmatprep.subr.mxu0 0.0
        %4277 = vmatpush1.msra.mxu0 %v4255
        %4278 = vmatprep.subr.mxu0 0.0
        %4279 = vmatpush1.msra.mxu0 %v4256
        %4280 = vmatprep.subr.mxu0 0.0
        %4281 = vmatpush1.msra.mxu0 %v4257
        %4282 = vmatprep.subr.mxu0 0.0
        %4283 = vmatpush1.msra.mxu0 %v4258
        %4284 = vmatprep.subr.mxu0 0.0
        %4285 = vmatpush1.msra.mxu0 %v4259
        %4286 = vmatprep.subr.mxu0 0.0
        %4287 = vmatpush1.msra.mxu0 %v4260
        %4288 = vmatprep.subr.mxu0 0.0
        %4289 = vmatpush1.msra.mxu0 %v4261
        %4290 = vmatprep.subr.mxu0 0.0
        %4291 = vmatpush1.msra.mxu0 %v4262
        %4292 = vmatprep.subr.mxu0 0.0
        %4293 = vmatpush1.msra.mxu0 %v4263
        %4294 = vmatprep.subr.mxu0 0.0
        %4295 = vmatpush1.msra.mxu0 %v4264
        %4296 = vmatprep.subr.mxu0 0.0
        %4297 = vmatpush1.msra.mxu0 %v4265
        %4298 = vmatprep.subr.mxu0 0.0
        %4299 = vmatpush1.msra.mxu0 0.0
        %4300 = vmatprep.subr.mxu0 0.0
        %4301 = vmatpush1.msra.mxu0 0.0
        %4302 = vmatprep.subr.mxu0 0.0
        %4303 = vmatpush1.msra.mxu0 0.0
        %4304 = vmatprep.subr.mxu0 0.0
        %4305 = vmatpush1.msra.mxu0 0.0
        %4306 = vmatprep.subr.mxu0 0.0
        %4307 = vmatpush1.msra.mxu0 0.0
        %4308 = vmatprep.subr.mxu0 0.0
        %4309 = vmatpush1.msra.mxu0 0.0
        %4310 = vmatprep.subr.mxu0 0.0
        %4311 = vmatpush1.msra.mxu0 0.0
        %4312 = vmatprep.subr.mxu0 0.0
        %4313 = vmatpush1.msra.mxu0 0.0
        %4314 = vmatprep.subr.mxu0 0.0
        %4315 = vmatpush1.msra.mxu0 0.0
        %4316 = vmatprep.subr.mxu0 0.0
        %4317 = vmatpush1.msra.mxu0 0.0
        %4318 = vmatprep.subr.mxu0 0.0
        %4319 = vmatpush1.msra.mxu0 0.0
        %4320 = vmatprep.subr.mxu0 0.0
        %4321 = vmatpush1.msra.mxu0 0.0
        %4322 = vmatprep.subr.mxu0 0.0
        %4323 = vmatpush1.msra.mxu0 0.0
        %4324 = vmatprep.subr.mxu0 0.0
        %4325 = vmatpush1.msra.mxu0 0.0
        %4326 = vmatprep.subr.mxu0 0.0
        %4327 = vmatpush1.msra.mxu0 0.0
        %4328 = vmatprep.subr.mxu0 0.0
        %4329 = vmatpush1.msra.mxu0 0.0
        %4330 = vmatprep.mubr.f32.mxu0 0.0
        %4331 = vmatmul.mubr.f32.gmra.mrb[0].mxu0 %v4246
        %v4332 = vpop.f32.mrb[0].mxu0
        %v4333 = vadd.f32 0.0, %v4332
        %v4334 = vpop.f32.mrb[0].mxu0
        %4335 = vmatprep.mubr.f32.mxu0 0.0
        %4336 = vmatmul.mubr.f32.gmra.mrb[0].mxu0 %v4247
        %v4337 = vpop.f32.mrb[0].mxu0
        %v4338 = vpop.f32.mrb[0].mxu0
        %4339 = vmatprep.mubr.f32.mxu0 0.0
        %4340 = vmatmul.mubr.f32.gmra.mrb[0].mxu0 %v4248
        %v4341 = vpop.f32.mrb[0].mxu0
        %v4342 = vpop.f32.mrb[0].mxu0
        %4343 = vdwg.mxu0
        %v4344 = vadd.f32 %v4056, %v4333
        %s4345 = scalar_lea.vmem %s41, 1
        %v4346 = vld [vmem:[%s4345] sm:$0x1]
        %v4348 = vlaneseq
        %v4349 = vshrl.u32 %v4348, 7
        %v4350 = vsub.s32 0, %v4349
        %v4351 = vrot.slane %v4346, %v4350
        %v4353 = vadd.f32 %v4344, %v4351
        %v4354 = vld [vmem:[%s51] sm:$0x1]
        %v4355 = vld [vmem:[%s53] sm:$0x1]
        %vm4356 = vcmask 253952
        %v4357 = vsel %vm4356, %v4353, 0.0
        %4358 = vadd.xlane.f32.xlu0 %v4357
        %v4359 = vpop.xlane.xlu0 %4358
        %v4360 = vmul.f32 %v4359, %v1375
        %v4361 = vsub.f32 %v4353, %v4360
        %v4362 = vmul.f32 %v4361, %v4361
        %v4363 = vsel %vm4356, %v4362, 0.0
        %4364 = vadd.xlane.f32.xlu0 %v4363
        %v4365 = vpop.xlane.xlu0 %4364
        %v4366 = vmul.f32 %v4365, %v1375
        %v4367 = vadd.f32 %v4366, 1e-05
        %v4368 = vrsqrt.pop %v4367
        %v4369 = vmul.f32 %v4361, %v4368
        %v4370 = vmul.f32 %v4369, %v4354
        %v4371 = vadd.f32 %v4370, %v4355
        %v4372 = vld [vmem:[%s55] sm:$0x1]
        %v4373 = vld [vmem:[%s57] sm:$0x1]
        %v4374 = vsel %vm4356, %v1345, 0.0
        %4375 = vadd.xlane.f32.xlu0 %v4374
        %v4376 = vpop.xlane.xlu0 %4375
        %v4377 = vmul.f32 %v4376, %v1375
        %v4378 = vsub.f32 %v1345, %v4377
        %v4379 = vmul.f32 %v4378, %v4378
        %v4380 = vsel %vm4356, %v4379, 0.0
        %4381 = vadd.xlane.f32.xlu0 %v4380
        %v4382 = vpop.xlane.xlu0 %4381
        %v4383 = vmul.f32 %v4382, %v1375
        %v4384 = vadd.f32 %v4383, 1e-05
        %v4385 = vrsqrt.pop %v4384
        %v4386 = vmul.f32 %v4378, %v4385
        %v4387 = vmul.f32 %v4386, %v4372
        %v4388 = vadd.f32 %v4387, %v4373
        %v4389 = vld [vmem:[%s59] sm:$0xff]
        %v4390 = vld [vmem:[%s59 + $0x8] sm:$0xff]
        %v4391 = vld [vmem:[%s59 + $0x10] sm:$0xff]
        %v4392 = vld [vmem:[%s59 + $0x18] sm:$0xff]
        %v4393 = vld [vmem:[%s61] sm:$0x1]
        %v4395 = vsel %vm1167, %v4371, 0
        %4397 = vmatprep.subr.mxu0 0.0
        %4398 = vmatpush1.msra.mxu0 %v4389
        %4399 = vmatprep.subr.mxu0 0.0
        %4400 = vmatpush1.msra.mxu0 %v4390
        %4401 = vmatprep.subr.mxu0 0.0
        %4402 = vmatpush1.msra.mxu0 %v4391
        %4403 = vmatprep.subr.mxu0 0.0
        %4404 = vmatpush1.msra.mxu0 %v4392
        %4405 = vmatprep.subr.mxu0 0.0
        %4406 = vmatpush1.msra.mxu0 0.0
        %4407 = vmatprep.subr.mxu0 0.0
        %4408 = vmatpush1.msra.mxu0 0.0
        %4409 = vmatprep.subr.mxu0 0.0
        %4410 = vmatpush1.msra.mxu0 0.0
        %4411 = vmatprep.subr.mxu0 0.0
        %4412 = vmatpush1.msra.mxu0 0.0
        %4413 = vmatprep.subr.mxu0 0.0
        %4414 = vmatpush1.msra.mxu0 0.0
        %4415 = vmatprep.subr.mxu0 0.0
        %4416 = vmatpush1.msra.mxu0 0.0
        %4417 = vmatprep.subr.mxu0 0.0
        %4418 = vmatpush1.msra.mxu0 0.0
        %4419 = vmatprep.subr.mxu0 0.0
        %4420 = vmatpush1.msra.mxu0 0.0
        %4421 = vmatprep.subr.mxu0 0.0
        %4422 = vmatpush1.msra.mxu0 0.0
        %4423 = vmatprep.subr.mxu0 0.0
        %4424 = vmatpush1.msra.mxu0 0.0
        %4425 = vmatprep.subr.mxu0 0.0
        %4426 = vmatpush1.msra.mxu0 0.0
        %4427 = vmatprep.subr.mxu0 0.0
        %4428 = vmatpush1.msra.mxu0 0.0
        %4429 = vmatprep.subr.mxu0 0.0
        %4430 = vmatpush1.msra.mxu0 0.0
        %4431 = vmatprep.subr.mxu0 0.0
        %4432 = vmatpush1.msra.mxu0 0.0
        %4433 = vmatprep.subr.mxu0 0.0
        %4434 = vmatpush1.msra.mxu0 0.0
        %4435 = vmatprep.subr.mxu0 0.0
        %4436 = vmatpush1.msra.mxu0 0.0
        %4437 = vmatprep.subr.mxu0 0.0
        %4438 = vmatpush1.msra.mxu0 0.0
        %4439 = vmatprep.subr.mxu0 0.0
        %4440 = vmatpush1.msra.mxu0 0.0
        %4441 = vmatprep.subr.mxu0 0.0
        %4442 = vmatpush1.msra.mxu0 0.0
        %4443 = vmatprep.subr.mxu0 0.0
        %4444 = vmatpush1.msra.mxu0 0.0
        %4445 = vmatprep.subr.mxu0 0.0
        %4446 = vmatpush1.msra.mxu0 0.0
        %4447 = vmatprep.subr.mxu0 0.0
        %4448 = vmatpush1.msra.mxu0 0.0
        %4449 = vmatprep.subr.mxu0 0.0
        %4450 = vmatpush1.msra.mxu0 0.0
        %4451 = vmatprep.subr.mxu0 0.0
        %4452 = vmatpush1.msra.mxu0 0.0
        %4453 = vmatprep.subr.mxu0 0.0
        %4454 = vmatpush1.msra.mxu0 0.0
        %4455 = vmatprep.subr.mxu0 0.0
        %4456 = vmatpush1.msra.mxu0 0.0
        %4457 = vmatprep.subr.mxu0 0.0
        %4458 = vmatpush1.msra.mxu0 0.0
        %4459 = vmatprep.subr.mxu0 0.0
        %4460 = vmatpush1.msra.mxu0 0.0
        %4461 = vmatprep.mubr.f32.mxu0 0.0
        %4462 = vmatmul.mubr.f32.gmra.mrb[0].mxu0 %v4395
        %v4463 = vpop.f32.mrb[0].mxu0
        %v4464 = vadd.f32 %v4393, %v4463
        %v4465 = vpop.f32.mrb[0].mxu0
        %4466 = vdwg.mxu0
        %v4467 = vsub.f32 0.0, %v4464
        %v4468 = vmul.f32 %v4467, 1.442695
        %v4469 = vpow.pop %v4468
        %v4470 = vadd.f32 %v4469, 1.0
        %v4471 = vrcp.pop %v4470
        %v4472 = vmul.f32 %v4471, %v4371
        %v4473 = vsub.f32 1.0, %v4471
        %v4474 = vmul.f32 %v4473, %v4388
        %v4475 = vadd.f32 %v4472, %v4474
        %v4476 = vld [vmem:[%s63] sm:$0x1]
        %v4477 = vld [vmem:[%s65] sm:$0x1]
        %v4478 = vsel %vm4356, %v4475, 0.0
        %4479 = vadd.xlane.f32.xlu0 %v4478
        %v4480 = vpop.xlane.xlu0 %4479
        %v4481 = vmul.f32 %v4480, %v1375
        %v4482 = vsub.f32 %v4475, %v4481
        %v4483 = vmul.f32 %v4482, %v4482
        %v4484 = vsel %vm4356, %v4483, 0.0
        %4485 = vadd.xlane.f32.xlu0 %v4484
        %v4486 = vpop.xlane.xlu0 %4485
        %v4487 = vmul.f32 %v4486, %v1375
        %v4488 = vadd.f32 %v4487, 1e-05
        %v4489 = vrsqrt.pop %v4488
        %v4490 = vmul.f32 %v4482, %v4489
        %v4491 = vmul.f32 %v4490, %v4476
        %v4492 = vadd.f32 %v4491, %v4477
        %v4493 = vld [vmem:[%s67] sm:$0xff]
        %v4494 = vld [vmem:[%s67 + $0x8] sm:$0xff]
        %v4495 = vld [vmem:[%s67 + $0x10] sm:$0xff]
        %v4496 = vld [vmem:[%s67 + $0x18] sm:$0xff]
        %v4497 = vld [vmem:[%s69] sm:$0x1]
        %v4499 = vsel %vm1167, %v4492, 0
        %4501 = vmatprep.subr.mxu0 0.0
        %4502 = vmatpush1.msra.mxu0 %v4493
        %4503 = vmatprep.subr.mxu0 0.0
        %4504 = vmatpush1.msra.mxu0 %v4494
        %4505 = vmatprep.subr.mxu0 0.0
        %4506 = vmatpush1.msra.mxu0 %v4495
        %4507 = vmatprep.subr.mxu0 0.0
        %4508 = vmatpush1.msra.mxu0 %v4496
        %4509 = vmatprep.subr.mxu0 0.0
        %4510 = vmatpush1.msra.mxu0 0.0
        %4511 = vmatprep.subr.mxu0 0.0
        %4512 = vmatpush1.msra.mxu0 0.0
        %4513 = vmatprep.subr.mxu0 0.0
        %4514 = vmatpush1.msra.mxu0 0.0
        %4515 = vmatprep.subr.mxu0 0.0
        %4516 = vmatpush1.msra.mxu0 0.0
        %4517 = vmatprep.subr.mxu0 0.0
        %4518 = vmatpush1.msra.mxu0 0.0
        %4519 = vmatprep.subr.mxu0 0.0
        %4520 = vmatpush1.msra.mxu0 0.0
        %4521 = vmatprep.subr.mxu0 0.0
        %4522 = vmatpush1.msra.mxu0 0.0
        %4523 = vmatprep.subr.mxu0 0.0
        %4524 = vmatpush1.msra.mxu0 0.0
        %4525 = vmatprep.subr.mxu0 0.0
        %4526 = vmatpush1.msra.mxu0 0.0
        %4527 = vmatprep.subr.mxu0 0.0
        %4528 = vmatpush1.msra.mxu0 0.0
        %4529 = vmatprep.subr.mxu0 0.0
        %4530 = vmatpush1.msra.mxu0 0.0
        %4531 = vmatprep.subr.mxu0 0.0
        %4532 = vmatpush1.msra.mxu0 0.0
        %4533 = vmatprep.subr.mxu0 0.0
        %4534 = vmatpush1.msra.mxu0 0.0
        %4535 = vmatprep.subr.mxu0 0.0
        %4536 = vmatpush1.msra.mxu0 0.0
        %4537 = vmatprep.subr.mxu0 0.0
        %4538 = vmatpush1.msra.mxu0 0.0
        %4539 = vmatprep.subr.mxu0 0.0
        %4540 = vmatpush1.msra.mxu0 0.0
        %4541 = vmatprep.subr.mxu0 0.0
        %4542 = vmatpush1.msra.mxu0 0.0
        %4543 = vmatprep.subr.mxu0 0.0
        %4544 = vmatpush1.msra.mxu0 0.0
        %4545 = vmatprep.subr.mxu0 0.0
        %4546 = vmatpush1.msra.mxu0 0.0
        %4547 = vmatprep.subr.mxu0 0.0
        %4548 = vmatpush1.msra.mxu0 0.0
        %4549 = vmatprep.subr.mxu0 0.0
        %4550 = vmatpush1.msra.mxu0 0.0
        %4551 = vmatprep.subr.mxu0 0.0
        %4552 = vmatpush1.msra.mxu0 0.0
        %4553 = vmatprep.subr.mxu0 0.0
        %4554 = vmatpush1.msra.mxu0 0.0
        %4555 = vmatprep.subr.mxu0 0.0
        %4556 = vmatpush1.msra.mxu0 0.0
        %4557 = vmatprep.subr.mxu0 0.0
        %4558 = vmatpush1.msra.mxu0 0.0
        %4559 = vmatprep.subr.mxu0 0.0
        %4560 = vmatpush1.msra.mxu0 0.0
        %4561 = vmatprep.subr.mxu0 0.0
        %4562 = vmatpush1.msra.mxu0 0.0
        %4563 = vmatprep.subr.mxu0 0.0
        %4564 = vmatpush1.msra.mxu0 0.0
        %4565 = vmatprep.mubr.f32.mxu0 0.0
        %4566 = vmatmul.mubr.f32.gmra.mrb[0].mxu0 %v4499
        %v4567 = vpop.f32.mrb[0].mxu0
        %v4568 = vadd.f32 %v4497, %v4567
        %v4569 = vpop.f32.mrb[0].mxu0
        %4570 = vdwg.mxu0
        %4571 = vst [vmem:[%s1062] sm:$0x1] %v4568
        %s4572 = sand.u32 %s833, 1
        %s4573 = scalar_lea.sflag [#allocation3], %s4572
        %s4574 = sand.u32 %s833, 1
        %s4575 = scalar_lea.vmem [#allocation2], %s4574
        // Predicated region
        $region161: #{vit_mag_forward.1} parent=159 // pred_check
          %p4576 = pneg %p843
        $region162: #{vit_mag_forward.1} parent=159 // pred_check_branch
          %4578 = sbr.rel (%p4576) target = $region164
        $region163: #{vit_mag_forward.1} parent=159 // pred_region
          %s4580 = ssub.s32 16, 16
          %4581 = vsyncadd %s4573, %s4580
          %s4582 = smul.addr %s85, 16
          %s4583 = scalar_lea.hbm %s71, %s4582
          %s4585 = sshll.u32 %s4575, 4
          %s4586 = int_to_ptr.vmem [resolvable:$true] %s4585
          %4588 = dma.vmem_to_hbm [thread:$0]  %s4586, 16, %s4583, %s4573
        $region164: #{vit_mag_forward.1} parent=159 // pred_fallthru
          _
      $region160: #{vit_mag_forward.1} parent=5 // pred_fallthru
        _
      %p4589 = scmp.le.s32.totalorder 2, %s80
      // Predicated region
      $region165: #{vit_mag_forward.1} parent=5 // pred_check
        %p4590 = pneg %p4589
      $region166: #{vit_mag_forward.1} parent=5 // pred_check_branch
        %4592 = sbr.rel (%p4590) target = $region168
      $region167: #{vit_mag_forward.1} parent=5 // pred_region
        %s4593 = ssub.s32 %s80, 2
        // Predicated region
        $region169: #{vit_mag_forward.1} parent=167 // pred_check
          %p4594 = pneg %p849
        $region170: #{vit_mag_forward.1} parent=167 // pred_check_branch
          %4596 = sbr.rel (%p4594) target = $region172
        $region171: #{vit_mag_forward.1} parent=167 // pred_region
          %s4597 = sand.u32 %s834, 1
          %s4598 = scalar_lea.sflag [#allocation3], %s4597
          %s4599 = sand.u32 %s834, 1
          %s4600 = scalar_lea.vmem [#allocation2], %s4599
          %4601 = dma.done %s4598, 16
        $region172: #{vit_mag_forward.1} parent=167 // pred_fallthru
          _
      $region168: #{vit_mag_forward.1} parent=5 // pred_fallthru
        _
    $region6: #{vit_mag_forward.1} parent=1 // loop_footer
      %s84 = sadd.s32 1, %s80
    $region7: #{vit_mag_forward.1} parent=1 // loop_footer_branch
      %79 = sbr.rel target = $region3
    $region8: #{vit_mag_forward.1} parent=1 // loop_exit
      _
    %4602 = vsyncpa [#allocation3], 1
    %s4603 = scalar_lea.sflag [#allocation3], 1
    %4604 = vsyncpa %s4603, 1

</llo_original>
